<compile_context>
chip_gen: v7x
topology: tpu7x:2x2x1
jax: 0.10.0
libtpu: 0.0.40
codegen_flags: <defaults>
</compile_context>

<pallas_src>
import functools

import jax
import jax.numpy as jnp
from jax.experimental import pallas as pl
from jax.experimental.pallas import tpu as pltpu

LN_EPS = 1e-12  # BERT LayerNorm epsilon


# ---------------------------------------------------------------------------
# Per-chip VMEM budget & tiling helpers
# ---------------------------------------------------------------------------
def _vmem_limit():
    try:
        cap = int(pltpu.get_tpu_info().vmem_capacity_bytes)
    except Exception:  # pragma: no cover - conservative fallback
        cap = 64 * 1024 * 1024
    return int(min(cap // 2, 64 * 1024 * 1024))


VMEM_LIMIT = _vmem_limit()
_BIG_VMEM = VMEM_LIMIT >= 48 * 1024 * 1024   # v5e/v6e (128 MiB parts)


def _pick_row_tile(m):
    """Largest row tile (multiple of 8) dividing m, capped by VMEM budget."""
    max_t = 1024 if _BIG_VMEM else 256
    for t in (1024, 512, 256, 128, 64, 32, 16, 8):
        if t <= max_t and m % t == 0:
            return t
    return m


def _pick_i_tile(i_dim):
    """FFN intermediate-dim tile for streaming w1/w2 (bigger on 128 MiB parts)."""
    max_t = 1024 if _BIG_VMEM else 512
    for t in (1024, 512, 256, 128):
        if t <= max_t and i_dim % t == 0:
            return t
    return i_dim


def _pick_head_group(nh, dh):
    """Heads per attention grid step; gh*dh must be lane-aligned (mult of 128)."""
    for gh in (4, 2, 1):
        if nh % gh == 0 and (gh * dh) % 128 == 0:
            return gh
    raise ValueError(f"cannot form lane-aligned head groups for nh={nh}, dh={dh}")


# ---------------------------------------------------------------------------
# In-kernel helpers (pure jnp; f32 math)
# ---------------------------------------------------------------------------
def _ln(x, gamma, beta, eps):
    mean = jnp.mean(x, axis=-1, keepdims=True)
    var = jnp.mean(jnp.square(x - mean), axis=-1, keepdims=True)
    return (x - mean) * jax.lax.rsqrt(var + eps) * gamma + beta


def _gelu(x):
    # exact (erf-based) GELU, matching BERT's "gelu" activation
    return 0.5 * x * (1.0 + jax.lax.erf(x / jnp.sqrt(jnp.float32(2.0))))


# ---------------------------------------------------------------------------
# Kernels
# ---------------------------------------------------------------------------
def layernorm_rows_kernel(x_ref, g_ref, b_ref, o_ref, *, eps):
    x = x_ref[...].astype(jnp.float32)
    o_ref[...] = _ln(x, g_ref[...].astype(jnp.float32),
                     b_ref[...].astype(jnp.float32), eps).astype(o_ref.dtype)


def matmul_bias_kernel(x_ref, w_ref, b_ref, o_ref):
    # bf16 x bf16 MXU matmul, f32 accumulate, f32 bias add, bf16 store.
    y = jnp.dot(x_ref[...], w_ref[...], preferred_element_type=jnp.float32)
    o_ref[...] = (y + b_ref[...].astype(jnp.float32)).astype(o_ref.dtype)


def attn_core_kernel(q_ref, k_ref, v_ref, bias_ref, o_ref, *, scale, gh, dh):
    # One grid step == one (batch, head-group of gh heads).
    # q/k/v refs: (S, gh*dh) bf16 slabs of the (B, S, 3H) QKV activation.
    bias = bias_ref[...].astype(jnp.float32)            # (1, S) additive mask
    ctx_parts = []
    for h in range(gh):                                  # static unroll over heads
        sl = slice(h * dh, (h + 1) * dh)
        qh = q_ref[:, sl]                                # (S, dh) bf16
        kh = k_ref[:, sl]
        vh = v_ref[:, sl]
        # q @ k^T without materializing a transpose.
        s = jax.lax.dot_general(qh, kh, (((1,), (1,)), ((), ())),
                                preferred_element_type=jnp.float32)
        s = s * scale + bias
        s = s - jnp.max(s, axis=-1, keepdims=True)
        p = jnp.exp(s)
        p = p * (1.0 / jnp.sum(p, axis=-1, keepdims=True))   # exact softmax
        # attention-prob dropout: identity in eval mode
        ctx_parts.append(jnp.dot(p.astype(jnp.bfloat16), vh,
                                 preferred_element_type=jnp.float32))
    ctx = jnp.concatenate(ctx_parts, axis=-1)            # (S, gh*dh), lane-dense
    o_ref[...] = ctx.astype(o_ref.dtype)


def attn_ffn_kernel(ctx_ref, x_ref, wo_ref, bo_ref, ln1g_ref, ln1b_ref,
                    w1_ref, b1_ref, w2_ref, b2_ref, ln2g_ref, ln2b_ref,
                    o_ref, h1_ref, acc_ref, *, eps):
    # Fused: attn-out proj + residual + LN1 + GELU-FFN + residual + LN2.
    # Grid = (row_tiles, I_tiles); I axis is the (last, "arbitrary") reduction.
    j = pl.program_id(1)

    @pl.when(j == 0)
    def _():
        attn = (jnp.dot(ctx_ref[...], wo_ref[...],
                        preferred_element_type=jnp.float32)
                + bo_ref[...].astype(jnp.float32))
        # hidden dropout: identity in eval mode
        h = attn + x_ref[...].astype(jnp.float32)
        h1_ref[...] = _ln(h, ln1g_ref[...].astype(jnp.float32),
                          ln1b_ref[...].astype(jnp.float32), eps)
        acc_ref[...] = jnp.zeros_like(acc_ref)

    h1b = h1_ref[...].astype(jnp.bfloat16)
    inter = (jnp.dot(h1b, w1_ref[...], preferred_element_type=jnp.float32)
             + b1_ref[...].astype(jnp.float32))
    inter = _gelu(inter)
    acc_ref[...] += jnp.dot(inter.astype(jnp.bfloat16), w2_ref[...],
                            preferred_element_type=jnp.float32)

    @pl.when(j == pl.num_programs(1) - 1)
    def _():
        h = acc_ref[...] + b2_ref[...].astype(jnp.float32) + h1_ref[...]
        o_ref[...] = _ln(h, ln2g_ref[...].astype(jnp.float32),
                         ln2b_ref[...].astype(jnp.float32), eps).astype(o_ref.dtype)


# ---------------------------------------------------------------------------
# pallas_call wrappers
# ---------------------------------------------------------------------------
def layernorm_rows(x, gamma, beta):
    M, H = x.shape
    mt = _pick_row_tile(M)
    return pl.pallas_call(
        functools.partial(layernorm_rows_kernel, eps=LN_EPS),
        grid=(M // mt,),
        in_specs=[pl.BlockSpec((mt, H), lambda i: (i, 0)),
                  pl.BlockSpec((1, H), lambda i: (0, 0)),
                  pl.BlockSpec((1, H), lambda i: (0, 0))],
        out_specs=pl.BlockSpec((mt, H), lambda i: (i, 0)),
        out_shape=jax.ShapeDtypeStruct((M, H), jnp.bfloat16),
        compiler_params=pltpu.CompilerParams(
            dimension_semantics=("parallel",), vmem_limit_bytes=VMEM_LIMIT),
    )(x, gamma, beta)


def dense_rows(x, w, b):
    """y = x @ w + b (bf16 in/out, f32 accumulate), row-tiled over flat rows."""
    M, K = x.shape
    N = w.shape[1]
    mt = _pick_row_tile(M)
    return pl.pallas_call(
        matmul_bias_kernel,
        grid=(M // mt,),
        in_specs=[pl.BlockSpec((mt, K), lambda i: (i, 0)),
                  pl.BlockSpec((K, N), lambda i: (0, 0)),   # grid-invariant weight
                  pl.BlockSpec((1, N), lambda i: (0, 0))],
        out_specs=pl.BlockSpec((mt, N), lambda i: (i, 0)),
        out_shape=jax.ShapeDtypeStruct((M, N), jnp.bfloat16),
        compiler_params=pltpu.CompilerParams(
            dimension_semantics=("parallel",), vmem_limit_bytes=VMEM_LIMIT),
    )(x, w, b)


def attention_core(qkv, mask_bias3, *, nh, dh, gh):
    """qkv: (B, S, 3H) bf16 (columns = [Q | K | V]); mask_bias3: (B, 1, S) f32.

    Returns (B, S, H) bf16 attention context (heads merged along H) with no
    XLA relayout: head-group slabs are addressed directly via BlockSpecs.
    """
    B, S, threeH = qkv.shape
    H = threeH // 3
    ghd = gh * dh
    nb = nh // gh                     # head groups == last-dim blocks per section
    scale = 1.0 / float(dh) ** 0.5
    qkv_blk = (None, S, ghd)
    return pl.pallas_call(
        functools.partial(attn_core_kernel, scale=scale, gh=gh, dh=dh),
        grid=(B, nb),
        in_specs=[
            pl.BlockSpec(qkv_blk, lambda b, g: (b, 0, g)),            # Q slab
            pl.BlockSpec(qkv_blk, lambda b, g: (b, 0, nb + g)),       # K slab
            pl.BlockSpec(qkv_blk, lambda b, g: (b, 0, 2 * nb + g)),   # V slab
            pl.BlockSpec((None, 1, S), lambda b, g: (b, 0, 0)),       # mask bias
        ],
        out_specs=pl.BlockSpec((None, S, ghd), lambda b, g: (b, 0, g)),
        out_shape=jax.ShapeDtypeStruct((B, S, H), jnp.bfloat16),
        compiler_params=pltpu.CompilerParams(
            dimension_semantics=("parallel", "parallel"),
            vmem_limit_bytes=VMEM_LIMIT),
    )(qkv, qkv, qkv, mask_bias3)


def attn_ffn(ctx2, x2, lp):
    """Fused attention-output + LN1 + FFN + LN2 over flattened (B*S, H) rows."""
    M, H = ctx2.shape
    I = lp["w1"].shape[1]
    mt = _pick_row_tile(M)
    it = _pick_i_tile(I)
    return pl.pallas_call(
        functools.partial(attn_ffn_kernel, eps=LN_EPS),
        grid=(M // mt, I // it),
        in_specs=[
            pl.BlockSpec((mt, H), lambda i, j: (i, 0)),     # ctx
            pl.BlockSpec((mt, H), lambda i, j: (i, 0)),     # residual (layer input)
            pl.BlockSpec((H, H), lambda i, j: (0, 0)),      # wo (grid-invariant)
            pl.BlockSpec((1, H), lambda i, j: (0, 0)),      # bo
            pl.BlockSpec((1, H), lambda i, j: (0, 0)),      # ln1 gamma
            pl.BlockSpec((1, H), lambda i, j: (0, 0)),      # ln1 beta
            pl.BlockSpec((H, it), lambda i, j: (0, j)),     # w1 (streamed over I)
            pl.BlockSpec((1, it), lambda i, j: (0, j)),     # b1
            pl.BlockSpec((it, H), lambda i, j: (j, 0)),     # w2 (streamed over I)
            pl.BlockSpec((1, H), lambda i, j: (0, 0)),      # b2
            pl.BlockSpec((1, H), lambda i, j: (0, 0)),      # ln2 gamma
            pl.BlockSpec((1, H), lambda i, j: (0, 0)),      # ln2 beta
        ],
        out_specs=pl.BlockSpec((mt, H), lambda i, j: (i, 0)),
        out_shape=jax.ShapeDtypeStruct((M, H), jnp.bfloat16),
        scratch_shapes=[pltpu.VMEM((mt, H), jnp.float32),   # LN1 output (f32)
                        pltpu.VMEM((mt, H), jnp.float32)],  # FFN accumulator
        compiler_params=pltpu.CompilerParams(
            dimension_semantics=("parallel", "arbitrary"),
            vmem_limit_bytes=VMEM_LIMIT),
    )(ctx2, x2, lp["wo"], lp["bo"], lp["ln1_g"], lp["ln1_b"],
      lp["w1"], lp["b1"], lp["w2"], lp["b2"], lp["ln2_g"], lp["ln2_b"])


def encoder_layer(hidden2, mask_bias3, lp, B, S, H, nh, dh, gh):
    """hidden2: (B*S, H) bf16 -> (B*S, H) bf16."""
    qkv = dense_rows(hidden2, lp["wqkv"], lp["bqkv"])        # (B*S, 3H) bf16
    qkv = qkv.reshape(B, S, 3 * H)                            # free view
    ctx = attention_core(qkv, mask_bias3, nh=nh, dh=dh, gh=gh)  # (B, S, H) bf16
    ctx2 = ctx.reshape(B * S, H)                              # free view
    return attn_ffn(ctx2, hidden2, lp)                        # (B*S, H) bf16


# ---------------------------------------------------------------------------
# Parameters & full forward
# ---------------------------------------------------------------------------
def init_params(key, cfg, num_labels):
    H, I = cfg["hidden"], cfg["intermediate"]
    keys = iter(jax.random.split(key, 16 + 8 * cfg["num_layers"]))

    def nrm(shape, dtype=jnp.bfloat16, scale=0.02):
        return (scale * jax.random.normal(next(keys), shape, jnp.float32)).astype(dtype)

    params = {
        "word_emb": nrm((cfg["vocab_size"], H), jnp.float32),
        "pos_emb": nrm((cfg["max_pos"], H), jnp.float32),
        "type_emb": nrm((cfg["type_vocab"], H), jnp.float32),
        "emb_ln_g": jnp.ones((1, H), jnp.float32),
        "emb_ln_b": jnp.zeros((1, H), jnp.float32),
        "layers": [],
        # classifier kept in f32 (tiny; done in XLA for parity + zero overhead)
        "cls_w": nrm((H, num_labels), jnp.float32),
        "cls_b": jnp.zeros((num_labels,), jnp.float32),
    }
    for _ in range(cfg["num_layers"]):
        params["layers"].append({
            "wqkv": nrm((H, 3 * H)), "bqkv": jnp.zeros((1, 3 * H), jnp.float32),
            "wo": nrm((H, H)), "bo": jnp.zeros((1, H), jnp.float32),
            "ln1_g": jnp.ones((1, H), jnp.float32),
            "ln1_b": jnp.zeros((1, H), jnp.float32),
            "w1": nrm((H, I)), "b1": jnp.zeros((1, I), jnp.float32),
            "w2": nrm((I, H)), "b2": jnp.zeros((1, H), jnp.float32),
            "ln2_g": jnp.ones((1, H), jnp.float32),
            "ln2_b": jnp.zeros((1, H), jnp.float32),
        })
    return params


def forward(params, input_ids, attention_mask, cfg, num_labels):
    B, S = input_ids.shape
    H = cfg["hidden"]
    nh = cfg["num_heads"]
    dh = H // nh
    gh = _pick_head_group(nh, dh)

    # --- embeddings (table gathers stay in XLA: data-dependent, glue) -------
    # TODO(synk): embedding gathers are plain XLA ops, not a Pallas kernel.
    tok = params["word_emb"][input_ids]                        # (B, S, H)
    pos = params["pos_emb"][:S][None, :, :]                    # (1, S, H)
    typ = params["type_emb"][0][None, None, :]                 # token_type_ids = 0
    emb = (tok + pos + typ).astype(jnp.float32).reshape(B * S, H)
    hidden2 = layernorm_rows(emb, params["emb_ln_g"], params["emb_ln_b"])  # bf16
    # embedding dropout: identity (eval mode)

    # BERT extended attention mask: (1 - mask) * -10000, added to score logits
    mask_bias3 = ((1.0 - attention_mask.astype(jnp.float32)) * -10000.0)[:, None, :]

    for lp in params["layers"]:
        hidden2 = encoder_layer(hidden2, mask_bias3, lp, B, S, H, nh, dh, gh)

    hidden = hidden2.reshape(B, S, H)
    pooled = hidden[:, 0, :].astype(jnp.float32)               # last_hidden_state[:, 0, :]
    # self.dropout(pooled): identity in eval mode
    # TODO(synk): training-mode stochastic dropout not implemented (eval semantics only).
    # Tiny (B, num_labels) classifier matmul: plain XLA (per perf review).
    logits = pooled @ params["cls_w"] + params["cls_b"]
    return logits


# ---------------------------------------------------------------------------
if __name__ == "__main__":
    num_labels = 5
    # Small but tile-friendly demo shapes (H multiple of 128, S multiple of 8,
    # dh = 64 as in BERT).
    cfg = dict(vocab_size=100, hidden=128, num_layers=2, num_heads=2,
               intermediate=512, max_pos=32, type_vocab=2)
    B, S = 4, 16

    root = jax.random.PRNGKey(0)
    k_params, k_ids = jax.random.split(root)
    params = init_params(k_params, cfg, num_labels)

    input_ids = jax.random.randint(k_ids, (B, S), 0, cfg["vocab_size"], jnp.int32)
    attention_mask = jnp.ones((B, S), jnp.int32)
    attention_mask = attention_mask.at[1, 12:].set(0)   # pad last 4 tokens of batch 1

    fwd = jax.jit(lambda p, ids, m: forward(p, ids, m, cfg, num_labels))
    logits = fwd(params, input_ids, attention_mask)
    jax.block_until_ready(logits)
    assert logits.shape == (B, num_labels)
    print("KERNEL_OK")
</pallas_src>

<mosaic_0001>
module attributes {stable_mosaic.version = 11 : i64} {
  func.func @attn_core_kernel(%arg0: i32, %arg1: i32, %arg2: memref<1x16x128xbf16, #tpu.memory_space<vmem>>, %arg3: memref<1x16x128xbf16, #tpu.memory_space<vmem>>, %arg4: memref<1x16x128xbf16, #tpu.memory_space<vmem>>, %arg5: memref<1x1x16xf32, #tpu.memory_space<vmem>>, %arg6: memref<1x16x128xbf16, #tpu.memory_space<vmem>>) attributes {dimension_semantics = [#tpu.dimension_semantics<parallel>, #tpu.dimension_semantics<parallel>], iteration_bounds = array<i64: 4, 1>, scalar_prefetch = 0 : i64, scratch_operands = 0 : i64, tpu.core_type = #tpu.core_type<tc>, window_params = [{transform_indices = @transform_0, window_bounds = array<i64: 1, 16, 128>}, {transform_indices = @transform_1, window_bounds = array<i64: 1, 16, 128>}, {transform_indices = @transform_2, window_bounds = array<i64: 1, 16, 128>}, {transform_indices = @transform_3, window_bounds = array<i64: 1, 1, 16>}, {transform_indices = @transform_4, window_bounds = array<i64: 1, 16, 128>}]} {
    %c0 = arith.constant 0 : index
    %c0_0 = arith.constant 0 : index
    %c0_1 = arith.constant 0 : index
    %0 = vector.load %arg5[%c0, %c0_0, %c0_1] : memref<1x1x16xf32, #tpu.memory_space<vmem>>, vector<1x1x16xf32>
    %1 = vector.shape_cast %0 : vector<1x1x16xf32> to vector<1x16xf32>
    %c0_2 = arith.constant 0 : index
    %c0_3 = arith.constant 0 : index
    %c0_4 = arith.constant 0 : index
    %2 = vector.load %arg2[%c0_2, %c0_3, %c0_4] : memref<1x16x128xbf16, #tpu.memory_space<vmem>>, vector<1x16x64xbf16>
    %3 = vector.shape_cast %2 : vector<1x16x64xbf16> to vector<16x64xbf16>
    %c0_5 = arith.constant 0 : index
    %c0_6 = arith.constant 0 : index
    %c0_7 = arith.constant 0 : index
    %4 = vector.load %arg3[%c0_5, %c0_6, %c0_7] : memref<1x16x128xbf16, #tpu.memory_space<vmem>>, vector<1x16x64xbf16>
    %5 = vector.shape_cast %4 : vector<1x16x64xbf16> to vector<16x64xbf16>
    %c0_8 = arith.constant 0 : index
    %c0_9 = arith.constant 0 : index
    %c0_10 = arith.constant 0 : index
    %6 = vector.load %arg4[%c0_8, %c0_9, %c0_10] : memref<1x16x128xbf16, #tpu.memory_space<vmem>>, vector<1x16x64xbf16>
    %7 = vector.shape_cast %6 : vector<1x16x64xbf16> to vector<16x64xbf16>
    %cst = arith.constant dense<0.000000e+00> : vector<16x16xf32>
    %8 = tpu.matmul %3, %5, %cst {dimension_numbers = #tpu.dot_dimension_numbers<[1], [1], [0], [0], [0, 0, 1, 0], [], []>} : vector<16x64xbf16>, vector<16x64xbf16>, vector<16x16xf32> -> vector<16x16xf32>
    %cst_11 = arith.constant 1.250000e-01 : f32
    %9 = vector.broadcast %cst_11 : f32 to vector<16x16xf32>
    %10 = arith.mulf %8, %9 : vector<16x16xf32>
    %11 = vector.broadcast %1 : vector<1x16xf32> to vector<16x16xf32>
    %12 = arith.addf %10, %11 : vector<16x16xf32>
    %cst_12 = arith.constant dense<0xFF800000> : vector<16xf32>
    %13 = vector.multi_reduction <maximumf>, %12, %cst_12 [1] : vector<16x16xf32> to vector<16xf32>
    %14 = vector.shape_cast %13 : vector<16xf32> to vector<16x1xf32>
    %15 = vector.broadcast %14 : vector<16x1xf32> to vector<16x16xf32>
    %16 = arith.subf %12, %15 : vector<16x16xf32>
    %17 = math.exp %16 : vector<16x16xf32>
    %cst_13 = arith.constant dense<0.000000e+00> : vector<16xf32>
    %18 = vector.multi_reduction <add>, %17, %cst_13 [1] : vector<16x16xf32> to vector<16xf32>
    %19 = vector.shape_cast %18 : vector<16xf32> to vector<16x1xf32>
    %cst_14 = arith.constant 1.000000e+00 : f32
    %20 = vector.broadcast %cst_14 : f32 to vector<16x1xf32>
    %21 = arith.divf %20, %19 : vector<16x1xf32>
    %22 = vector.broadcast %21 : vector<16x1xf32> to vector<16x16xf32>
    %23 = arith.mulf %17, %22 : vector<16x16xf32>
    %24 = arith.truncf %23 : vector<16x16xf32> to vector<16x16xbf16>
    %cst_15 = arith.constant dense<0.000000e+00> : vector<16x64xf32>
    %25 = tpu.matmul %24, %7, %cst_15 {dimension_numbers = #tpu.dot_dimension_numbers<[1], [0], [0], [1], [0, 0, 1, 1], [], []>} : vector<16x16xbf16>, vector<16x64xbf16>, vector<16x64xf32> -> vector<16x64xf32>
    %c0_16 = arith.constant 0 : index
    %c0_17 = arith.constant 0 : index
    %c64 = arith.constant 64 : index
    %26 = vector.load %arg2[%c0_16, %c0_17, %c64] : memref<1x16x128xbf16, #tpu.memory_space<vmem>>, vector<1x16x64xbf16>
    %27 = vector.shape_cast %26 : vector<1x16x64xbf16> to vector<16x64xbf16>
    %c0_18 = arith.constant 0 : index
    %c0_19 = arith.constant 0 : index
    %c64_20 = arith.constant 64 : index
    %28 = vector.load %arg3[%c0_18, %c0_19, %c64_20] : memref<1x16x128xbf16, #tpu.memory_space<vmem>>, vector<1x16x64xbf16>
    %29 = vector.shape_cast %28 : vector<1x16x64xbf16> to vector<16x64xbf16>
    %c0_21 = arith.constant 0 : index
    %c0_22 = arith.constant 0 : index
    %c64_23 = arith.constant 64 : index
    %30 = vector.load %arg4[%c0_21, %c0_22, %c64_23] : memref<1x16x128xbf16, #tpu.memory_space<vmem>>, vector<1x16x64xbf16>
    %31 = vector.shape_cast %30 : vector<1x16x64xbf16> to vector<16x64xbf16>
    %cst_24 = arith.constant dense<0.000000e+00> : vector<16x16xf32>
    %32 = tpu.matmul %27, %29, %cst_24 {dimension_numbers = #tpu.dot_dimension_numbers<[1], [1], [0], [0], [0, 0, 1, 0], [], []>} : vector<16x64xbf16>, vector<16x64xbf16>, vector<16x16xf32> -> vector<16x16xf32>
    %cst_25 = arith.constant 1.250000e-01 : f32
    %33 = vector.broadcast %cst_25 : f32 to vector<16x16xf32>
    %34 = arith.mulf %32, %33 : vector<16x16xf32>
    %35 = vector.broadcast %1 : vector<1x16xf32> to vector<16x16xf32>
    %36 = arith.addf %34, %35 : vector<16x16xf32>
    %cst_26 = arith.constant dense<0xFF800000> : vector<16xf32>
    %37 = vector.multi_reduction <maximumf>, %36, %cst_26 [1] : vector<16x16xf32> to vector<16xf32>
    %38 = vector.shape_cast %37 : vector<16xf32> to vector<16x1xf32>
    %39 = vector.broadcast %38 : vector<16x1xf32> to vector<16x16xf32>
    %40 = arith.subf %36, %39 : vector<16x16xf32>
    %41 = math.exp %40 : vector<16x16xf32>
    %cst_27 = arith.constant dense<0.000000e+00> : vector<16xf32>
    %42 = vector.multi_reduction <add>, %41, %cst_27 [1] : vector<16x16xf32> to vector<16xf32>
    %43 = vector.shape_cast %42 : vector<16xf32> to vector<16x1xf32>
    %cst_28 = arith.constant 1.000000e+00 : f32
    %44 = vector.broadcast %cst_28 : f32 to vector<16x1xf32>
    %45 = arith.divf %44, %43 : vector<16x1xf32>
    %46 = vector.broadcast %45 : vector<16x1xf32> to vector<16x16xf32>
    %47 = arith.mulf %41, %46 : vector<16x16xf32>
    %48 = arith.truncf %47 : vector<16x16xf32> to vector<16x16xbf16>
    %cst_29 = arith.constant dense<0.000000e+00> : vector<16x64xf32>
    %49 = tpu.matmul %48, %31, %cst_29 {dimension_numbers = #tpu.dot_dimension_numbers<[1], [0], [0], [1], [0, 0, 1, 1], [], []>} : vector<16x16xbf16>, vector<16x64xbf16>, vector<16x64xf32> -> vector<16x64xf32>
    %50 = tpu.concatenate %25, %49 in 1 : vector<16x64xf32>, vector<16x64xf32> -> vector<16x128xf32>
    %51 = arith.truncf %50 : vector<16x128xf32> to vector<16x128xbf16>
    %c0_30 = arith.constant 0 : index
    %c0_31 = arith.constant 0 : index
    %c0_32 = arith.constant 0 : index
    %52 = vector.load %arg6[%c0_30, %c0_31, %c0_32] : memref<1x16x128xbf16, #tpu.memory_space<vmem>>, vector<1x16x128xbf16>
    %53 = vector.shape_cast %52 : vector<1x16x128xbf16> to vector<16x128xbf16>
    %54 = vector.shape_cast %51 : vector<16x128xbf16> to vector<1x16x128xbf16>
    tpu.vector_store %arg6[%c0_30, %c0_31, %c0_32], %54 {strides = array<i32>} : memref<1x16x128xbf16, #tpu.memory_space<vmem>>, vector<1x16x128xbf16>,
    return
  }
  func.func @transform_0(%arg0: i32, %arg1: i32) -> (i32, i32, i32) {
    %c0_i32 = arith.constant 0 : i32
    %c0_i32_0 = arith.constant 0 : i32
    return %arg0, %c0_i32, %arg1 : i32, i32, i32
  }
  func.func @transform_1(%arg0: i32, %arg1: i32) -> (i32, i32, i32) {
    %c1_i32 = arith.constant 1 : i32
    %0 = arith.addi %c1_i32, %arg1 : i32
    %c0_i32 = arith.constant 0 : i32
    %c0_i32_0 = arith.constant 0 : i32
    return %arg0, %c0_i32, %0 : i32, i32, i32
  }
  func.func @transform_2(%arg0: i32, %arg1: i32) -> (i32, i32, i32) {
    %c2_i32 = arith.constant 2 : i32
    %0 = arith.addi %c2_i32, %arg1 : i32
    %c0_i32 = arith.constant 0 : i32
    %c0_i32_0 = arith.constant 0 : i32
    return %arg0, %c0_i32, %0 : i32, i32, i32
  }
  func.func @transform_3(%arg0: i32, %arg1: i32) -> (i32, i32, i32) {
    %c0_i32 = arith.constant 0 : i32
    %c0_i32_0 = arith.constant 0 : i32
    %c0_i32_1 = arith.constant 0 : i32
    return %arg0, %c0_i32, %c0_i32_0 : i32, i32, i32
  }
  func.func @transform_4(%arg0: i32, %arg1: i32) -> (i32, i32, i32) {
    %c0_i32 = arith.constant 0 : i32
    %c0_i32_0 = arith.constant 0 : i32
    return %arg0, %c0_i32, %arg1 : i32, i32, i32
  }
}

module attributes {stable_mosaic.version = 11 : i64} {
  func.func @layernorm_rows_kernel(%arg0: i32, %arg1: memref<64x128xf32, #tpu.memory_space<vmem>>, %arg2: memref<1x128xf32, #tpu.memory_space<vmem>>, %arg3: memref<1x128xf32, #tpu.memory_space<vmem>>, %arg4: memref<64x128xbf16, #tpu.memory_space<vmem>>) attributes {dimension_semantics = [#tpu.dimension_semantics<parallel>], iteration_bounds = array<i64: 1>, scalar_prefetch = 0 : i64, scratch_operands = 0 : i64, tpu.core_type = #tpu.core_type<tc>, window_params = [{transform_indices = @transform_0, window_bounds = array<i64: 64, 128>}, {pipeline_mode = #tpu.pipeline_mode<synchronous>, transform_indices = @transform_1, window_bounds = array<i64: 1, 128>}, {pipeline_mode = #tpu.pipeline_mode<synchronous>, transform_indices = @transform_2, window_bounds = array<i64: 1, 128>}, {transform_indices = @transform_3, window_bounds = array<i64: 64, 128>}]} {
    %c0 = arith.constant 0 : index
    %c0_0 = arith.constant 0 : index
    %0 = vector.load %arg1[%c0, %c0_0] : memref<64x128xf32, #tpu.memory_space<vmem>>, vector<64x128xf32>
    %c0_1 = arith.constant 0 : index
    %c0_2 = arith.constant 0 : index
    %1 = vector.load %arg2[%c0_1, %c0_2] : memref<1x128xf32, #tpu.memory_space<vmem>>, vector<1x128xf32>
    %c0_3 = arith.constant 0 : index
    %c0_4 = arith.constant 0 : index
    %2 = vector.load %arg3[%c0_3, %c0_4] : memref<1x128xf32, #tpu.memory_space<vmem>>, vector<1x128xf32>
    %cst = arith.constant dense<0.000000e+00> : vector<64xf32>
    %3 = vector.multi_reduction <add>, %0, %cst [1] : vector<64x128xf32> to vector<64xf32>
    %4 = vector.shape_cast %3 : vector<64xf32> to vector<64x1xf32>
    %cst_5 = arith.constant 1.280000e+02 : f32
    %5 = vector.broadcast %cst_5 : f32 to vector<64x1xf32>
    %6 = arith.divf %4, %5 : vector<64x1xf32>
    %7 = vector.broadcast %6 : vector<64x1xf32> to vector<64x128xf32>
    %8 = arith.subf %0, %7 : vector<64x128xf32>
    %9 = arith.mulf %8, %8 : vector<64x128xf32>
    %cst_6 = arith.constant dense<0.000000e+00> : vector<64xf32>
    %10 = vector.multi_reduction <add>, %9, %cst_6 [1] : vector<64x128xf32> to vector<64xf32>
    %11 = vector.shape_cast %10 : vector<64xf32> to vector<64x1xf32>
    %cst_7 = arith.constant 1.280000e+02 : f32
    %12 = vector.broadcast %cst_7 : f32 to vector<64x1xf32>
    %13 = arith.divf %11, %12 : vector<64x1xf32>
    %14 = vector.broadcast %6 : vector<64x1xf32> to vector<64x128xf32>
    %15 = arith.subf %0, %14 : vector<64x128xf32>
    %cst_8 = arith.constant 9.99999996E-13 : f32
    %16 = vector.broadcast %cst_8 : f32 to vector<64x1xf32>
    %17 = arith.addf %13, %16 : vector<64x1xf32>
    %18 = math.rsqrt %17 : vector<64x1xf32>
    %19 = vector.broadcast %18 : vector<64x1xf32> to vector<64x128xf32>
    %20 = arith.mulf %15, %19 : vector<64x128xf32>
    %21 = vector.broadcast %1 : vector<1x128xf32> to vector<64x128xf32>
    %22 = arith.mulf %20, %21 : vector<64x128xf32>
    %23 = vector.broadcast %2 : vector<1x128xf32> to vector<64x128xf32>
    %24 = arith.addf %22, %23 : vector<64x128xf32>
    %25 = arith.truncf %24 : vector<64x128xf32> to vector<64x128xbf16>
    %c0_9 = arith.constant 0 : index
    %c0_10 = arith.constant 0 : index
    %26 = vector.load %arg4[%c0_9, %c0_10] : memref<64x128xbf16, #tpu.memory_space<vmem>>, vector<64x128xbf16>
    tpu.vector_store %arg4[%c0_9, %c0_10], %25 {strides = array<i32>} : memref<64x128xbf16, #tpu.memory_space<vmem>>, vector<64x128xbf16>,
    return
  }
  func.func @transform_0(%arg0: i32) -> (i32, i32) {
    %c0_i32 = arith.constant 0 : i32
    %c0_i32_0 = arith.constant 0 : i32
    return %arg0, %c0_i32 : i32, i32
  }
  func.func @transform_1(%arg0: i32) -> (i32, i32) {
    %c0_i32 = arith.constant 0 : i32
    %c0_i32_0 = arith.constant 0 : i32
    %c0_i32_1 = arith.constant 0 : i32
    return %c0_i32, %c0_i32_0 : i32, i32
  }
  func.func @transform_2(%arg0: i32) -> (i32, i32) {
    %c0_i32 = arith.constant 0 : i32
    %c0_i32_0 = arith.constant 0 : i32
    %c0_i32_1 = arith.constant 0 : i32
    return %c0_i32, %c0_i32_0 : i32, i32
  }
  func.func @transform_3(%arg0: i32) -> (i32, i32) {
    %c0_i32 = arith.constant 0 : i32
    %c0_i32_0 = arith.constant 0 : i32
    return %arg0, %c0_i32 : i32, i32
  }
}

module attributes {stable_mosaic.version = 11 : i64} {
  func.func @matmul_bias_kernel(%arg0: i32, %arg1: memref<64x128xbf16, #tpu.memory_space<vmem>>, %arg2: memref<128x384xbf16, #tpu.memory_space<vmem>>, %arg3: memref<1x384xf32, #tpu.memory_space<vmem>>, %arg4: memref<64x384xbf16, #tpu.memory_space<vmem>>) attributes {dimension_semantics = [#tpu.dimension_semantics<parallel>], iteration_bounds = array<i64: 1>, scalar_prefetch = 0 : i64, scratch_operands = 0 : i64, tpu.core_type = #tpu.core_type<tc>, window_params = [{transform_indices = @transform_0, window_bounds = array<i64: 64, 128>}, {pipeline_mode = #tpu.pipeline_mode<synchronous>, transform_indices = @transform_1, window_bounds = array<i64: 128, 384>}, {pipeline_mode = #tpu.pipeline_mode<synchronous>, transform_indices = @transform_2, window_bounds = array<i64: 1, 384>}, {transform_indices = @transform_3, window_bounds = array<i64: 64, 384>}]} {
    %c0 = arith.constant 0 : index
    %c0_0 = arith.constant 0 : index
    %0 = vector.load %arg1[%c0, %c0_0] : memref<64x128xbf16, #tpu.memory_space<vmem>>, vector<64x128xbf16>
    %c0_1 = arith.constant 0 : index
    %c0_2 = arith.constant 0 : index
    %1 = vector.load %arg2[%c0_1, %c0_2] : memref<128x384xbf16, #tpu.memory_space<vmem>>, vector<128x384xbf16>
    %cst = arith.constant dense<0.000000e+00> : vector<64x384xf32>
    %2 = tpu.matmul %0, %1, %cst {dimension_numbers = #tpu.dot_dimension_numbers<[1], [0], [0], [1], [0, 0, 1, 1], [], []>} : vector<64x128xbf16>, vector<128x384xbf16>, vector<64x384xf32> -> vector<64x384xf32>
    %c0_3 = arith.constant 0 : index
    %c0_4 = arith.constant 0 : index
    %3 = vector.load %arg3[%c0_3, %c0_4] : memref<1x384xf32, #tpu.memory_space<vmem>>, vector<1x384xf32>
    %4 = vector.broadcast %3 : vector<1x384xf32> to vector<64x384xf32>
    %5 = arith.addf %2, %4 : vector<64x384xf32>
    %6 = arith.truncf %5 : vector<64x384xf32> to vector<64x384xbf16>
    %c0_5 = arith.constant 0 : index
    %c0_6 = arith.constant 0 : index
    %7 = vector.load %arg4[%c0_5, %c0_6] : memref<64x384xbf16, #tpu.memory_space<vmem>>, vector<64x384xbf16>
    tpu.vector_store %arg4[%c0_5, %c0_6], %6 {strides = array<i32>} : memref<64x384xbf16, #tpu.memory_space<vmem>>, vector<64x384xbf16>,
    return
  }
  func.func @transform_0(%arg0: i32) -> (i32, i32) {
    %c0_i32 = arith.constant 0 : i32
    %c0_i32_0 = arith.constant 0 : i32
    return %arg0, %c0_i32 : i32, i32
  }
  func.func @transform_1(%arg0: i32) -> (i32, i32) {
    %c0_i32 = arith.constant 0 : i32
    %c0_i32_0 = arith.constant 0 : i32
    %c0_i32_1 = arith.constant 0 : i32
    return %c0_i32, %c0_i32_0 : i32, i32
  }
  func.func @transform_2(%arg0: i32) -> (i32, i32) {
    %c0_i32 = arith.constant 0 : i32
    %c0_i32_0 = arith.constant 0 : i32
    %c0_i32_1 = arith.constant 0 : i32
    return %c0_i32, %c0_i32_0 : i32, i32
  }
  func.func @transform_3(%arg0: i32) -> (i32, i32) {
    %c0_i32 = arith.constant 0 : i32
    %c0_i32_0 = arith.constant 0 : i32
    return %arg0, %c0_i32 : i32, i32
  }
}

module attributes {stable_mosaic.version = 11 : i64} {
  func.func @attn_ffn_kernel(%arg0: i32, %arg1: i32, %arg2: memref<64x128xbf16, #tpu.memory_space<vmem>>, %arg3: memref<64x128xbf16, #tpu.memory_space<vmem>>, %arg4: memref<128x128xbf16, #tpu.memory_space<vmem>>, %arg5: memref<1x128xf32, #tpu.memory_space<vmem>>, %arg6: memref<1x128xf32, #tpu.memory_space<vmem>>, %arg7: memref<1x128xf32, #tpu.memory_space<vmem>>, %arg8: memref<128x512xbf16, #tpu.memory_space<vmem>>, %arg9: memref<1x512xf32, #tpu.memory_space<vmem>>, %arg10: memref<512x128xbf16, #tpu.memory_space<vmem>>, %arg11: memref<1x128xf32, #tpu.memory_space<vmem>>, %arg12: memref<1x128xf32, #tpu.memory_space<vmem>>, %arg13: memref<1x128xf32, #tpu.memory_space<vmem>>, %arg14: memref<64x128xbf16, #tpu.memory_space<vmem>>, %arg15: memref<64x128xf32, #tpu.memory_space<vmem>>, %arg16: memref<64x128xf32, #tpu.memory_space<vmem>>) attributes {dimension_semantics = [#tpu.dimension_semantics<parallel>, #tpu.dimension_semantics<arbitrary>], iteration_bounds = array<i64: 1, 1>, scalar_prefetch = 0 : i64, scratch_operands = 2 : i64, tpu.core_type = #tpu.core_type<tc>, window_params = [{transform_indices = @transform_0, window_bounds = array<i64: 64, 128>}, {transform_indices = @transform_1, window_bounds = array<i64: 64, 128>}, {pipeline_mode = #tpu.pipeline_mode<synchronous>, transform_indices = @transform_2, window_bounds = array<i64: 128, 128>}, {pipeline_mode = #tpu.pipeline_mode<synchronous>, transform_indices = @transform_3, window_bounds = array<i64: 1, 128>}, {pipeline_mode = #tpu.pipeline_mode<synchronous>, transform_indices = @transform_4, window_bounds = array<i64: 1, 128>}, {pipeline_mode = #tpu.pipeline_mode<synchronous>, transform_indices = @transform_5, window_bounds = array<i64: 1, 128>}, {transform_indices = @transform_6, window_bounds = array<i64: 128, 512>}, {transform_indices = @transform_7, window_bounds = array<i64: 1, 512>}, {transform_indices = @transform_8, window_bounds = array<i64: 512, 128>}, {pipeline_mode = #tpu.pipeline_mode<synchronous>, transform_indices = @transform_9, window_bounds = array<i64: 1, 128>}, {pipeline_mode = #tpu.pipeline_mode<synchronous>, transform_indices = @transform_10, window_bounds = array<i64: 1, 128>}, {pipeline_mode = #tpu.pipeline_mode<synchronous>, transform_indices = @transform_11, window_bounds = array<i64: 1, 128>}, {transform_indices = @transform_12, window_bounds = array<i64: 64, 128>}]} {
    %c0_i32 = arith.constant 0 : i32
    %0 = arith.cmpi eq, %arg1, %c0_i32 : i32
    %1 = arith.extui %0 : i1 to i32
    %c0_i32_0 = arith.constant 0 : i32
    %2 = arith.cmpi ne, %1, %c0_i32_0 : i32
    scf.if %2 {
      %c0_18 = arith.constant 0 : index
      %c0_19 = arith.constant 0 : index
      %28 = vector.load %arg2[%c0_18, %c0_19] : memref<64x128xbf16, #tpu.memory_space<vmem>>, vector<64x128xbf16>
      %c0_20 = arith.constant 0 : index
      %c0_21 = arith.constant 0 : index
      %29 = vector.load %arg4[%c0_20, %c0_21] : memref<128x128xbf16, #tpu.memory_space<vmem>>, vector<128x128xbf16>
      %cst_22 = arith.constant dense<0.000000e+00> : vector<64x128xf32>
      %30 = tpu.matmul %28, %29, %cst_22 {dimension_numbers = #tpu.dot_dimension_numbers<[1], [0], [0], [1], [0, 0, 1, 1], [], []>} : vector<64x128xbf16>, vector<128x128xbf16>, vector<64x128xf32> -> vector<64x128xf32>
      %c0_23 = arith.constant 0 : index
      %c0_24 = arith.constant 0 : index
      %31 = vector.load %arg5[%c0_23, %c0_24] : memref<1x128xf32, #tpu.memory_space<vmem>>, vector<1x128xf32>
      %32 = vector.broadcast %31 : vector<1x128xf32> to vector<64x128xf32>
      %33 = arith.addf %30, %32 : vector<64x128xf32>
      %c0_25 = arith.constant 0 : index
      %c0_26 = arith.constant 0 : index
      %34 = vector.load %arg3[%c0_25, %c0_26] : memref<64x128xbf16, #tpu.memory_space<vmem>>, vector<64x128xbf16>
      %35 = arith.extf %34 : vector<64x128xbf16> to vector<64x128xf32>
      %36 = arith.addf %33, %35 : vector<64x128xf32>
      %c0_27 = arith.constant 0 : index
      %c0_28 = arith.constant 0 : index
      %37 = vector.load %arg6[%c0_27, %c0_28] : memref<1x128xf32, #tpu.memory_space<vmem>>, vector<1x128xf32>
      %c0_29 = arith.constant 0 : index
      %c0_30 = arith.constant 0 : index
      %38 = vector.load %arg7[%c0_29, %c0_30] : memref<1x128xf32, #tpu.memory_space<vmem>>, vector<1x128xf32>
      %cst_31 = arith.constant dense<0.000000e+00> : vector<64xf32>
      %39 = vector.multi_reduction <add>, %36, %cst_31 [1] : vector<64x128xf32> to vector<64xf32>
      %40 = vector.shape_cast %39 : vector<64xf32> to vector<64x1xf32>
      %cst_32 = arith.constant 1.280000e+02 : f32
      %41 = vector.broadcast %cst_32 : f32 to vector<64x1xf32>
      %42 = arith.divf %40, %41 : vector<64x1xf32>
      %43 = vector.broadcast %42 : vector<64x1xf32> to vector<64x128xf32>
      %44 = arith.subf %36, %43 : vector<64x128xf32>
      %45 = arith.mulf %44, %44 : vector<64x128xf32>
      %cst_33 = arith.constant dense<0.000000e+00> : vector<64xf32>
      %46 = vector.multi_reduction <add>, %45, %cst_33 [1] : vector<64x128xf32> to vector<64xf32>
      %47 = vector.shape_cast %46 : vector<64xf32> to vector<64x1xf32>
      %cst_34 = arith.constant 1.280000e+02 : f32
      %48 = vector.broadcast %cst_34 : f32 to vector<64x1xf32>
      %49 = arith.divf %47, %48 : vector<64x1xf32>
      %50 = vector.broadcast %42 : vector<64x1xf32> to vector<64x128xf32>
      %51 = arith.subf %36, %50 : vector<64x128xf32>
      %cst_35 = arith.constant 9.99999996E-13 : f32
      %52 = vector.broadcast %cst_35 : f32 to vector<64x1xf32>
      %53 = arith.addf %49, %52 : vector<64x1xf32>
      %54 = math.rsqrt %53 : vector<64x1xf32>
      %55 = vector.broadcast %54 : vector<64x1xf32> to vector<64x128xf32>
      %56 = arith.mulf %51, %55 : vector<64x128xf32>
      %57 = vector.broadcast %37 : vector<1x128xf32> to vector<64x128xf32>
      %58 = arith.mulf %56, %57 : vector<64x128xf32>
      %59 = vector.broadcast %38 : vector<1x128xf32> to vector<64x128xf32>
      %60 = arith.addf %58, %59 : vector<64x128xf32>
      %c0_36 = arith.constant 0 : index
      %c0_37 = arith.constant 0 : index
      %61 = vector.load %arg15[%c0_36, %c0_37] : memref<64x128xf32, #tpu.memory_space<vmem>>, vector<64x128xf32>
      tpu.vector_store %arg15[%c0_36, %c0_37], %60 {strides = array<i32>} : memref<64x128xf32, #tpu.memory_space<vmem>>, vector<64x128xf32>,
      %cst_38 = arith.constant 0.000000e+00 : f32
      %62 = vector.broadcast %cst_38 : f32 to vector<64x128xf32>
      %c0_39 = arith.constant 0 : index
      %c0_40 = arith.constant 0 : index
      %63 = vector.load %arg16[%c0_39, %c0_40] : memref<64x128xf32, #tpu.memory_space<vmem>>, vector<64x128xf32>
      tpu.vector_store %arg16[%c0_39, %c0_40], %62 {strides = array<i32>} : memref<64x128xf32, #tpu.memory_space<vmem>>, vector<64x128xf32>,
    } else {
    }
    %c0 = arith.constant 0 : index
    %c0_1 = arith.constant 0 : index
    %3 = vector.load %arg15[%c0, %c0_1] : memref<64x128xf32, #tpu.memory_space<vmem>>, vector<64x128xf32>
    %4 = arith.truncf %3 : vector<64x128xf32> to vector<64x128xbf16>
    %c0_2 = arith.constant 0 : index
    %c0_3 = arith.constant 0 : index
    %5 = vector.load %arg8[%c0_2, %c0_3] : memref<128x512xbf16, #tpu.memory_space<vmem>>, vector<128x512xbf16>
    %cst = arith.constant dense<0.000000e+00> : vector<64x512xf32>
    %6 = tpu.matmul %4, %5, %cst {dimension_numbers = #tpu.dot_dimension_numbers<[1], [0], [0], [1], [0, 0, 1, 1], [], []>} : vector<64x128xbf16>, vector<128x512xbf16>, vector<64x512xf32> -> vector<64x512xf32>
    %c0_4 = arith.constant 0 : index
    %c0_5 = arith.constant 0 : index
    %7 = vector.load %arg9[%c0_4, %c0_5] : memref<1x512xf32, #tpu.memory_space<vmem>>, vector<1x512xf32>
    %8 = vector.broadcast %7 : vector<1x512xf32> to vector<64x512xf32>
    %9 = arith.addf %6, %8 : vector<64x512xf32>
    %cst_6 = arith.constant 5.000000e-01 : f32
    %10 = vector.broadcast %cst_6 : f32 to vector<64x512xf32>
    %11 = arith.mulf %10, %9 : vector<64x512xf32>
    %cst_7 = arith.constant 2.000000e+00 : f32
    %12 = math.sqrt %cst_7 : f32
    %13 = vector.broadcast %12 : f32 to vector<64x512xf32>
    %14 = arith.divf %9, %13 : vector<64x512xf32>
    %15 = math.erf %14 : vector<64x512xf32>
    %cst_8 = arith.constant 1.000000e+00 : f32
    %16 = vector.broadcast %cst_8 : f32 to vector<64x512xf32>
    %17 = arith.addf %16, %15 : vector<64x512xf32>
    %18 = arith.mulf %11, %17 : vector<64x512xf32>
    %c0_9 = arith.constant 0 : index
    %c0_10 = arith.constant 0 : index
    %19 = vector.load %arg16[%c0_9, %c0_10] : memref<64x128xf32, #tpu.memory_space<vmem>>, vector<64x128xf32>
    %20 = arith.truncf %18 : vector<64x512xf32> to vector<64x512xbf16>
    %c0_11 = arith.constant 0 : index
    %c0_12 = arith.constant 0 : index
    %21 = vector.load %arg10[%c0_11, %c0_12] : memref<512x128xbf16, #tpu.memory_space<vmem>>, vector<512x128xbf16>
    %cst_13 = arith.constant dense<0.000000e+00> : vector<64x128xf32>
    %22 = tpu.matmul %20, %21, %cst_13 {dimension_numbers = #tpu.dot_dimension_numbers<[1], [0], [0], [1], [0, 0, 1, 1], [], []>} : vector<64x512xbf16>, vector<512x128xbf16>, vector<64x128xf32> -> vector<64x128xf32>
    %23 = arith.addf %19, %22 : vector<64x128xf32>
    %c0_14 = arith.constant 0 : index
    %c0_15 = arith.constant 0 : index
    %24 = vector.load %arg16[%c0_14, %c0_15] : memref<64x128xf32, #tpu.memory_space<vmem>>, vector<64x128xf32>
    tpu.vector_store %arg16[%c0_14, %c0_15], %23 {strides = array<i32>} : memref<64x128xf32, #tpu.memory_space<vmem>>, vector<64x128xf32>,
    %c0_i32_16 = arith.constant 0 : i32
    %25 = arith.cmpi eq, %arg1, %c0_i32_16 : i32
    %26 = arith.extui %25 : i1 to i32
    %c0_i32_17 = arith.constant 0 : i32
    %27 = arith.cmpi ne, %26, %c0_i32_17 : i32
    scf.if %27 {
      %c0_18 = arith.constant 0 : index
      %c0_19 = arith.constant 0 : index
      %28 = vector.load %arg16[%c0_18, %c0_19] : memref<64x128xf32, #tpu.memory_space<vmem>>, vector<64x128xf32>
      %c0_20 = arith.constant 0 : index
      %c0_21 = arith.constant 0 : index
      %29 = vector.load %arg11[%c0_20, %c0_21] : memref<1x128xf32, #tpu.memory_space<vmem>>, vector<1x128xf32>
      %30 = vector.broadcast %29 : vector<1x128xf32> to vector<64x128xf32>
      %31 = arith.addf %28, %30 : vector<64x128xf32>
      %c0_22 = arith.constant 0 : index
      %c0_23 = arith.constant 0 : index
      %32 = vector.load %arg15[%c0_22, %c0_23] : memref<64x128xf32, #tpu.memory_space<vmem>>, vector<64x128xf32>
      %33 = arith.addf %31, %32 : vector<64x128xf32>
      %c0_24 = arith.constant 0 : index
      %c0_25 = arith.constant 0 : index
      %34 = vector.load %arg12[%c0_24, %c0_25] : memref<1x128xf32, #tpu.memory_space<vmem>>, vector<1x128xf32>
      %c0_26 = arith.constant 0 : index
      %c0_27 = arith.constant 0 : index
      %35 = vector.load %arg13[%c0_26, %c0_27] : memref<1x128xf32, #tpu.memory_space<vmem>>, vector<1x128xf32>
      %cst_28 = arith.constant dense<0.000000e+00> : vector<64xf32>
      %36 = vector.multi_reduction <add>, %33, %cst_28 [1] : vector<64x128xf32> to vector<64xf32>
      %37 = vector.shape_cast %36 : vector<64xf32> to vector<64x1xf32>
      %cst_29 = arith.constant 1.280000e+02 : f32
      %38 = vector.broadcast %cst_29 : f32 to vector<64x1xf32>
      %39 = arith.divf %37, %38 : vector<64x1xf32>
      %40 = vector.broadcast %39 : vector<64x1xf32> to vector<64x128xf32>
      %41 = arith.subf %33, %40 : vector<64x128xf32>
      %42 = arith.mulf %41, %41 : vector<64x128xf32>
      %cst_30 = arith.constant dense<0.000000e+00> : vector<64xf32>
      %43 = vector.multi_reduction <add>, %42, %cst_30 [1] : vector<64x128xf32> to vector<64xf32>
      %44 = vector.shape_cast %43 : vector<64xf32> to vector<64x1xf32>
      %cst_31 = arith.constant 1.280000e+02 : f32
      %45 = vector.broadcast %cst_31 : f32 to vector<64x1xf32>
      %46 = arith.divf %44, %45 : vector<64x1xf32>
      %47 = vector.broadcast %39 : vector<64x1xf32> to vector<64x128xf32>
      %48 = arith.subf %33, %47 : vector<64x128xf32>
      %cst_32 = arith.constant 9.99999996E-13 : f32
      %49 = vector.broadcast %cst_32 : f32 to vector<64x1xf32>
      %50 = arith.addf %46, %49 : vector<64x1xf32>
      %51 = math.rsqrt %50 : vector<64x1xf32>
      %52 = vector.broadcast %51 : vector<64x1xf32> to vector<64x128xf32>
      %53 = arith.mulf %48, %52 : vector<64x128xf32>
      %54 = vector.broadcast %34 : vector<1x128xf32> to vector<64x128xf32>
      %55 = arith.mulf %53, %54 : vector<64x128xf32>
      %56 = vector.broadcast %35 : vector<1x128xf32> to vector<64x128xf32>
      %57 = arith.addf %55, %56 : vector<64x128xf32>
      %58 = arith.truncf %57 : vector<64x128xf32> to vector<64x128xbf16>
      %c0_33 = arith.constant 0 : index
      %c0_34 = arith.constant 0 : index
      %59 = vector.load %arg14[%c0_33, %c0_34] : memref<64x128xbf16, #tpu.memory_space<vmem>>, vector<64x128xbf16>
      tpu.vector_store %arg14[%c0_33, %c0_34], %58 {strides = array<i32>} : memref<64x128xbf16, #tpu.memory_space<vmem>>, vector<64x128xbf16>,
    } else {
    }
    return
  }
  func.func @transform_0(%arg0: i32, %arg1: i32) -> (i32, i32) {
    %c0_i32 = arith.constant 0 : i32
    %c0_i32_0 = arith.constant 0 : i32
    return %arg0, %c0_i32 : i32, i32
  }
  func.func @transform_1(%arg0: i32, %arg1: i32) -> (i32, i32) {
    %c0_i32 = arith.constant 0 : i32
    %c0_i32_0 = arith.constant 0 : i32
    return %arg0, %c0_i32 : i32, i32
  }
  func.func @transform_2(%arg0: i32, %arg1: i32) -> (i32, i32) {
    %c0_i32 = arith.constant 0 : i32
    %c0_i32_0 = arith.constant 0 : i32
    %c0_i32_1 = arith.constant 0 : i32
    return %c0_i32, %c0_i32_0 : i32, i32
  }
  func.func @transform_3(%arg0: i32, %arg1: i32) -> (i32, i32) {
    %c0_i32 = arith.constant 0 : i32
    %c0_i32_0 = arith.constant 0 : i32
    %c0_i32_1 = arith.constant 0 : i32
    return %c0_i32, %c0_i32_0 : i32, i32
  }
  func.func @transform_4(%arg0: i32, %arg1: i32) -> (i32, i32) {
    %c0_i32 = arith.constant 0 : i32
    %c0_i32_0 = arith.constant 0 : i32
    %c0_i32_1 = arith.constant 0 : i32
    return %c0_i32, %c0_i32_0 : i32, i32
  }
  func.func @transform_5(%arg0: i32, %arg1: i32) -> (i32, i32) {
    %c0_i32 = arith.constant 0 : i32
    %c0_i32_0 = arith.constant 0 : i32
    %c0_i32_1 = arith.constant 0 : i32
    return %c0_i32, %c0_i32_0 : i32, i32
  }
  func.func @transform_6(%arg0: i32, %arg1: i32) -> (i32, i32) {
    %c0_i32 = arith.constant 0 : i32
    %c0_i32_0 = arith.constant 0 : i32
    return %c0_i32, %arg1 : i32, i32
  }
  func.func @transform_7(%arg0: i32, %arg1: i32) -> (i32, i32) {
    %c0_i32 = arith.constant 0 : i32
    %c0_i32_0 = arith.constant 0 : i32
    return %c0_i32, %arg1 : i32, i32
  }
  func.func @transform_8(%arg0: i32, %arg1: i32) -> (i32, i32) {
    %c0_i32 = arith.constant 0 : i32
    %c0_i32_0 = arith.constant 0 : i32
    return %arg1, %c0_i32 : i32, i32
  }
  func.func @transform_9(%arg0: i32, %arg1: i32) -> (i32, i32) {
    %c0_i32 = arith.constant 0 : i32
    %c0_i32_0 = arith.constant 0 : i32
    %c0_i32_1 = arith.constant 0 : i32
    return %c0_i32, %c0_i32_0 : i32, i32
  }
  func.func @transform_10(%arg0: i32, %arg1: i32) -> (i32, i32) {
    %c0_i32 = arith.constant 0 : i32
    %c0_i32_0 = arith.constant 0 : i32
    %c0_i32_1 = arith.constant 0 : i32
    return %c0_i32, %c0_i32_0 : i32, i32
  }
  func.func @transform_11(%arg0: i32, %arg1: i32) -> (i32, i32) {
    %c0_i32 = arith.constant 0 : i32
    %c0_i32_0 = arith.constant 0 : i32
    %c0_i32_1 = arith.constant 0 : i32
    return %c0_i32, %c0_i32_0 : i32, i32
  }
  func.func @transform_12(%arg0: i32, %arg1: i32) -> (i32, i32) {
    %c0_i32 = arith.constant 0 : i32
    %c0_i32_0 = arith.constant 0 : i32
    return %arg0, %c0_i32 : i32, i32
  }
}

</mosaic_0001>

<llo_original>
// kernel: _lambda_.7
$region0: #{_lambda_.7}
  #allocation0 [shape = 'u32[]', space=smem, size = 0x4, offset = 0x4, fixed_abs, tag = 'smem constant byte address 0x4 - core index']
  #allocation1 [shape = 'u32[144,128]{1,0:T(1,128)}', space=vmem, size = 0x12000, scoped, tag = 'internal scratch']
  %s0 = inlined_call_operand.vmem [shape: f32[64,128], index: 0, kind: input, shape index: {}]
  %s1 = inlined_call_operand.vmem [shape: f32[1,128], index: 1, kind: input, shape index: {}]
  %s2 = inlined_call_operand.vmem [shape: f32[1,128], index: 2, kind: input, shape index: {}]
  %s3 = inlined_call_operand.vmem [shape: bf16[64,128], index: 3, kind: output, shape index: {}]
  %s4 = sld [smem:[#allocation0]]
  $region22: #{_lambda_.7} parent=0
    _
  %s6 = ssub.s32 1, %s4
  %s7 = scalar_select 0, %s6, %s4
  // Predicated region
  $region2: #{_lambda_.7} parent=0 // pred_check
    _
  $region3: #{_lambda_.7} parent=0 // pred_check_branch
    %9 = sbr.rel (0) target = $region5
  $region4: #{_lambda_.7} parent=0 // pred_region
    _
  $region5: #{_lambda_.7} parent=0 // pred_fallthru
    _
  // Predicated region
  $region6: #{_lambda_.7} parent=0 // pred_check
    _
  $region7: #{_lambda_.7} parent=0 // pred_check_branch
    %11 = sbr.rel (0) target = $region9
  $region8: #{_lambda_.7} parent=0 // pred_region
    _
  $region9: #{_lambda_.7} parent=0 // pred_fallthru
    _
  // Predicated region
  $region10: #{_lambda_.7} parent=0 // pred_check
    _
  $region11: #{_lambda_.7} parent=0 // pred_check_branch
    %13 = sbr.rel (0) target = $region13
  $region12: #{_lambda_.7} parent=0 // pred_region
    _
  $region13: #{_lambda_.7} parent=0 // pred_fallthru
    _
  %v14 = vld [vmem:[%s0] sm:$0xff]
  %v15 = vld [vmem:[%s0 + $0x8] sm:$0xff]
  %v16 = vld [vmem:[%s0 + $0x10] sm:$0xff]
  %v17 = vld [vmem:[%s0 + $0x18] sm:$0xff]
  %v18 = vld [vmem:[%s0 + $0x20] sm:$0xff]
  %v19 = vld [vmem:[%s0 + $0x28] sm:$0xff]
  %v20 = vld [vmem:[%s0 + $0x30] sm:$0xff]
  %v21 = vld [vmem:[%s0 + $0x38] sm:$0xff]
  %v22 = vld [vmem:[%s1] sm:$0x1]
  %v23 = vld [vmem:[%s2] sm:$0x1]
  %24 = vadd.xlane.f32.xlu0 %v14
  %v25 = vpop.xlane.xlu0 %24
  %26 = vadd.xlane.f32.xlu0 %v15
  %v27 = vpop.xlane.xlu0 %26
  %28 = vadd.xlane.f32.xlu0 %v16
  %v29 = vpop.xlane.xlu0 %28
  %30 = vadd.xlane.f32.xlu0 %v17
  %v31 = vpop.xlane.xlu0 %30
  %32 = vadd.xlane.f32.xlu0 %v18
  %v33 = vpop.xlane.xlu0 %32
  %34 = vadd.xlane.f32.xlu0 %v19
  %v35 = vpop.xlane.xlu0 %34
  %36 = vadd.xlane.f32.xlu0 %v20
  %v37 = vpop.xlane.xlu0 %36
  %38 = vadd.xlane.f32.xlu0 %v21
  %v39 = vpop.xlane.xlu0 %38
  %v40 = vrcp.pop 128.0
  %v41 = vmul.f32 %v25, %v40
  %v42 = vmul.f32 %v27, %v40
  %v43 = vmul.f32 %v29, %v40
  %v44 = vmul.f32 %v31, %v40
  %v45 = vmul.f32 %v33, %v40
  %v46 = vmul.f32 %v35, %v40
  %v47 = vmul.f32 %v37, %v40
  %v48 = vmul.f32 %v39, %v40
  %v49 = vsub.f32 %v14, %v41
  %v50 = vsub.f32 %v15, %v42
  %v51 = vsub.f32 %v16, %v43
  %v52 = vsub.f32 %v17, %v44
  %v53 = vsub.f32 %v18, %v45
  %v54 = vsub.f32 %v19, %v46
  %v55 = vsub.f32 %v20, %v47
  %v56 = vsub.f32 %v21, %v48
  %v57 = vmul.f32 %v49, %v49
  %v58 = vmul.f32 %v50, %v50
  %v59 = vmul.f32 %v51, %v51
  %v60 = vmul.f32 %v52, %v52
  %v61 = vmul.f32 %v53, %v53
  %v62 = vmul.f32 %v54, %v54
  %v63 = vmul.f32 %v55, %v55
  %v64 = vmul.f32 %v56, %v56
  %65 = vadd.xlane.f32.xlu0 %v57
  %v66 = vpop.xlane.xlu0 %65
  %67 = vadd.xlane.f32.xlu0 %v58
  %v68 = vpop.xlane.xlu0 %67
  %69 = vadd.xlane.f32.xlu0 %v59
  %v70 = vpop.xlane.xlu0 %69
  %71 = vadd.xlane.f32.xlu0 %v60
  %v72 = vpop.xlane.xlu0 %71
  %73 = vadd.xlane.f32.xlu0 %v61
  %v74 = vpop.xlane.xlu0 %73
  %75 = vadd.xlane.f32.xlu0 %v62
  %v76 = vpop.xlane.xlu0 %75
  %77 = vadd.xlane.f32.xlu0 %v63
  %v78 = vpop.xlane.xlu0 %77
  %79 = vadd.xlane.f32.xlu0 %v64
  %v80 = vpop.xlane.xlu0 %79
  %v81 = vmul.f32 %v66, %v40
  %v82 = vmul.f32 %v68, %v40
  %v83 = vmul.f32 %v70, %v40
  %v84 = vmul.f32 %v72, %v40
  %v85 = vmul.f32 %v74, %v40
  %v86 = vmul.f32 %v76, %v40
  %v87 = vmul.f32 %v78, %v40
  %v88 = vmul.f32 %v80, %v40
  %v89 = vadd.f32 %v81, 1e-12
  %v90 = vadd.f32 %v82, 1e-12
  %v91 = vadd.f32 %v83, 1e-12
  %v92 = vadd.f32 %v84, 1e-12
  %v93 = vadd.f32 %v85, 1e-12
  %v94 = vadd.f32 %v86, 1e-12
  %v95 = vadd.f32 %v87, 1e-12
  %v96 = vadd.f32 %v88, 1e-12
  %v97 = vrsqrt.pop %v89
  %v98 = vrsqrt.pop %v90
  %v99 = vrsqrt.pop %v91
  %v100 = vrsqrt.pop %v92
  %v101 = vrsqrt.pop %v93
  %v102 = vrsqrt.pop %v94
  %v103 = vrsqrt.pop %v95
  %v104 = vrsqrt.pop %v96
  %v105 = vmul.f32 %v49, %v97
  %v106 = vmul.f32 %v50, %v98
  %v107 = vmul.f32 %v51, %v99
  %v108 = vmul.f32 %v52, %v100
  %v109 = vmul.f32 %v53, %v101
  %v110 = vmul.f32 %v54, %v102
  %v111 = vmul.f32 %v55, %v103
  %v112 = vmul.f32 %v56, %v104
  %v114 = vlaneseq
  %v115 = vshrl.u32 %v114, 7
  %v116 = vsub.s32 0, %v115
  %v117 = vrot.slane %v22, %v116
  %v119 = vmul.f32 %v105, %v117
  %v120 = vmul.f32 %v106, %v117
  %v121 = vmul.f32 %v107, %v117
  %v122 = vmul.f32 %v108, %v117
  %v123 = vmul.f32 %v109, %v117
  %v124 = vmul.f32 %v110, %v117
  %v125 = vmul.f32 %v111, %v117
  %v126 = vmul.f32 %v112, %v117
  %v128 = vlaneseq
  %v129 = vshrl.u32 %v128, 7
  %v130 = vsub.s32 0, %v129
  %v131 = vrot.slane %v23, %v130
  %v133 = vadd.f32 %v119, %v131
  %v134 = vadd.f32 %v120, %v131
  %v135 = vadd.f32 %v121, %v131
  %v136 = vadd.f32 %v122, %v131
  %v137 = vadd.f32 %v123, %v131
  %v138 = vadd.f32 %v124, %v131
  %v139 = vadd.f32 %v125, %v131
  %v140 = vadd.f32 %v126, %v131
  %v141 = vpack.c.bf16 %v134, %v133
  %v142 = vpack.c.bf16 %v136, %v135
  %v143 = vpack.c.bf16 %v138, %v137
  %v144 = vpack.c.bf16 %v140, %v139
  %v149 = vunpack.c.l.b16 %v141
  %v150 = vunpack.c.h.b16 %v141
  %v151 = vunpack.c.l.b16 %v142
  %v152 = vunpack.c.h.b16 %v142
  %v153 = vunpack.c.l.b16 %v143
  %v154 = vunpack.c.h.b16 %v143
  %v155 = vunpack.c.l.b16 %v144
  %v156 = vunpack.c.h.b16 %v144
  %v157 = vpack.c.b16 %v149, %v149
  %v158 = vpack.c.b16 %v150, %v150
  %v159 = vpack.c.b16 %v151, %v151
  %v160 = vpack.c.b16 %v152, %v152
  %v161 = vpack.c.b16 %v153, %v153
  %v162 = vpack.c.b16 %v154, %v154
  %v163 = vpack.c.b16 %v155, %v155
  %v164 = vpack.c.b16 %v156, %v156
  %173 = vst [vmem:[%s3] sm:$0xf] %v157
  %174 = vst [vmem:[%s3 + $0x4] sm:$0xf] %v158
  %175 = vst [vmem:[%s3 + $0x8] sm:$0xf] %v159
  %176 = vst [vmem:[%s3 + $0xc] sm:$0xf] %v160
  %177 = vst [vmem:[%s3 + $0x10] sm:$0xf] %v161
  %178 = vst [vmem:[%s3 + $0x14] sm:$0xf] %v162
  %179 = vst [vmem:[%s3 + $0x18] sm:$0xf] %v163
  %180 = vst [vmem:[%s3 + $0x1c] sm:$0xf] %v164
  // Predicated region
  $region14: #{_lambda_.7} parent=0 // pred_check
    _
  $region15: #{_lambda_.7} parent=0 // pred_check_branch
    %182 = sbr.rel (0) target = $region17
  $region16: #{_lambda_.7} parent=0 // pred_region
    _
  $region17: #{_lambda_.7} parent=0 // pred_fallthru
    _
  // Predicated region
  $region18: #{_lambda_.7} parent=0 // pred_check
    _
  $region19: #{_lambda_.7} parent=0 // pred_check_branch
    %184 = sbr.rel (0) target = $region21
  $region20: #{_lambda_.7} parent=0 // pred_region
    _
  $region21: #{_lambda_.7} parent=0 // pred_fallthru
    _

// kernel: _lambda_.9
$region0: #{_lambda_.9}
  #allocation0 [shape = 'u32[]', space=smem, size = 0x4, offset = 0x4, fixed_abs, tag = 'smem constant byte address 0x4 - core index']
  #allocation1 [shape = 'u32[144,128]{1,0:T(1,128)}', space=vmem, size = 0x12000, scoped, tag = 'internal scratch']
  %s0 = inlined_call_operand.vmem [shape: bf16[4,16,384], index: 0, kind: input, shape index: {}, may-alias: {0,1,2}]
  %s1 = inlined_call_operand.vmem [shape: bf16[4,16,384], index: 1, kind: input, shape index: {}, may-alias: {0,1,2}]
  %s2 = inlined_call_operand.vmem [shape: bf16[4,16,384], index: 2, kind: input, shape index: {}, may-alias: {0,1,2}]
  %s3 = inlined_call_operand.vmem [shape: f32[4,1,16], index: 3, kind: input, shape index: {}]
  %s4 = inlined_call_operand.vmem [shape: bf16[4,16,128], index: 4, kind: output, shape index: {}]
  %s5 = sld [smem:[#allocation0]]
  $region172: #{_lambda_.9} parent=0
    _
  %s7 = ssub.s32 1, %s5
  %s8 = scalar_select 0, %s7, %s5
  $region1: #{_lambda_.9} parent=0
    #allocation2 [shape = 'u8[8192]{0}', space=vmem, size = 0x2000, scoped, tag = 'input window, operand 0']
    #allocation3 [shape = 'u8[8192]{0}', space=vmem, size = 0x2000, scoped, tag = 'input window, operand 1']
    #allocation4 [shape = 'u8[8192]{0}', space=vmem, size = 0x2000, scoped, tag = 'input window, operand 2']
    loop: start=0, step=1, limit=6
    $region2: #{_lambda_.9} parent=1 // loop_pre_header
      _
    $region3: #{_lambda_.9} parent=1 // loop_header
      %s10 = sphi 0, %s14
      %p11 = scmp.ge.s32.totalorder %s10, 6
      %s17 = sphi 0, %s29
      %s18 = sphi 0, %s25
      %s19 = sphi 0, %s17
      %s20 = sphi 0, %s18
      %s21 = sphi 0, %s19
      %s22 = sphi 0, %s20
      %s34 = sphi 0, %s36
      %s37 = sphi 0, %s34
      %s38 = sphi 0, %s37
      %s54 = sphi 0, %s38
      %s64 = sphi 0, %s66
      %s67 = sphi 0, %s64
      %s68 = sphi 0, %s67
      %s84 = sphi 0, %s68
      %s94 = sphi 0, %s96
      %s97 = sphi 0, %s94
      %s98 = sphi 0, %s97
      %s114 = sphi 0, %s98
      %s120 = sphi 0, %s122
      %s123 = sphi 0, %s120
      %s124 = sphi 0, %s123
      %s140 = sphi 0, %s124
      %s148 = sphi 0, %s150
      %s151 = sphi 0, %s148
      %s152 = sphi 0, %s151
      %s168 = sphi 0, %s152
    $region4: #{_lambda_.9} parent=1 // loop_header_branch
      %13 = sbr.rel (%p11) target = $region8
    $region5: #{_lambda_.9} parent=1 // loop_body
      %s15 = ssub.s32 %s10, 1
      %s16 = ssub.s32 %s10, 2
      %s23 = sadd.s32 1, %s18
      %p24 = scmp.ge.s32.totalorder %s23, 1
      %s25 = scalar_select %p24, 0, %s23
      %s26 = sadd.s32 1, %s17
      %s27 = scalar_select %p24, %s26, %s17
      %p28 = scmp.ge.s32.totalorder %s27, 4
      %s29 = scalar_select %p28, 0, %s27
      %s30 = ssub.s32 %s17, %s29
      %s31 = ssub.s32 %s18, %s25
      %s32 = sor.u32 %s30, %s31
      %p33 = scmp.eq.s32.totalorder %s32, 0
      %s35 = sadd.s32 %s34, 1
      %s36 = scalar_select %p33, %s34, %s35
      %p39 = pneg %p33
      %p40 = scmp.eq.s32.totalorder %s10, 3
      %p41 = por %p39, %p40
      %p42 = scmp.ne.s32.totalorder %s34, %s37
      %p43 = scmp.eq.s32.totalorder %s10, 0
      %p44 = por %p42, %p43
      %p45 = scmp.ne.s32.totalorder %s34, %s37
      %p46 = scmp.eq.s32.totalorder %s15, 3
      %p47 = por %p45, %p46
      %p48 = scmp.ne.s32.totalorder %s37, %s38
      %p49 = scmp.eq.s32.totalorder %s15, 0
      %p50 = por %p48, %p49
      %p51 = scmp.ne.s32.totalorder %s37, %s38
      %p52 = scmp.eq.s32.totalorder %s16, 3
      %p53 = por %p51, %p52
      %p55 = scmp.ne.s32.totalorder %s38, %s54
      %p56 = scmp.eq.s32.totalorder %s16, 0
      %p57 = por %p55, %p56
      %s58 = sadd.s32 %s18, 1
      %s59 = sadd.s32 %s25, 1
      %s60 = ssub.s32 %s17, %s29
      %s61 = ssub.s32 %s58, %s59
      %s62 = sor.u32 %s60, %s61
      %p63 = scmp.eq.s32.totalorder %s62, 0
      %s65 = sadd.s32 %s64, 1
      %s66 = scalar_select %p63, %s64, %s65
      %p69 = pneg %p63
      %p70 = scmp.eq.s32.totalorder %s10, 3
      %p71 = por %p69, %p70
      %p72 = scmp.ne.s32.totalorder %s64, %s67
      %p73 = scmp.eq.s32.totalorder %s10, 0
      %p74 = por %p72, %p73
      %p75 = scmp.ne.s32.totalorder %s64, %s67
      %p76 = scmp.eq.s32.totalorder %s15, 3
      %p77 = por %p75, %p76
      %p78 = scmp.ne.s32.totalorder %s67, %s68
      %p79 = scmp.eq.s32.totalorder %s15, 0
      %p80 = por %p78, %p79
      %p81 = scmp.ne.s32.totalorder %s67, %s68
      %p82 = scmp.eq.s32.totalorder %s16, 3
      %p83 = por %p81, %p82
      %p85 = scmp.ne.s32.totalorder %s68, %s84
      %p86 = scmp.eq.s32.totalorder %s16, 0
      %p87 = por %p85, %p86
      %s88 = sadd.s32 %s18, 2
      %s89 = sadd.s32 %s25, 2
      %s90 = ssub.s32 %s17, %s29
      %s91 = ssub.s32 %s88, %s89
      %s92 = sor.u32 %s90, %s91
      %p93 = scmp.eq.s32.totalorder %s92, 0
      %s95 = sadd.s32 %s94, 1
      %s96 = scalar_select %p93, %s94, %s95
      %p99 = pneg %p93
      %p100 = scmp.eq.s32.totalorder %s10, 3
      %p101 = por %p99, %p100
      %p102 = scmp.ne.s32.totalorder %s94, %s97
      %p103 = scmp.eq.s32.totalorder %s10, 0
      %p104 = por %p102, %p103
      %p105 = scmp.ne.s32.totalorder %s94, %s97
      %p106 = scmp.eq.s32.totalorder %s15, 3
      %p107 = por %p105, %p106
      %p108 = scmp.ne.s32.totalorder %s97, %s98
      %p109 = scmp.eq.s32.totalorder %s15, 0
      %p110 = por %p108, %p109
      %p111 = scmp.ne.s32.totalorder %s97, %s98
      %p112 = scmp.eq.s32.totalorder %s16, 3
      %p113 = por %p111, %p112
      %p115 = scmp.ne.s32.totalorder %s98, %s114
      %p116 = scmp.eq.s32.totalorder %s16, 0
      %p117 = por %p115, %p116
      %s118 = ssub.s32 %s17, %s29
      %p119 = scmp.eq.s32.totalorder %s118, 0
      %s121 = sadd.s32 %s120, 1
      %s122 = scalar_select %p119, %s120, %s121
      %p125 = pneg %p119
      %p126 = scmp.eq.s32.totalorder %s10, 3
      %p127 = por %p125, %p126
      %p128 = scmp.ne.s32.totalorder %s120, %s123
      %p129 = scmp.eq.s32.totalorder %s10, 0
      %p130 = por %p128, %p129
      %p131 = scmp.ne.s32.totalorder %s120, %s123
      %p132 = scmp.eq.s32.totalorder %s15, 3
      %p133 = por %p131, %p132
      %p134 = scmp.ne.s32.totalorder %s123, %s124
      %p135 = scmp.eq.s32.totalorder %s15, 0
      %p136 = por %p134, %p135
      %p137 = scmp.ne.s32.totalorder %s123, %s124
      %p138 = scmp.eq.s32.totalorder %s16, 3
      %p139 = por %p137, %p138
      %p141 = scmp.ne.s32.totalorder %s124, %s140
      %p142 = scmp.eq.s32.totalorder %s16, 0
      %p143 = por %p141, %p142
      %s144 = ssub.s32 %s17, %s29
      %s145 = ssub.s32 %s18, %s25
      %s146 = sor.u32 %s144, %s145
      %p147 = scmp.eq.s32.totalorder %s146, 0
      %s149 = sadd.s32 %s148, 1
      %s150 = scalar_select %p147, %s148, %s149
      %p153 = pneg %p147
      %p154 = scmp.eq.s32.totalorder %s10, 3
      %p155 = por %p153, %p154
      %p156 = scmp.ne.s32.totalorder %s148, %s151
      %p157 = scmp.eq.s32.totalorder %s10, 0
      %p158 = por %p156, %p157
      %p159 = scmp.ne.s32.totalorder %s148, %s151
      %p160 = scmp.eq.s32.totalorder %s15, 3
      %p161 = por %p159, %p160
      %p162 = scmp.ne.s32.totalorder %s151, %s152
      %p163 = scmp.eq.s32.totalorder %s15, 0
      %p164 = por %p162, %p163
      %p165 = scmp.ne.s32.totalorder %s151, %s152
      %p166 = scmp.eq.s32.totalorder %s16, 3
      %p167 = por %p165, %p166
      %p169 = scmp.ne.s32.totalorder %s152, %s168
      %p170 = scmp.eq.s32.totalorder %s16, 0
      %p171 = por %p169, %p170
      %p172 = scmp.le.s32.totalorder 1, %s10
      %p173 = scmp.lt.s32.totalorder %s10, 5
      %p174 = pnand %p172, %p173
      %p175 = pneg %p174
      // Predicated region
      $region9: #{_lambda_.9} parent=5 // pred_check
        _
      $region10: #{_lambda_.9} parent=5 // pred_check_branch
        %177 = sbr.rel (%p174) target = $region12
      $region11: #{_lambda_.9} parent=5 // pred_region
        %s178 = ssub.s32 %s10, 1
      $region12: #{_lambda_.9} parent=5 // pred_fallthru
        _
      %p179 = scmp.lt.s32.totalorder %s10, 4
      // Predicated region
      $region13: #{_lambda_.9} parent=5 // pred_check
        %p180 = pneg %p179
      $region14: #{_lambda_.9} parent=5 // pred_check_branch
        %182 = sbr.rel (%p180) target = $region16
      $region15: #{_lambda_.9} parent=5 // pred_region
        // Predicated region
        $region17: #{_lambda_.9} parent=15 // pred_check
          %p183 = pneg %p44
        $region18: #{_lambda_.9} parent=15 // pred_check_branch
          %185 = sbr.rel (%p183) target = $region20
        $region19: #{_lambda_.9} parent=15 // pred_region
          %s186 = sand.u32 %s34, 1
          %s187 = sand.u32 %s34, 1
          %s188 = smul.addr %s187, 8
          %s189 = scalar_lea.vmem [#allocation2], %s188
          %s190 = smul.addr %s17, 6
          %s191 = sadd.s32 %s18, %s190
          %s192 = smul.addr %s191, 4
          %s193 = scalar_lea.vmem %s0, %s192
          // Predicated region
          $region21: #{_lambda_.9} parent=19 // pred_check
            _
          $region22: #{_lambda_.9} parent=19 // pred_check_branch
            %195 = sbr.rel (0) target = $region24
          $region23: #{_lambda_.9} parent=19 // pred_region
            // Predicated region
            $region25: #{_lambda_.9} parent=23 // pred_check
              _
            $region26: #{_lambda_.9} parent=23 // pred_check_branch
              %197 = sbr.rel target = $region28
            $region27: #{_lambda_.9} parent=23 // pred_region
              // Predicated region
              $region40: #{_lambda_.9} parent=27 // pred_check
                _
              $region41: #{_lambda_.9} parent=27 // pred_check_branch
                %214 = sbr.rel (0) target = $region43
              $region42: #{_lambda_.9} parent=27 // pred_region
                loop: start=0, step=1, limit=1
                $region44: #{_lambda_.9} parent=42 // loop_pre_header
                  _
                $region45: #{_lambda_.9} parent=42 // loop_header
                  %s216 = sphi 0, %s220
                  %p217 = scmp.ge.s32.totalorder %s216, 1
                  %s221 = sphi %s193, %s193
                  %s222 = sphi %s189, %s189
                $region46: #{_lambda_.9} parent=42 // loop_header_branch
                  %219 = sbr.rel (%p217) target = $region50
                $region47: #{_lambda_.9} parent=42 // loop_body
                  _
                $region48: #{_lambda_.9} parent=42 // loop_footer
                  %s220 = sadd.s32 1, %s216
                $region49: #{_lambda_.9} parent=42 // loop_footer_branch
                  %215 = sbr.rel target = $region45
                $region50: #{_lambda_.9} parent=42 // loop_exit
                  _
                loop: start=0, step=1, limit=1
                $region51: #{_lambda_.9} parent=42 // loop_pre_header
                  _
                $region52: #{_lambda_.9} parent=42 // loop_header
                  %s225 = sphi 0, %s229
                  %p226 = scmp.ge.s32.totalorder %s225, 1
                  %s230 = sphi %s193, %s193
                  %s231 = sphi %s189, %s189
                $region53: #{_lambda_.9} parent=42 // loop_header_branch
                  %228 = sbr.rel (%p226) target = $region57
                $region54: #{_lambda_.9} parent=42 // loop_body
                  %v232 = vld [vmem:[%s230] sm:$0xf]
                  %233 = vst [vmem:[%s231] sm:$0xf] %v232
                  %v234 = vld [vmem:[%s230 + $0xc] sm:$0xf]
                  %235 = vst [vmem:[%s231 + $0x4] sm:$0xf] %v234
                $region55: #{_lambda_.9} parent=42 // loop_footer
                  %s229 = sadd.s32 1, %s225
                $region56: #{_lambda_.9} parent=42 // loop_footer_branch
                  %224 = sbr.rel target = $region52
                $region57: #{_lambda_.9} parent=42 // loop_exit
                  _
              $region43: #{_lambda_.9} parent=27 // pred_fallthru
                _
            $region28: #{_lambda_.9} parent=23 // pred_fallthru
              _
            // Predicated region
            $region29: #{_lambda_.9} parent=23 // pred_check
              _
            $region30: #{_lambda_.9} parent=23 // pred_check_branch
              %199 = sbr.rel (0) target = $region32
            $region31: #{_lambda_.9} parent=23 // pred_region
              loop: start=0, step=1, limit=1
              $region33: #{_lambda_.9} parent=31 // loop_pre_header
                _
              $region34: #{_lambda_.9} parent=31 // loop_header
                %s202 = sphi 0, %s206
                %p203 = scmp.ge.s32.totalorder %s202, 1
                %s207 = sphi %s193, %s193
                %s208 = sphi %s189, %s189
              $region35: #{_lambda_.9} parent=31 // loop_header_branch
                %205 = sbr.rel (%p203) target = $region39
              $region36: #{_lambda_.9} parent=31 // loop_body
                %v209 = vld [vmem:[%s207] sm:$0xf]
                %210 = vst [vmem:[%s208] sm:$0xf] %v209
                %v211 = vld [vmem:[%s207 + $0xc] sm:$0xf]
                %212 = vst [vmem:[%s208 + $0x4] sm:$0xf] %v211
              $region37: #{_lambda_.9} parent=31 // loop_footer
                %s206 = sadd.s32 1, %s202
              $region38: #{_lambda_.9} parent=31 // loop_footer_branch
                %201 = sbr.rel target = $region34
              $region39: #{_lambda_.9} parent=31 // loop_exit
                _
            $region32: #{_lambda_.9} parent=23 // pred_fallthru
              _
          $region24: #{_lambda_.9} parent=19 // pred_fallthru
            _
          %236 = vnop
        $region20: #{_lambda_.9} parent=15 // pred_fallthru
          _
        // Predicated region
        $region58: #{_lambda_.9} parent=15 // pred_check
          %p237 = pneg %p74
        $region59: #{_lambda_.9} parent=15 // pred_check_branch
          %239 = sbr.rel (%p237) target = $region61
        $region60: #{_lambda_.9} parent=15 // pred_region
          %s240 = sand.u32 %s64, 1
          %s241 = sand.u32 %s64, 1
          %s242 = smul.addr %s241, 8
          %s243 = scalar_lea.vmem [#allocation3], %s242
          %s244 = sadd.s32 %s18, 1
          %s245 = smul.addr %s17, 6
          %s246 = sadd.s32 %s244, %s245
          %s247 = smul.addr %s246, 4
          %s248 = scalar_lea.vmem %s1, %s247
          // Predicated region
          $region62: #{_lambda_.9} parent=60 // pred_check
            _
          $region63: #{_lambda_.9} parent=60 // pred_check_branch
            %250 = sbr.rel (0) target = $region65
          $region64: #{_lambda_.9} parent=60 // pred_region
            // Predicated region
            $region66: #{_lambda_.9} parent=64 // pred_check
              _
            $region67: #{_lambda_.9} parent=64 // pred_check_branch
              %252 = sbr.rel target = $region69
            $region68: #{_lambda_.9} parent=64 // pred_region
              // Predicated region
              $region81: #{_lambda_.9} parent=68 // pred_check
                _
              $region82: #{_lambda_.9} parent=68 // pred_check_branch
                %269 = sbr.rel (0) target = $region84
              $region83: #{_lambda_.9} parent=68 // pred_region
                loop: start=0, step=1, limit=1
                $region85: #{_lambda_.9} parent=83 // loop_pre_header
                  _
                $region86: #{_lambda_.9} parent=83 // loop_header
                  %s271 = sphi 0, %s275
                  %p272 = scmp.ge.s32.totalorder %s271, 1
                  %s276 = sphi %s248, %s248
                  %s277 = sphi %s243, %s243
                $region87: #{_lambda_.9} parent=83 // loop_header_branch
                  %274 = sbr.rel (%p272) target = $region91
                $region88: #{_lambda_.9} parent=83 // loop_body
                  _
                $region89: #{_lambda_.9} parent=83 // loop_footer
                  %s275 = sadd.s32 1, %s271
                $region90: #{_lambda_.9} parent=83 // loop_footer_branch
                  %270 = sbr.rel target = $region86
                $region91: #{_lambda_.9} parent=83 // loop_exit
                  _
                loop: start=0, step=1, limit=1
                $region92: #{_lambda_.9} parent=83 // loop_pre_header
                  _
                $region93: #{_lambda_.9} parent=83 // loop_header
                  %s280 = sphi 0, %s284
                  %p281 = scmp.ge.s32.totalorder %s280, 1
                  %s285 = sphi %s248, %s248
                  %s286 = sphi %s243, %s243
                $region94: #{_lambda_.9} parent=83 // loop_header_branch
                  %283 = sbr.rel (%p281) target = $region98
                $region95: #{_lambda_.9} parent=83 // loop_body
                  %v287 = vld [vmem:[%s285] sm:$0xf]
                  %288 = vst [vmem:[%s286] sm:$0xf] %v287
                  %v289 = vld [vmem:[%s285 + $0xc] sm:$0xf]
                  %290 = vst [vmem:[%s286 + $0x4] sm:$0xf] %v289
                $region96: #{_lambda_.9} parent=83 // loop_footer
                  %s284 = sadd.s32 1, %s280
                $region97: #{_lambda_.9} parent=83 // loop_footer_branch
                  %279 = sbr.rel target = $region93
                $region98: #{_lambda_.9} parent=83 // loop_exit
                  _
              $region84: #{_lambda_.9} parent=68 // pred_fallthru
                _
            $region69: #{_lambda_.9} parent=64 // pred_fallthru
              _
            // Predicated region
            $region70: #{_lambda_.9} parent=64 // pred_check
              _
            $region71: #{_lambda_.9} parent=64 // pred_check_branch
              %254 = sbr.rel (0) target = $region73
            $region72: #{_lambda_.9} parent=64 // pred_region
              loop: start=0, step=1, limit=1
              $region74: #{_lambda_.9} parent=72 // loop_pre_header
                _
              $region75: #{_lambda_.9} parent=72 // loop_header
                %s257 = sphi 0, %s261
                %p258 = scmp.ge.s32.totalorder %s257, 1
                %s262 = sphi %s248, %s248
                %s263 = sphi %s243, %s243
              $region76: #{_lambda_.9} parent=72 // loop_header_branch
                %260 = sbr.rel (%p258) target = $region80
              $region77: #{_lambda_.9} parent=72 // loop_body
                %v264 = vld [vmem:[%s262] sm:$0xf]
                %265 = vst [vmem:[%s263] sm:$0xf] %v264
                %v266 = vld [vmem:[%s262 + $0xc] sm:$0xf]
                %267 = vst [vmem:[%s263 + $0x4] sm:$0xf] %v266
              $region78: #{_lambda_.9} parent=72 // loop_footer
                %s261 = sadd.s32 1, %s257
              $region79: #{_lambda_.9} parent=72 // loop_footer_branch
                %256 = sbr.rel target = $region75
              $region80: #{_lambda_.9} parent=72 // loop_exit
                _
            $region73: #{_lambda_.9} parent=64 // pred_fallthru
              _
          $region65: #{_lambda_.9} parent=60 // pred_fallthru
            _
          %291 = vnop
        $region61: #{_lambda_.9} parent=15 // pred_fallthru
          _
        // Predicated region
        $region99: #{_lambda_.9} parent=15 // pred_check
          %p292 = pneg %p104
        $region100: #{_lambda_.9} parent=15 // pred_check_branch
          %294 = sbr.rel (%p292) target = $region102
        $region101: #{_lambda_.9} parent=15 // pred_region
          %s295 = sand.u32 %s94, 1
          %s296 = sand.u32 %s94, 1
          %s297 = smul.addr %s296, 8
          %s298 = scalar_lea.vmem [#allocation4], %s297
          %s299 = sadd.s32 %s18, 2
          %s300 = smul.addr %s17, 6
          %s301 = sadd.s32 %s299, %s300
          %s302 = smul.addr %s301, 4
          %s303 = scalar_lea.vmem %s2, %s302
          // Predicated region
          $region103: #{_lambda_.9} parent=101 // pred_check
            _
          $region104: #{_lambda_.9} parent=101 // pred_check_branch
            %305 = sbr.rel (0) target = $region106
          $region105: #{_lambda_.9} parent=101 // pred_region
            // Predicated region
            $region107: #{_lambda_.9} parent=105 // pred_check
              _
            $region108: #{_lambda_.9} parent=105 // pred_check_branch
              %307 = sbr.rel target = $region110
            $region109: #{_lambda_.9} parent=105 // pred_region
              // Predicated region
              $region122: #{_lambda_.9} parent=109 // pred_check
                _
              $region123: #{_lambda_.9} parent=109 // pred_check_branch
                %324 = sbr.rel (0) target = $region125
              $region124: #{_lambda_.9} parent=109 // pred_region
                loop: start=0, step=1, limit=1
                $region126: #{_lambda_.9} parent=124 // loop_pre_header
                  _
                $region127: #{_lambda_.9} parent=124 // loop_header
                  %s326 = sphi 0, %s330
                  %p327 = scmp.ge.s32.totalorder %s326, 1
                  %s331 = sphi %s303, %s303
                  %s332 = sphi %s298, %s298
                $region128: #{_lambda_.9} parent=124 // loop_header_branch
                  %329 = sbr.rel (%p327) target = $region132
                $region129: #{_lambda_.9} parent=124 // loop_body
                  _
                $region130: #{_lambda_.9} parent=124 // loop_footer
                  %s330 = sadd.s32 1, %s326
                $region131: #{_lambda_.9} parent=124 // loop_footer_branch
                  %325 = sbr.rel target = $region127
                $region132: #{_lambda_.9} parent=124 // loop_exit
                  _
                loop: start=0, step=1, limit=1
                $region133: #{_lambda_.9} parent=124 // loop_pre_header
                  _
                $region134: #{_lambda_.9} parent=124 // loop_header
                  %s335 = sphi 0, %s339
                  %p336 = scmp.ge.s32.totalorder %s335, 1
                  %s340 = sphi %s303, %s303
                  %s341 = sphi %s298, %s298
                $region135: #{_lambda_.9} parent=124 // loop_header_branch
                  %338 = sbr.rel (%p336) target = $region139
                $region136: #{_lambda_.9} parent=124 // loop_body
                  %v342 = vld [vmem:[%s340] sm:$0xf]
                  %343 = vst [vmem:[%s341] sm:$0xf] %v342
                  %v344 = vld [vmem:[%s340 + $0xc] sm:$0xf]
                  %345 = vst [vmem:[%s341 + $0x4] sm:$0xf] %v344
                $region137: #{_lambda_.9} parent=124 // loop_footer
                  %s339 = sadd.s32 1, %s335
                $region138: #{_lambda_.9} parent=124 // loop_footer_branch
                  %334 = sbr.rel target = $region134
                $region139: #{_lambda_.9} parent=124 // loop_exit
                  _
              $region125: #{_lambda_.9} parent=109 // pred_fallthru
                _
            $region110: #{_lambda_.9} parent=105 // pred_fallthru
              _
            // Predicated region
            $region111: #{_lambda_.9} parent=105 // pred_check
              _
            $region112: #{_lambda_.9} parent=105 // pred_check_branch
              %309 = sbr.rel (0) target = $region114
            $region113: #{_lambda_.9} parent=105 // pred_region
              loop: start=0, step=1, limit=1
              $region115: #{_lambda_.9} parent=113 // loop_pre_header
                _
              $region116: #{_lambda_.9} parent=113 // loop_header
                %s312 = sphi 0, %s316
                %p313 = scmp.ge.s32.totalorder %s312, 1
                %s317 = sphi %s303, %s303
                %s318 = sphi %s298, %s298
              $region117: #{_lambda_.9} parent=113 // loop_header_branch
                %315 = sbr.rel (%p313) target = $region121
              $region118: #{_lambda_.9} parent=113 // loop_body
                %v319 = vld [vmem:[%s317] sm:$0xf]
                %320 = vst [vmem:[%s318] sm:$0xf] %v319
                %v321 = vld [vmem:[%s317 + $0xc] sm:$0xf]
                %322 = vst [vmem:[%s318 + $0x4] sm:$0xf] %v321
              $region119: #{_lambda_.9} parent=113 // loop_footer
                %s316 = sadd.s32 1, %s312
              $region120: #{_lambda_.9} parent=113 // loop_footer_branch
                %311 = sbr.rel target = $region116
              $region121: #{_lambda_.9} parent=113 // loop_exit
                _
            $region114: #{_lambda_.9} parent=105 // pred_fallthru
              _
          $region106: #{_lambda_.9} parent=101 // pred_fallthru
            _
          %346 = vnop
        $region102: #{_lambda_.9} parent=15 // pred_fallthru
          _
        // Predicated region
        $region140: #{_lambda_.9} parent=15 // pred_check
          %p347 = pneg %p130
        $region141: #{_lambda_.9} parent=15 // pred_check_branch
          %349 = sbr.rel (%p347) target = $region143
        $region142: #{_lambda_.9} parent=15 // pred_region
          %p350 = scmp.lt.s32.totalorder %s17, 3
          %s351 = scalar_select %p350, %s17, 3
          %s352 = scalar_lea.vmem %s3, %s351
        $region143: #{_lambda_.9} parent=15 // pred_fallthru
          _
      $region16: #{_lambda_.9} parent=5 // pred_fallthru
        _
      %p353 = scmp.le.s32.totalorder 1, %s10
      %p354 = scmp.lt.s32.totalorder %s10, 5
      %p355 = pnand %p353, %p354
      %p356 = pneg %p355
      // Predicated region
      $region144: #{_lambda_.9} parent=5 // pred_check
        _
      $region145: #{_lambda_.9} parent=5 // pred_check_branch
        %358 = sbr.rel (%p355) target = $region147
      $region146: #{_lambda_.9} parent=5 // pred_region
        %s359 = ssub.s32 %s10, 1
        %s360 = sand.u32 %s37, 1
        %s361 = sand.u32 %s37, 1
        %s362 = smul.addr %s361, 8
        %s363 = scalar_lea.vmem [#allocation2], %s362
        // Predicated region
        $region148: #{_lambda_.9} parent=146 // pred_check
          %p364 = pneg %p50
        $region149: #{_lambda_.9} parent=146 // pred_check_branch
          %366 = sbr.rel (%p364) target = $region151
        $region150: #{_lambda_.9} parent=146 // pred_region
          _
        $region151: #{_lambda_.9} parent=146 // pred_fallthru
          _
        %s367 = sand.u32 %s67, 1
        %s368 = sand.u32 %s67, 1
        %s369 = smul.addr %s368, 8
        %s370 = scalar_lea.vmem [#allocation3], %s369
        // Predicated region
        $region152: #{_lambda_.9} parent=146 // pred_check
          %p371 = pneg %p80
        $region153: #{_lambda_.9} parent=146 // pred_check_branch
          %373 = sbr.rel (%p371) target = $region155
        $region154: #{_lambda_.9} parent=146 // pred_region
          _
        $region155: #{_lambda_.9} parent=146 // pred_fallthru
          _
        %s374 = sand.u32 %s97, 1
        %s375 = sand.u32 %s97, 1
        %s376 = smul.addr %s375, 8
        %s377 = scalar_lea.vmem [#allocation4], %s376
        // Predicated region
        $region156: #{_lambda_.9} parent=146 // pred_check
          %p378 = pneg %p110
        $region157: #{_lambda_.9} parent=146 // pred_check_branch
          %380 = sbr.rel (%p378) target = $region159
        $region158: #{_lambda_.9} parent=146 // pred_region
          _
        $region159: #{_lambda_.9} parent=146 // pred_fallthru
          _
        %s381 = sand.u32 %s37, 1
        %s382 = sand.u32 %s37, 1
        %s383 = smul.addr %s382, 8
        %s384 = scalar_lea.vmem [#allocation2], %s383
        %p385 = pneg %p50
        %p386 = pneg %p47
        %s387 = sand.u32 %s67, 1
        %s388 = sand.u32 %s67, 1
        %s389 = smul.addr %s388, 8
        %s390 = scalar_lea.vmem [#allocation3], %s389
        %p391 = pneg %p80
        %p392 = pneg %p77
        %s393 = sand.u32 %s97, 1
        %s394 = sand.u32 %s97, 1
        %s395 = smul.addr %s394, 8
        %s396 = scalar_lea.vmem [#allocation4], %s395
        %p397 = pneg %p110
        %p398 = pneg %p107
        %p399 = scmp.lt.s32.totalorder %s19, 3
        %s400 = scalar_select %p399, %s19, 3
        %s401 = scalar_lea.vmem %s3, %s400
        %p402 = pneg %p136
        %p403 = pneg %p133
        %p404 = pneg %p164
        %p405 = pneg %p161
        %p406 = scmp.lt.s32.totalorder %s19, 3
        %s407 = scalar_select %p406, %s19, 3
        %p408 = scmp.lt.s32.totalorder %s20, 0
        %s409 = scalar_select %p408, %s20, 0
        %s410 = smul.addr %s407, 2
        %s411 = sadd.s32 %s409, %s410
        %s412 = smul.addr %s411, 4
        %s413 = scalar_lea.vmem %s4, %s412
        %s414 = sadd.s32 %s20, 1
        %s415 = sadd.s32 %s20, 2
        %p416 = scmp.lt.s32.totalorder %s19, 3
        %s417 = scalar_select %p416, %s19, 3
        %s418 = scalar_lea.vmem %s3, %s417
        %p419 = scmp.lt.s32.totalorder %s19, 3
        %s420 = scalar_select %p419, %s19, 3
        %p421 = scmp.lt.s32.totalorder %s20, 0
        %s422 = scalar_select %p421, %s20, 0
        %s423 = smul.addr %s420, 2
        %s424 = sadd.s32 %s422, %s423
        %s425 = smul.addr %s424, 4
        %s426 = scalar_lea.vmem %s4, %s425
        %v428 = vld [vmem:[%s418] sm:$0x1]
        %v429 = vld [vmem:[%s363] sm:$0xf]
        %v430 = vld [vmem:[%s363 + $0x4] sm:$0xf]
        %v431 = vld [vmem:[%s370] sm:$0xf]
        %v432 = vld [vmem:[%s370 + $0x4] sm:$0xf]
        %v433 = vld [vmem:[%s377] sm:$0xf]
        %v434 = vld [vmem:[%s377 + $0x4] sm:$0xf]
        %v437 = vunpack.c.l.b16 %v429
        %v438 = vunpack.c.l.b16 %v430
        %v439 = vpack.c.b16 %v438, %v437
        %v442 = vunpack.c.l.b16 %v431
        %v443 = vunpack.c.l.b16 %v432
        %v444 = vpack.c.b16 %v443, %v442
        %vm445 = vcmask 523264
        %v447 = vsel %vm445, %v439, 0
        %v450 = vsel %vm445, %v444, 0
        %452 = vmatprep.subr.bf16.mxu0 0
        %453 = vmatpush1.bf16.xpose.msra.mxu0 %v450
        %454 = vmatprep.subr.bf16.mxu0 0
        %455 = vmatpush1.bf16.xpose.msra.mxu0 0
        %456 = vmatprep.subr.bf16.mxu0 0
        %457 = vmatpush1.bf16.xpose.msra.mxu0 0
        %458 = vmatprep.subr.bf16.mxu0 0
        %459 = vmatpush1.bf16.xpose.msra.mxu0 0
        %460 = vmatprep.subr.bf16.mxu0 0
        %461 = vmatpush1.bf16.xpose.msra.mxu0 0
        %462 = vmatprep.subr.bf16.mxu0 0
        %463 = vmatpush1.bf16.xpose.msra.mxu0 0
        %464 = vmatprep.subr.bf16.mxu0 0
        %465 = vmatpush1.bf16.xpose.msra.mxu0 0
        %466 = vmatprep.subr.bf16.mxu0 0
        %467 = vmatpush1.bf16.xpose.msra.mxu0 0
        %468 = vmatprep.subr.bf16.mxu0 0
        %469 = vmatpush1.bf16.xpose.msra.mxu0 0
        %470 = vmatprep.subr.bf16.mxu0 0
        %471 = vmatpush1.bf16.xpose.msra.mxu0 0
        %472 = vmatprep.subr.bf16.mxu0 0
        %473 = vmatpush1.bf16.xpose.msra.mxu0 0
        %474 = vmatprep.subr.bf16.mxu0 0
        %475 = vmatpush1.bf16.xpose.msra.mxu0 0
        %476 = vmatprep.subr.bf16.mxu0 0
        %477 = vmatpush1.bf16.xpose.msra.mxu0 0
        %478 = vmatprep.subr.bf16.mxu0 0
        %479 = vmatpush1.bf16.xpose.msra.mxu0 0
        %480 = vmatprep.subr.bf16.mxu0 0
        %481 = vmatpush1.bf16.xpose.msra.mxu0 0
        %482 = vmatprep.subr.bf16.mxu0 0
        %483 = vmatpush1.bf16.xpose.msra.mxu0 0
        %484 = vmatprep.mubr.bf16.mxu0 0
        %485 = vmatmul.mubr.bf16.gmra.mrb[0].mxu0 %v447
        %v486 = vpop.f32.mrb[0].mxu0
        %v487 = vadd.f32 0.0, %v486
        %v488 = vpop.f32.mrb[0].mxu0
        %v489 = vpop.f32.mrb[0].mxu0
        %v490 = vadd.f32 0.0, %v489
        %v491 = vpop.f32.mrb[0].mxu0
        %492 = vdwg.mxu0
        %v493 = vmul.f32 %v487, 0.125
        %v494 = vmul.f32 %v490, 0.125
        %v496 = vlaneseq
        %v497 = vshrl.u32 %v496, 7
        %v498 = vsub.s32 0, %v497
        %v499 = vrot.slane %v428, %v498
        %v501 = vadd.f32 %v493, %v499
        %v502 = vadd.f32 %v494, %v499
        %vm503 = vcmask 130048
        %v504 = vsel %vm503, %v501, -inf
        %505 = vmax.xlane.f32.xlu0 %v504
        %v506 = vpop.xlane.xlu0 %505
        %v507 = vsel %vm503, %v502, -inf
        %508 = vmax.xlane.f32.xlu0 %v507
        %v509 = vpop.xlane.xlu0 %508
        %v510 = vsub.f32 %v501, %v506
        %v511 = vsub.f32 %v502, %v509
        %v512 = vmul.f32 %v510, 1.442695
        %v513 = vpow.pop %v512
        %v514 = vmul.f32 %v511, 1.442695
        %v515 = vpow.pop %v514
        %v516 = vsel %vm503, %v513, 0.0
        %517 = vadd.xlane.f32.xlu0 %v516
        %v518 = vpop.xlane.xlu0 %517
        %v519 = vsel %vm503, %v515, 0.0
        %520 = vadd.xlane.f32.xlu0 %v519
        %v521 = vpop.xlane.xlu0 %520
        %v522 = vrcp.pop %v518
        %v523 = vmul.f32 1.0, %v522
        %v524 = vrcp.pop %v521
        %v525 = vmul.f32 1.0, %v524
        %v526 = vmul.f32 %v513, %v523
        %v527 = vmul.f32 %v515, %v525
        %v528 = vpack.c.bf16 %v527, %v526
        %v531 = vunpack.c.l.b16 %v433
        %v532 = vunpack.c.l.b16 %v434
        %v533 = vpack.c.b16 %v532, %v531
        %v536 = vsel %vm503, %v528, 0
        %538 = vmatprep.subr.bf16.mxu0 0
        %539 = vmatpush1.bf16.msra.mxu0 %v533
        %540 = vmatprep.subr.bf16.mxu0 0
        %541 = vmatpush1.bf16.msra.mxu0 0
        %542 = vmatprep.subr.bf16.mxu0 0
        %543 = vmatpush1.bf16.msra.mxu0 0
        %544 = vmatprep.subr.bf16.mxu0 0
        %545 = vmatpush1.bf16.msra.mxu0 0
        %546 = vmatprep.subr.bf16.mxu0 0
        %547 = vmatpush1.bf16.msra.mxu0 0
        %548 = vmatprep.subr.bf16.mxu0 0
        %549 = vmatpush1.bf16.msra.mxu0 0
        %550 = vmatprep.subr.bf16.mxu0 0
        %551 = vmatpush1.bf16.msra.mxu0 0
        %552 = vmatprep.subr.bf16.mxu0 0
        %553 = vmatpush1.bf16.msra.mxu0 0
        %554 = vmatprep.subr.bf16.mxu0 0
        %555 = vmatpush1.bf16.msra.mxu0 0
        %556 = vmatprep.subr.bf16.mxu0 0
        %557 = vmatpush1.bf16.msra.mxu0 0
        %558 = vmatprep.subr.bf16.mxu0 0
        %559 = vmatpush1.bf16.msra.mxu0 0
        %560 = vmatprep.subr.bf16.mxu0 0
        %561 = vmatpush1.bf16.msra.mxu0 0
        %562 = vmatprep.subr.bf16.mxu0 0
        %563 = vmatpush1.bf16.msra.mxu0 0
        %564 = vmatprep.subr.bf16.mxu0 0
        %565 = vmatpush1.bf16.msra.mxu0 0
        %566 = vmatprep.subr.bf16.mxu0 0
        %567 = vmatpush1.bf16.msra.mxu0 0
        %568 = vmatprep.subr.bf16.mxu0 0
        %569 = vmatpush1.bf16.msra.mxu0 0
        %570 = vmatprep.mubr.bf16.mxu0 0
        %571 = vmatmul.mubr.bf16.gmra.mrb[0].mxu0 %v536
        %v572 = vpop.f32.mrb[0].mxu0
        %v573 = vadd.f32 0.0, %v572
        %v574 = vpop.f32.mrb[0].mxu0
        %v575 = vpop.f32.mrb[0].mxu0
        %v576 = vadd.f32 0.0, %v575
        %v577 = vpop.f32.mrb[0].mxu0
        %578 = vdwg.mxu0
        %579 = vrot.lane.b32.xlu0 %v439, 64
        %v580 = vpop.permute.xlu0 %579
        %581 = vrot.lane.b32.xlu0 %v444, 64
        %v582 = vpop.permute.xlu0 %581
        %v584 = vsel %vm445, %v580, 0
        %v587 = vsel %vm445, %v582, 0
        %589 = vmatprep.subr.bf16.mxu0 0
        %590 = vmatpush1.bf16.xpose.msra.mxu0 %v587
        %591 = vmatprep.subr.bf16.mxu0 0
        %592 = vmatpush1.bf16.xpose.msra.mxu0 0
        %593 = vmatprep.subr.bf16.mxu0 0
        %594 = vmatpush1.bf16.xpose.msra.mxu0 0
        %595 = vmatprep.subr.bf16.mxu0 0
        %596 = vmatpush1.bf16.xpose.msra.mxu0 0
        %597 = vmatprep.subr.bf16.mxu0 0
        %598 = vmatpush1.bf16.xpose.msra.mxu0 0
        %599 = vmatprep.subr.bf16.mxu0 0
        %600 = vmatpush1.bf16.xpose.msra.mxu0 0
        %601 = vmatprep.subr.bf16.mxu0 0
        %602 = vmatpush1.bf16.xpose.msra.mxu0 0
        %603 = vmatprep.subr.bf16.mxu0 0
        %604 = vmatpush1.bf16.xpose.msra.mxu0 0
        %605 = vmatprep.subr.bf16.mxu0 0
        %606 = vmatpush1.bf16.xpose.msra.mxu0 0
        %607 = vmatprep.subr.bf16.mxu0 0
        %608 = vmatpush1.bf16.xpose.msra.mxu0 0
        %609 = vmatprep.subr.bf16.mxu0 0
        %610 = vmatpush1.bf16.xpose.msra.mxu0 0
        %611 = vmatprep.subr.bf16.mxu0 0
        %612 = vmatpush1.bf16.xpose.msra.mxu0 0
        %613 = vmatprep.subr.bf16.mxu0 0
        %614 = vmatpush1.bf16.xpose.msra.mxu0 0
        %615 = vmatprep.subr.bf16.mxu0 0
        %616 = vmatpush1.bf16.xpose.msra.mxu0 0
        %617 = vmatprep.subr.bf16.mxu0 0
        %618 = vmatpush1.bf16.xpose.msra.mxu0 0
        %619 = vmatprep.subr.bf16.mxu0 0
        %620 = vmatpush1.bf16.xpose.msra.mxu0 0
        %621 = vmatprep.mubr.bf16.mxu0 0
        %622 = vmatmul.mubr.bf16.gmra.mrb[0].mxu0 %v584
        %v623 = vpop.f32.mrb[0].mxu0
        %v624 = vadd.f32 0.0, %v623
        %v625 = vpop.f32.mrb[0].mxu0
        %v626 = vpop.f32.mrb[0].mxu0
        %v627 = vadd.f32 0.0, %v626
        %v628 = vpop.f32.mrb[0].mxu0
        %629 = vdwg.mxu0
        %v630 = vmul.f32 %v624, 0.125
        %v631 = vmul.f32 %v627, 0.125
        %v632 = vadd.f32 %v630, %v499
        %v633 = vadd.f32 %v631, %v499
        %v634 = vsel %vm503, %v632, -inf
        %635 = vmax.xlane.f32.xlu0 %v634
        %v636 = vpop.xlane.xlu0 %635
        %v637 = vsel %vm503, %v633, -inf
        %638 = vmax.xlane.f32.xlu0 %v637
        %v639 = vpop.xlane.xlu0 %638
        %v640 = vsub.f32 %v632, %v636
        %v641 = vsub.f32 %v633, %v639
        %v642 = vmul.f32 %v640, 1.442695
        %v643 = vpow.pop %v642
        %v644 = vmul.f32 %v641, 1.442695
        %v645 = vpow.pop %v644
        %v646 = vsel %vm503, %v643, 0.0
        %647 = vadd.xlane.f32.xlu0 %v646
        %v648 = vpop.xlane.xlu0 %647
        %v649 = vsel %vm503, %v645, 0.0
        %650 = vadd.xlane.f32.xlu0 %v649
        %v651 = vpop.xlane.xlu0 %650
        %v652 = vrcp.pop %v648
        %v653 = vmul.f32 1.0, %v652
        %v654 = vrcp.pop %v651
        %v655 = vmul.f32 1.0, %v654
        %v656 = vmul.f32 %v643, %v653
        %v657 = vmul.f32 %v645, %v655
        %v658 = vpack.c.bf16 %v657, %v656
        %659 = vrot.lane.b32.xlu0 %v533, 64
        %v660 = vpop.permute.xlu0 %659
        %v663 = vsel %vm503, %v658, 0
        %665 = vmatprep.subr.bf16.mxu0 0
        %666 = vmatpush1.bf16.msra.mxu0 %v660
        %667 = vmatprep.subr.bf16.mxu0 0
        %668 = vmatpush1.bf16.msra.mxu0 0
        %669 = vmatprep.subr.bf16.mxu0 0
        %670 = vmatpush1.bf16.msra.mxu0 0
        %671 = vmatprep.subr.bf16.mxu0 0
        %672 = vmatpush1.bf16.msra.mxu0 0
        %673 = vmatprep.subr.bf16.mxu0 0
        %674 = vmatpush1.bf16.msra.mxu0 0
        %675 = vmatprep.subr.bf16.mxu0 0
        %676 = vmatpush1.bf16.msra.mxu0 0
        %677 = vmatprep.subr.bf16.mxu0 0
        %678 = vmatpush1.bf16.msra.mxu0 0
        %679 = vmatprep.subr.bf16.mxu0 0
        %680 = vmatpush1.bf16.msra.mxu0 0
        %681 = vmatprep.subr.bf16.mxu0 0
        %682 = vmatpush1.bf16.msra.mxu0 0
        %683 = vmatprep.subr.bf16.mxu0 0
        %684 = vmatpush1.bf16.msra.mxu0 0
        %685 = vmatprep.subr.bf16.mxu0 0
        %686 = vmatpush1.bf16.msra.mxu0 0
        %687 = vmatprep.subr.bf16.mxu0 0
        %688 = vmatpush1.bf16.msra.mxu0 0
        %689 = vmatprep.subr.bf16.mxu0 0
        %690 = vmatpush1.bf16.msra.mxu0 0
        %691 = vmatprep.subr.bf16.mxu0 0
        %692 = vmatpush1.bf16.msra.mxu0 0
        %693 = vmatprep.subr.bf16.mxu0 0
        %694 = vmatpush1.bf16.msra.mxu0 0
        %695 = vmatprep.subr.bf16.mxu0 0
        %696 = vmatpush1.bf16.msra.mxu0 0
        %697 = vmatprep.mubr.bf16.mxu0 0
        %698 = vmatmul.mubr.bf16.gmra.mrb[0].mxu0 %v663
        %v699 = vpop.f32.mrb[0].mxu0
        %v700 = vadd.f32 0.0, %v699
        %v701 = vpop.f32.mrb[0].mxu0
        %v702 = vpop.f32.mrb[0].mxu0
        %v703 = vadd.f32 0.0, %v702
        %v704 = vpop.f32.mrb[0].mxu0
        %705 = vdwg.mxu0
        %708 = vrot.lane.b32.xlu0 %v700, 64
        %v709 = vpop.permute.xlu0 %708
        %710 = vrot.lane.b32.xlu0 %v703, 64
        %v711 = vpop.permute.xlu0 %710
        %v714 = vsel %vm445, %v573, %v709
        %v715 = vsel %vm445, %v576, %v711
        %v716 = vpack.c.bf16 %v715, %v714
        %v718 = vunpack.c.l.b16 %v716
        %v719 = vunpack.c.h.b16 %v716
        %v720 = vpack.c.b16 %v718, %v718
        %v721 = vpack.c.b16 %v719, %v719
        %724 = vst [vmem:[%s426] sm:$0xf] %v720
        %725 = vst [vmem:[%s426 + $0x4] sm:$0xf] %v721
        %p726 = scmp.lt.s32.totalorder %s19, 3
        %s727 = scalar_select %p726, %s19, 3
        %p728 = scmp.lt.s32.totalorder %s20, 0
        %s729 = scalar_select %p728, %s20, 0
        %s730 = smul.addr %s727, 2
        %s731 = sadd.s32 %s729, %s730
        %s732 = smul.addr %s731, 4
        %s733 = scalar_lea.vmem %s4, %s732
        // Predicated region
        $region160: #{_lambda_.9} parent=146 // pred_check
          %p734 = pneg %p161
        $region161: #{_lambda_.9} parent=146 // pred_check_branch
          %736 = sbr.rel (%p734) target = $region163
        $region162: #{_lambda_.9} parent=146 // pred_region
          _
        $region163: #{_lambda_.9} parent=146 // pred_fallthru
          _
      $region147: #{_lambda_.9} parent=5 // pred_fallthru
        _
      %p737 = scmp.le.s32.totalorder 2, %s10
      // Predicated region
      $region164: #{_lambda_.9} parent=5 // pred_check
        %p738 = pneg %p737
      $region165: #{_lambda_.9} parent=5 // pred_check_branch
        %740 = sbr.rel (%p738) target = $region167
      $region166: #{_lambda_.9} parent=5 // pred_region
        %s741 = ssub.s32 %s10, 2
        // Predicated region
        $region168: #{_lambda_.9} parent=166 // pred_check
          %p742 = pneg %p167
        $region169: #{_lambda_.9} parent=166 // pred_check_branch
          %744 = sbr.rel (%p742) target = $region171
        $region170: #{_lambda_.9} parent=166 // pred_region
          %p745 = scmp.lt.s32.totalorder %s21, 3
          %s746 = scalar_select %p745, %s21, 3
          %p747 = scmp.lt.s32.totalorder %s22, 0
          %s748 = scalar_select %p747, %s22, 0
          %s749 = smul.addr %s746, 2
          %s750 = sadd.s32 %s748, %s749
          %s751 = smul.addr %s750, 4
          %s752 = scalar_lea.vmem %s4, %s751
        $region171: #{_lambda_.9} parent=166 // pred_fallthru
          _
      $region167: #{_lambda_.9} parent=5 // pred_fallthru
        _
    $region6: #{_lambda_.9} parent=1 // loop_footer
      %s14 = sadd.s32 1, %s10
    $region7: #{_lambda_.9} parent=1 // loop_footer_branch
      %9 = sbr.rel target = $region3
    $region8: #{_lambda_.9} parent=1 // loop_exit
      _

// kernel: _lambda_.8
$region0: #{_lambda_.8}
  #allocation0 [shape = 'u32[]', space=smem, size = 0x4, offset = 0x4, fixed_abs, tag = 'smem constant byte address 0x4 - core index']
  #allocation1 [shape = 'u32[144,128]{1,0:T(1,128)}', space=vmem, size = 0x12000, scoped, tag = 'internal scratch']
  %s0 = inlined_call_operand.vmem [shape: bf16[64,128], index: 0, kind: input, shape index: {}]
  %s1 = inlined_call_operand.vmem [shape: bf16[128,384], index: 1, kind: input, shape index: {}]
  %s2 = inlined_call_operand.vmem [shape: f32[1,384], index: 2, kind: input, shape index: {}]
  %s3 = inlined_call_operand.vmem [shape: bf16[64,384], index: 3, kind: output, shape index: {}]
  %s4 = sld [smem:[#allocation0]]
  $region22: #{_lambda_.8} parent=0
    _
  %s6 = ssub.s32 1, %s4
  %s7 = scalar_select 0, %s6, %s4
  // Predicated region
  $region2: #{_lambda_.8} parent=0 // pred_check
    _
  $region3: #{_lambda_.8} parent=0 // pred_check_branch
    %9 = sbr.rel (0) target = $region5
  $region4: #{_lambda_.8} parent=0 // pred_region
    _
  $region5: #{_lambda_.8} parent=0 // pred_fallthru
    _
  // Predicated region
  $region6: #{_lambda_.8} parent=0 // pred_check
    _
  $region7: #{_lambda_.8} parent=0 // pred_check_branch
    %11 = sbr.rel (0) target = $region9
  $region8: #{_lambda_.8} parent=0 // pred_region
    _
  $region9: #{_lambda_.8} parent=0 // pred_fallthru
    _
  // Predicated region
  $region10: #{_lambda_.8} parent=0 // pred_check
    _
  $region11: #{_lambda_.8} parent=0 // pred_check_branch
    %13 = sbr.rel (0) target = $region13
  $region12: #{_lambda_.8} parent=0 // pred_region
    _
  $region13: #{_lambda_.8} parent=0 // pred_fallthru
    _
  %v15 = vld [vmem:[%s0] sm:$0xf]
  %v16 = vld [vmem:[%s0 + $0x4] sm:$0xf]
  %v17 = vld [vmem:[%s0 + $0x8] sm:$0xf]
  %v18 = vld [vmem:[%s0 + $0xc] sm:$0xf]
  %v19 = vld [vmem:[%s0 + $0x10] sm:$0xf]
  %v20 = vld [vmem:[%s0 + $0x14] sm:$0xf]
  %v21 = vld [vmem:[%s0 + $0x18] sm:$0xf]
  %v22 = vld [vmem:[%s0 + $0x1c] sm:$0xf]
  %v23 = vld [vmem:[%s1] sm:$0xff]
  %v24 = vld [vmem:[%s1 + $0x8] sm:$0xf]
  %v25 = vld [vmem:[%s1 + $0xc] sm:$0xff]
  %v26 = vld [vmem:[%s1 + $0x14] sm:$0xf]
  %v27 = vld [vmem:[%s1 + $0x18] sm:$0xff]
  %v28 = vld [vmem:[%s1 + $0x20] sm:$0xf]
  %v29 = vld [vmem:[%s1 + $0x24] sm:$0xff]
  %v30 = vld [vmem:[%s1 + $0x2c] sm:$0xf]
  %v31 = vld [vmem:[%s1 + $0x30] sm:$0xff]
  %v32 = vld [vmem:[%s1 + $0x38] sm:$0xf]
  %v33 = vld [vmem:[%s1 + $0x3c] sm:$0xff]
  %v34 = vld [vmem:[%s1 + $0x44] sm:$0xf]
  %v35 = vld [vmem:[%s1 + $0x48] sm:$0xff]
  %v36 = vld [vmem:[%s1 + $0x50] sm:$0xf]
  %v37 = vld [vmem:[%s1 + $0x54] sm:$0xff]
  %v38 = vld [vmem:[%s1 + $0x5c] sm:$0xf]
  %v39 = vld [vmem:[%s1 + $0x60] sm:$0xff]
  %v40 = vld [vmem:[%s1 + $0x68] sm:$0xf]
  %v41 = vld [vmem:[%s1 + $0x6c] sm:$0xff]
  %v42 = vld [vmem:[%s1 + $0x74] sm:$0xf]
  %v43 = vld [vmem:[%s1 + $0x78] sm:$0xff]
  %v44 = vld [vmem:[%s1 + $0x80] sm:$0xf]
  %v45 = vld [vmem:[%s1 + $0x84] sm:$0xff]
  %v46 = vld [vmem:[%s1 + $0x8c] sm:$0xf]
  %v47 = vld [vmem:[%s1 + $0x90] sm:$0xff]
  %v48 = vld [vmem:[%s1 + $0x98] sm:$0xf]
  %v49 = vld [vmem:[%s1 + $0x9c] sm:$0xff]
  %v50 = vld [vmem:[%s1 + $0xa4] sm:$0xf]
  %v51 = vld [vmem:[%s1 + $0xa8] sm:$0xff]
  %v52 = vld [vmem:[%s1 + $0xb0] sm:$0xf]
  %v53 = vld [vmem:[%s1 + $0xb4] sm:$0xff]
  %v54 = vld [vmem:[%s1 + $0xbc] sm:$0xf]
  %v55 = vld [vmem:[%s2] sm:$0x7]
  %v57 = vlaneseq
  %v58 = vshrl.u32 %v57, 7
  %v59 = vsub.s32 0, %v58
  %v60 = vrot.slane %v55, %v59
  %v61 = vlaneseq
  %v62 = vshrl.u32 %v61, 7
  %v63 = vsub.s32 1, %v62
  %v64 = vrot.slane %v55, %v63
  %v65 = vlaneseq
  %v66 = vshrl.u32 %v65, 7
  %v67 = vsub.s32 2, %v66
  %v68 = vrot.slane %v55, %v67
  %v80 = vunpack.c.l.b16 %v15
  %v81 = vunpack.c.l.b16 %v16
  %v82 = vunpack.c.l.b16 %v17
  %v83 = vunpack.c.l.b16 %v18
  %v84 = vunpack.c.l.b16 %v19
  %v85 = vunpack.c.l.b16 %v20
  %v86 = vunpack.c.l.b16 %v21
  %v87 = vunpack.c.l.b16 %v22
  %v88 = vpack.c.b16 %v81, %v80
  %v89 = vpack.c.b16 %v83, %v82
  %v90 = vpack.c.b16 %v85, %v84
  %v91 = vpack.c.b16 %v87, %v86
  %v128 = vunpack.c.l.b16 %v23
  %v129 = vunpack.c.h.b16 %v23
  %v130 = vunpack.c.l.b16 %v24
  %v131 = vunpack.c.l.b16 %v25
  %v132 = vunpack.c.h.b16 %v25
  %v133 = vunpack.c.l.b16 %v26
  %v134 = vunpack.c.l.b16 %v27
  %v135 = vunpack.c.h.b16 %v27
  %v136 = vunpack.c.l.b16 %v28
  %v137 = vunpack.c.l.b16 %v29
  %v138 = vunpack.c.h.b16 %v29
  %v139 = vunpack.c.l.b16 %v30
  %v140 = vunpack.c.l.b16 %v31
  %v141 = vunpack.c.h.b16 %v31
  %v142 = vunpack.c.l.b16 %v32
  %v143 = vunpack.c.l.b16 %v33
  %v144 = vunpack.c.h.b16 %v33
  %v145 = vunpack.c.l.b16 %v34
  %v146 = vunpack.c.l.b16 %v35
  %v147 = vunpack.c.h.b16 %v35
  %v148 = vunpack.c.l.b16 %v36
  %v149 = vunpack.c.l.b16 %v37
  %v150 = vunpack.c.h.b16 %v37
  %v151 = vunpack.c.l.b16 %v38
  %v152 = vunpack.c.l.b16 %v39
  %v153 = vunpack.c.h.b16 %v39
  %v154 = vunpack.c.l.b16 %v40
  %v155 = vunpack.c.l.b16 %v41
  %v156 = vunpack.c.h.b16 %v41
  %v157 = vunpack.c.l.b16 %v42
  %v158 = vunpack.c.l.b16 %v43
  %v159 = vunpack.c.h.b16 %v43
  %v160 = vunpack.c.l.b16 %v44
  %v161 = vunpack.c.l.b16 %v45
  %v162 = vunpack.c.h.b16 %v45
  %v163 = vunpack.c.l.b16 %v46
  %v164 = vunpack.c.l.b16 %v47
  %v165 = vunpack.c.h.b16 %v47
  %v166 = vunpack.c.l.b16 %v48
  %v167 = vunpack.c.l.b16 %v49
  %v168 = vunpack.c.h.b16 %v49
  %v169 = vunpack.c.l.b16 %v50
  %v170 = vunpack.c.l.b16 %v51
  %v171 = vunpack.c.h.b16 %v51
  %v172 = vunpack.c.l.b16 %v52
  %v173 = vunpack.c.l.b16 %v53
  %v174 = vunpack.c.h.b16 %v53
  %v175 = vunpack.c.l.b16 %v54
  %v176 = vpack.c.b16 %v131, %v128
  %v177 = vpack.c.b16 %v132, %v129
  %v178 = vpack.c.b16 %v133, %v130
  %v179 = vpack.c.b16 %v137, %v134
  %v180 = vpack.c.b16 %v138, %v135
  %v181 = vpack.c.b16 %v139, %v136
  %v182 = vpack.c.b16 %v143, %v140
  %v183 = vpack.c.b16 %v144, %v141
  %v184 = vpack.c.b16 %v145, %v142
  %v185 = vpack.c.b16 %v149, %v146
  %v186 = vpack.c.b16 %v150, %v147
  %v187 = vpack.c.b16 %v151, %v148
  %v188 = vpack.c.b16 %v155, %v152
  %v189 = vpack.c.b16 %v156, %v153
  %v190 = vpack.c.b16 %v157, %v154
  %v191 = vpack.c.b16 %v161, %v158
  %v192 = vpack.c.b16 %v162, %v159
  %v193 = vpack.c.b16 %v163, %v160
  %v194 = vpack.c.b16 %v167, %v164
  %v195 = vpack.c.b16 %v168, %v165
  %v196 = vpack.c.b16 %v169, %v166
  %v197 = vpack.c.b16 %v173, %v170
  %v198 = vpack.c.b16 %v174, %v171
  %v199 = vpack.c.b16 %v175, %v172
  %224 = vmatprep.subr.bf16.mxu0 %v177
  %225 = vmatpush1.bf16.msra.mxu0 %v176
  %226 = vmatprep.subr.bf16.mxu0 %v180
  %227 = vmatpush1.bf16.msra.mxu0 %v179
  %228 = vmatprep.subr.bf16.mxu0 %v183
  %229 = vmatpush1.bf16.msra.mxu0 %v182
  %230 = vmatprep.subr.bf16.mxu0 %v186
  %231 = vmatpush1.bf16.msra.mxu0 %v185
  %232 = vmatprep.subr.bf16.mxu0 %v189
  %233 = vmatpush1.bf16.msra.mxu0 %v188
  %234 = vmatprep.subr.bf16.mxu0 %v192
  %235 = vmatpush1.bf16.msra.mxu0 %v191
  %236 = vmatprep.subr.bf16.mxu0 %v195
  %237 = vmatpush1.bf16.msra.mxu0 %v194
  %238 = vmatprep.subr.bf16.mxu0 %v198
  %239 = vmatpush1.bf16.msra.mxu0 %v197
  %240 = vmatprep.subr.bf16.mxu0 0
  %241 = vmatpush1.bf16.msra.mxu0 0
  %242 = vmatprep.subr.bf16.mxu0 0
  %243 = vmatpush1.bf16.msra.mxu0 0
  %244 = vmatprep.subr.bf16.mxu0 0
  %245 = vmatpush1.bf16.msra.mxu0 0
  %246 = vmatprep.subr.bf16.mxu0 0
  %247 = vmatpush1.bf16.msra.mxu0 0
  %248 = vmatprep.subr.bf16.mxu0 0
  %249 = vmatpush1.bf16.msra.mxu0 0
  %250 = vmatprep.subr.bf16.mxu0 0
  %251 = vmatpush1.bf16.msra.mxu0 0
  %252 = vmatprep.subr.bf16.mxu0 0
  %253 = vmatpush1.bf16.msra.mxu0 0
  %254 = vmatprep.subr.bf16.mxu0 0
  %255 = vmatpush1.bf16.msra.mxu0 0
  %256 = vmatprep.mubr.bf16.mxu0 0
  %257 = vmatmul.mubr.bf16.gmra.mrb[0].mxu0 %v88
  %v258 = vpop.f32.mrb[0].mxu0
  %v259 = vadd.f32 %v60, %v258
  %v260 = vpop.f32.mrb[0].mxu0
  %v261 = vadd.f32 %v64, %v260
  %v262 = vpop.f32.mrb[0].mxu0
  %v263 = vadd.f32 %v60, %v262
  %v264 = vpop.f32.mrb[0].mxu0
  %v265 = vadd.f32 %v64, %v264
  %266 = vmatprep.mubr.bf16.mxu0 0
  %267 = vmatmul.mubr.bf16.gmra.mrb[0].mxu0 %v89
  %v268 = vpop.f32.mrb[0].mxu0
  %v269 = vadd.f32 %v60, %v268
  %v270 = vpop.f32.mrb[0].mxu0
  %v271 = vadd.f32 %v64, %v270
  %v272 = vpop.f32.mrb[0].mxu0
  %v273 = vadd.f32 %v60, %v272
  %v274 = vpop.f32.mrb[0].mxu0
  %v275 = vadd.f32 %v64, %v274
  %276 = vmatprep.mubr.bf16.mxu0 0
  %277 = vmatmul.mubr.bf16.gmra.mrb[0].mxu0 %v90
  %v278 = vpop.f32.mrb[0].mxu0
  %v279 = vadd.f32 %v60, %v278
  %v280 = vpop.f32.mrb[0].mxu0
  %v281 = vadd.f32 %v64, %v280
  %v282 = vpop.f32.mrb[0].mxu0
  %v283 = vadd.f32 %v60, %v282
  %v284 = vpop.f32.mrb[0].mxu0
  %v285 = vadd.f32 %v64, %v284
  %286 = vmatprep.mubr.bf16.mxu0 0
  %287 = vmatmul.mubr.bf16.gmra.mrb[0].mxu0 %v91
  %v288 = vpop.f32.mrb[0].mxu0
  %v289 = vadd.f32 %v60, %v288
  %v290 = vpop.f32.mrb[0].mxu0
  %v291 = vadd.f32 %v64, %v290
  %v292 = vpop.f32.mrb[0].mxu0
  %v293 = vadd.f32 %v60, %v292
  %v294 = vpop.f32.mrb[0].mxu0
  %v295 = vadd.f32 %v64, %v294
  %296 = vdwg.mxu0
  %297 = vmatprep.subr.bf16.mxu0 0
  %298 = vmatpush1.bf16.msra.mxu0 %v178
  %299 = vmatprep.subr.bf16.mxu0 0
  %300 = vmatpush1.bf16.msra.mxu0 %v181
  %301 = vmatprep.subr.bf16.mxu0 0
  %302 = vmatpush1.bf16.msra.mxu0 %v184
  %303 = vmatprep.subr.bf16.mxu0 0
  %304 = vmatpush1.bf16.msra.mxu0 %v187
  %305 = vmatprep.subr.bf16.mxu0 0
  %306 = vmatpush1.bf16.msra.mxu0 %v190
  %307 = vmatprep.subr.bf16.mxu0 0
  %308 = vmatpush1.bf16.msra.mxu0 %v193
  %309 = vmatprep.subr.bf16.mxu0 0
  %310 = vmatpush1.bf16.msra.mxu0 %v196
  %311 = vmatprep.subr.bf16.mxu0 0
  %312 = vmatpush1.bf16.msra.mxu0 %v199
  %313 = vmatprep.subr.bf16.mxu0 0
  %314 = vmatpush1.bf16.msra.mxu0 0
  %315 = vmatprep.subr.bf16.mxu0 0
  %316 = vmatpush1.bf16.msra.mxu0 0
  %317 = vmatprep.subr.bf16.mxu0 0
  %318 = vmatpush1.bf16.msra.mxu0 0
  %319 = vmatprep.subr.bf16.mxu0 0
  %320 = vmatpush1.bf16.msra.mxu0 0
  %321 = vmatprep.subr.bf16.mxu0 0
  %322 = vmatpush1.bf16.msra.mxu0 0
  %323 = vmatprep.subr.bf16.mxu0 0
  %324 = vmatpush1.bf16.msra.mxu0 0
  %325 = vmatprep.subr.bf16.mxu0 0
  %326 = vmatpush1.bf16.msra.mxu0 0
  %327 = vmatprep.subr.bf16.mxu0 0
  %328 = vmatpush1.bf16.msra.mxu0 0
  %329 = vmatprep.mubr.bf16.mxu0 0
  %330 = vmatmul.mubr.bf16.gmra.mrb[0].mxu0 %v88
  %v331 = vpop.f32.mrb[0].mxu0
  %v332 = vadd.f32 %v68, %v331
  %v333 = vpop.f32.mrb[0].mxu0
  %v334 = vpop.f32.mrb[0].mxu0
  %v335 = vadd.f32 %v68, %v334
  %v336 = vpop.f32.mrb[0].mxu0
  %337 = vmatprep.mubr.bf16.mxu0 0
  %338 = vmatmul.mubr.bf16.gmra.mrb[0].mxu0 %v89
  %v339 = vpop.f32.mrb[0].mxu0
  %v340 = vadd.f32 %v68, %v339
  %v341 = vpop.f32.mrb[0].mxu0
  %v342 = vpop.f32.mrb[0].mxu0
  %v343 = vadd.f32 %v68, %v342
  %v344 = vpop.f32.mrb[0].mxu0
  %345 = vmatprep.mubr.bf16.mxu0 0
  %346 = vmatmul.mubr.bf16.gmra.mrb[0].mxu0 %v90
  %v347 = vpop.f32.mrb[0].mxu0
  %v348 = vadd.f32 %v68, %v347
  %v349 = vpop.f32.mrb[0].mxu0
  %v350 = vpop.f32.mrb[0].mxu0
  %v351 = vadd.f32 %v68, %v350
  %v352 = vpop.f32.mrb[0].mxu0
  %353 = vmatprep.mubr.bf16.mxu0 0
  %354 = vmatmul.mubr.bf16.gmra.mrb[0].mxu0 %v91
  %v355 = vpop.f32.mrb[0].mxu0
  %v356 = vadd.f32 %v68, %v355
  %v357 = vpop.f32.mrb[0].mxu0
  %v358 = vpop.f32.mrb[0].mxu0
  %v359 = vadd.f32 %v68, %v358
  %v360 = vpop.f32.mrb[0].mxu0
  %361 = vdwg.mxu0
  %v362 = vpack.c.bf16 %v263, %v259
  %v363 = vpack.c.bf16 %v265, %v261
  %v364 = vpack.c.bf16 %v335, %v332
  %v365 = vpack.c.bf16 %v273, %v269
  %v366 = vpack.c.bf16 %v275, %v271
  %v367 = vpack.c.bf16 %v343, %v340
  %v368 = vpack.c.bf16 %v283, %v279
  %v369 = vpack.c.bf16 %v285, %v281
  %v370 = vpack.c.bf16 %v351, %v348
  %v371 = vpack.c.bf16 %v293, %v289
  %v372 = vpack.c.bf16 %v295, %v291
  %v373 = vpack.c.bf16 %v359, %v356
  %v386 = vunpack.c.l.b16 %v362
  %v387 = vunpack.c.l.b16 %v363
  %v388 = vunpack.c.l.b16 %v364
  %v389 = vunpack.c.h.b16 %v362
  %v390 = vunpack.c.h.b16 %v363
  %v391 = vunpack.c.h.b16 %v364
  %v392 = vunpack.c.l.b16 %v365
  %v393 = vunpack.c.l.b16 %v366
  %v394 = vunpack.c.l.b16 %v367
  %v395 = vunpack.c.h.b16 %v365
  %v396 = vunpack.c.h.b16 %v366
  %v397 = vunpack.c.h.b16 %v367
  %v398 = vunpack.c.l.b16 %v368
  %v399 = vunpack.c.l.b16 %v369
  %v400 = vunpack.c.l.b16 %v370
  %v401 = vunpack.c.h.b16 %v368
  %v402 = vunpack.c.h.b16 %v369
  %v403 = vunpack.c.h.b16 %v370
  %v404 = vunpack.c.l.b16 %v371
  %v405 = vunpack.c.l.b16 %v372
  %v406 = vunpack.c.l.b16 %v373
  %v407 = vunpack.c.h.b16 %v371
  %v408 = vunpack.c.h.b16 %v372
  %v409 = vunpack.c.h.b16 %v373
  %v410 = vpack.c.b16 %v387, %v386
  %v411 = vpack.c.b16 %v388, %v388
  %v412 = vpack.c.b16 %v390, %v389
  %v413 = vpack.c.b16 %v391, %v391
  %v414 = vpack.c.b16 %v393, %v392
  %v415 = vpack.c.b16 %v394, %v394
  %v416 = vpack.c.b16 %v396, %v395
  %v417 = vpack.c.b16 %v397, %v397
  %v418 = vpack.c.b16 %v399, %v398
  %v419 = vpack.c.b16 %v400, %v400
  %v420 = vpack.c.b16 %v402, %v401
  %v421 = vpack.c.b16 %v403, %v403
  %v422 = vpack.c.b16 %v405, %v404
  %v423 = vpack.c.b16 %v406, %v406
  %v424 = vpack.c.b16 %v408, %v407
  %v425 = vpack.c.b16 %v409, %v409
  %442 = vst [vmem:[%s3] sm:$0xff] %v410
  %443 = vst [vmem:[%s3 + $0x8] sm:$0xf] %v411
  %444 = vst [vmem:[%s3 + $0xc] sm:$0xff] %v412
  %445 = vst [vmem:[%s3 + $0x14] sm:$0xf] %v413
  %446 = vst [vmem:[%s3 + $0x18] sm:$0xff] %v414
  %447 = vst [vmem:[%s3 + $0x20] sm:$0xf] %v415
  %448 = vst [vmem:[%s3 + $0x24] sm:$0xff] %v416
  %449 = vst [vmem:[%s3 + $0x2c] sm:$0xf] %v417
  %450 = vst [vmem:[%s3 + $0x30] sm:$0xff] %v418
  %451 = vst [vmem:[%s3 + $0x38] sm:$0xf] %v419
  %452 = vst [vmem:[%s3 + $0x3c] sm:$0xff] %v420
  %453 = vst [vmem:[%s3 + $0x44] sm:$0xf] %v421
  %454 = vst [vmem:[%s3 + $0x48] sm:$0xff] %v422
  %455 = vst [vmem:[%s3 + $0x50] sm:$0xf] %v423
  %456 = vst [vmem:[%s3 + $0x54] sm:$0xff] %v424
  %457 = vst [vmem:[%s3 + $0x5c] sm:$0xf] %v425
  // Predicated region
  $region14: #{_lambda_.8} parent=0 // pred_check
    _
  $region15: #{_lambda_.8} parent=0 // pred_check_branch
    %459 = sbr.rel (0) target = $region17
  $region16: #{_lambda_.8} parent=0 // pred_region
    _
  $region17: #{_lambda_.8} parent=0 // pred_fallthru
    _
  // Predicated region
  $region18: #{_lambda_.8} parent=0 // pred_check
    _
  $region19: #{_lambda_.8} parent=0 // pred_check_branch
    %461 = sbr.rel (0) target = $region21
  $region20: #{_lambda_.8} parent=0 // pred_region
    _
  $region21: #{_lambda_.8} parent=0 // pred_fallthru
    _

// kernel: _lambda_.10
$region0: #{_lambda_.10}
  #allocation0 [shape = 'u32[]', space=smem, size = 0x4, offset = 0x4, fixed_abs, tag = 'smem constant byte address 0x4 - core index']
  #allocation1 [shape = 'u32[144,128]{1,0:T(1,128)}', space=vmem, size = 0x12000, scoped, tag = 'internal scratch']
  #allocation2 [shape = 'f32[64,128]{1,0:T(8,128)}', space=vmem, size = 0x8000, scoped, tag = 'scratch operand']
  #allocation3 [shape = 'f32[64,128]{1,0:T(8,128)}', space=vmem, size = 0x8000, scoped, tag = 'scratch operand']
  %s0 = inlined_call_operand.vmem [shape: bf16[64,128], index: 0, kind: input, shape index: {}]
  %s1 = inlined_call_operand.vmem [shape: bf16[64,128], index: 1, kind: input, shape index: {}]
  %s2 = inlined_call_operand.vmem [shape: bf16[128,128], index: 2, kind: input, shape index: {}]
  %s3 = inlined_call_operand.vmem [shape: f32[1,128], index: 3, kind: input, shape index: {}]
  %s4 = inlined_call_operand.vmem [shape: f32[1,128], index: 4, kind: input, shape index: {}]
  %s5 = inlined_call_operand.vmem [shape: f32[1,128], index: 5, kind: input, shape index: {}]
  %s6 = inlined_call_operand.vmem [shape: bf16[128,512], index: 6, kind: input, shape index: {}]
  %s7 = inlined_call_operand.vmem [shape: f32[1,512], index: 7, kind: input, shape index: {}]
  %s8 = inlined_call_operand.vmem [shape: bf16[512,128], index: 8, kind: input, shape index: {}]
  %s9 = inlined_call_operand.vmem [shape: f32[1,128], index: 9, kind: input, shape index: {}]
  %s10 = inlined_call_operand.vmem [shape: f32[1,128], index: 10, kind: input, shape index: {}]
  %s11 = inlined_call_operand.vmem [shape: f32[1,128], index: 11, kind: input, shape index: {}]
  %s12 = inlined_call_operand.vmem [shape: bf16[64,128], index: 12, kind: output, shape index: {}]
  %s13 = sld [smem:[#allocation0]]
  $region66: #{_lambda_.10} parent=0
    _
  %s15 = ssub.s32 1, %s13
  %s16 = scalar_select 0, %s15, %s13
  // Predicated region
  $region2: #{_lambda_.10} parent=0 // pred_check
    _
  $region3: #{_lambda_.10} parent=0 // pred_check_branch
    %18 = sbr.rel (0) target = $region5
  $region4: #{_lambda_.10} parent=0 // pred_region
    _
  $region5: #{_lambda_.10} parent=0 // pred_fallthru
    _
  // Predicated region
  $region6: #{_lambda_.10} parent=0 // pred_check
    _
  $region7: #{_lambda_.10} parent=0 // pred_check_branch
    %20 = sbr.rel (0) target = $region9
  $region8: #{_lambda_.10} parent=0 // pred_region
    _
  $region9: #{_lambda_.10} parent=0 // pred_fallthru
    _
  // Predicated region
  $region10: #{_lambda_.10} parent=0 // pred_check
    _
  $region11: #{_lambda_.10} parent=0 // pred_check_branch
    %22 = sbr.rel (0) target = $region13
  $region12: #{_lambda_.10} parent=0 // pred_region
    _
  $region13: #{_lambda_.10} parent=0 // pred_fallthru
    _
  // Predicated region
  $region14: #{_lambda_.10} parent=0 // pred_check
    _
  $region15: #{_lambda_.10} parent=0 // pred_check_branch
    %24 = sbr.rel (0) target = $region17
  $region16: #{_lambda_.10} parent=0 // pred_region
    _
  $region17: #{_lambda_.10} parent=0 // pred_fallthru
    _
  // Predicated region
  $region18: #{_lambda_.10} parent=0 // pred_check
    _
  $region19: #{_lambda_.10} parent=0 // pred_check_branch
    %26 = sbr.rel (0) target = $region21
  $region20: #{_lambda_.10} parent=0 // pred_region
    _
  $region21: #{_lambda_.10} parent=0 // pred_fallthru
    _
  // Predicated region
  $region22: #{_lambda_.10} parent=0 // pred_check
    _
  $region23: #{_lambda_.10} parent=0 // pred_check_branch
    %28 = sbr.rel (0) target = $region25
  $region24: #{_lambda_.10} parent=0 // pred_region
    _
  $region25: #{_lambda_.10} parent=0 // pred_fallthru
    _
  // Predicated region
  $region26: #{_lambda_.10} parent=0 // pred_check
    _
  $region27: #{_lambda_.10} parent=0 // pred_check_branch
    %30 = sbr.rel (0) target = $region29
  $region28: #{_lambda_.10} parent=0 // pred_region
    _
  $region29: #{_lambda_.10} parent=0 // pred_fallthru
    _
  // Predicated region
  $region30: #{_lambda_.10} parent=0 // pred_check
    _
  $region31: #{_lambda_.10} parent=0 // pred_check_branch
    %32 = sbr.rel (0) target = $region33
  $region32: #{_lambda_.10} parent=0 // pred_region
    _
  $region33: #{_lambda_.10} parent=0 // pred_fallthru
    _
  // Predicated region
  $region34: #{_lambda_.10} parent=0 // pred_check
    _
  $region35: #{_lambda_.10} parent=0 // pred_check_branch
    %34 = sbr.rel (0) target = $region37
  $region36: #{_lambda_.10} parent=0 // pred_region
    _
  $region37: #{_lambda_.10} parent=0 // pred_fallthru
    _
  // Predicated region
  $region38: #{_lambda_.10} parent=0 // pred_check
    _
  $region39: #{_lambda_.10} parent=0 // pred_check_branch
    %36 = sbr.rel (0) target = $region41
  $region40: #{_lambda_.10} parent=0 // pred_region
    _
  $region41: #{_lambda_.10} parent=0 // pred_fallthru
    _
  // Predicated region
  $region42: #{_lambda_.10} parent=0 // pred_check
    _
  $region43: #{_lambda_.10} parent=0 // pred_check_branch
    %38 = sbr.rel (0) target = $region45
  $region44: #{_lambda_.10} parent=0 // pred_region
    _
  $region45: #{_lambda_.10} parent=0 // pred_fallthru
    _
  // Predicated region
  $region46: #{_lambda_.10} parent=0 // pred_check
    _
  $region47: #{_lambda_.10} parent=0 // pred_check_branch
    %40 = sbr.rel (0) target = $region49
  $region48: #{_lambda_.10} parent=0 // pred_region
    _
  $region49: #{_lambda_.10} parent=0 // pred_fallthru
    _
  %p42 = scmp.eq.s32.totalorder 0, 0
  // Predicated region
  $region50: #{_lambda_.10} parent=0 // pred_check
    %p43 = pneg %p42
  $region51: #{_lambda_.10} parent=0 // pred_check_branch
    %45 = sbr.rel (%p43) target = $region53
  $region52: #{_lambda_.10} parent=0 // pred_region
    %v46 = vld [vmem:[%s0] sm:$0xf]
    %v47 = vld [vmem:[%s0 + $0x4] sm:$0xf]
    %v48 = vld [vmem:[%s0 + $0x8] sm:$0xf]
    %v49 = vld [vmem:[%s0 + $0xc] sm:$0xf]
    %v50 = vld [vmem:[%s0 + $0x10] sm:$0xf]
    %v51 = vld [vmem:[%s0 + $0x14] sm:$0xf]
    %v52 = vld [vmem:[%s0 + $0x18] sm:$0xf]
    %v53 = vld [vmem:[%s0 + $0x1c] sm:$0xf]
    %v54 = vld [vmem:[%s2] sm:$0xf]
    %v55 = vld [vmem:[%s2 + $0x4] sm:$0xf]
    %v56 = vld [vmem:[%s2 + $0x8] sm:$0xf]
    %v57 = vld [vmem:[%s2 + $0xc] sm:$0xf]
    %v58 = vld [vmem:[%s2 + $0x10] sm:$0xf]
    %v59 = vld [vmem:[%s2 + $0x14] sm:$0xf]
    %v60 = vld [vmem:[%s2 + $0x18] sm:$0xf]
    %v61 = vld [vmem:[%s2 + $0x1c] sm:$0xf]
    %v62 = vld [vmem:[%s2 + $0x20] sm:$0xf]
    %v63 = vld [vmem:[%s2 + $0x24] sm:$0xf]
    %v64 = vld [vmem:[%s2 + $0x28] sm:$0xf]
    %v65 = vld [vmem:[%s2 + $0x2c] sm:$0xf]
    %v66 = vld [vmem:[%s2 + $0x30] sm:$0xf]
    %v67 = vld [vmem:[%s2 + $0x34] sm:$0xf]
    %v68 = vld [vmem:[%s2 + $0x38] sm:$0xf]
    %v69 = vld [vmem:[%s2 + $0x3c] sm:$0xf]
    %v70 = vld [vmem:[%s3] sm:$0x1]
    %v72 = vlaneseq
    %v73 = vshrl.u32 %v72, 7
    %v74 = vsub.s32 0, %v73
    %v75 = vrot.slane %v70, %v74
    %v85 = vunpack.c.l.b16 %v46
    %v86 = vunpack.c.l.b16 %v47
    %v87 = vunpack.c.l.b16 %v48
    %v88 = vunpack.c.l.b16 %v49
    %v89 = vunpack.c.l.b16 %v50
    %v90 = vunpack.c.l.b16 %v51
    %v91 = vunpack.c.l.b16 %v52
    %v92 = vunpack.c.l.b16 %v53
    %v93 = vpack.c.b16 %v86, %v85
    %v94 = vpack.c.b16 %v88, %v87
    %v95 = vpack.c.b16 %v90, %v89
    %v96 = vpack.c.b16 %v92, %v91
    %v117 = vunpack.c.l.b16 %v54
    %v118 = vunpack.c.l.b16 %v55
    %v119 = vunpack.c.l.b16 %v56
    %v120 = vunpack.c.l.b16 %v57
    %v121 = vunpack.c.l.b16 %v58
    %v122 = vunpack.c.l.b16 %v59
    %v123 = vunpack.c.l.b16 %v60
    %v124 = vunpack.c.l.b16 %v61
    %v125 = vunpack.c.l.b16 %v62
    %v126 = vunpack.c.l.b16 %v63
    %v127 = vunpack.c.l.b16 %v64
    %v128 = vunpack.c.l.b16 %v65
    %v129 = vunpack.c.l.b16 %v66
    %v130 = vunpack.c.l.b16 %v67
    %v131 = vunpack.c.l.b16 %v68
    %v132 = vunpack.c.l.b16 %v69
    %v133 = vpack.c.b16 %v118, %v117
    %v134 = vpack.c.b16 %v120, %v119
    %v135 = vpack.c.b16 %v122, %v121
    %v136 = vpack.c.b16 %v124, %v123
    %v137 = vpack.c.b16 %v126, %v125
    %v138 = vpack.c.b16 %v128, %v127
    %v139 = vpack.c.b16 %v130, %v129
    %v140 = vpack.c.b16 %v132, %v131
    %149 = vmatprep.subr.bf16.mxu0 0
    %150 = vmatpush1.bf16.msra.mxu0 %v133
    %151 = vmatprep.subr.bf16.mxu0 0
    %152 = vmatpush1.bf16.msra.mxu0 %v134
    %153 = vmatprep.subr.bf16.mxu0 0
    %154 = vmatpush1.bf16.msra.mxu0 %v135
    %155 = vmatprep.subr.bf16.mxu0 0
    %156 = vmatpush1.bf16.msra.mxu0 %v136
    %157 = vmatprep.subr.bf16.mxu0 0
    %158 = vmatpush1.bf16.msra.mxu0 %v137
    %159 = vmatprep.subr.bf16.mxu0 0
    %160 = vmatpush1.bf16.msra.mxu0 %v138
    %161 = vmatprep.subr.bf16.mxu0 0
    %162 = vmatpush1.bf16.msra.mxu0 %v139
    %163 = vmatprep.subr.bf16.mxu0 0
    %164 = vmatpush1.bf16.msra.mxu0 %v140
    %165 = vmatprep.subr.bf16.mxu0 0
    %166 = vmatpush1.bf16.msra.mxu0 0
    %167 = vmatprep.subr.bf16.mxu0 0
    %168 = vmatpush1.bf16.msra.mxu0 0
    %169 = vmatprep.subr.bf16.mxu0 0
    %170 = vmatpush1.bf16.msra.mxu0 0
    %171 = vmatprep.subr.bf16.mxu0 0
    %172 = vmatpush1.bf16.msra.mxu0 0
    %173 = vmatprep.subr.bf16.mxu0 0
    %174 = vmatpush1.bf16.msra.mxu0 0
    %175 = vmatprep.subr.bf16.mxu0 0
    %176 = vmatpush1.bf16.msra.mxu0 0
    %177 = vmatprep.subr.bf16.mxu0 0
    %178 = vmatpush1.bf16.msra.mxu0 0
    %179 = vmatprep.subr.bf16.mxu0 0
    %180 = vmatpush1.bf16.msra.mxu0 0
    %181 = vmatprep.mubr.bf16.mxu0 0
    %182 = vmatmul.mubr.bf16.gmra.mrb[0].mxu0 %v93
    %v183 = vpop.f32.mrb[0].mxu0
    %v184 = vadd.f32 %v75, %v183
    %v185 = vpop.f32.mrb[0].mxu0
    %v186 = vpop.f32.mrb[0].mxu0
    %v187 = vadd.f32 %v75, %v186
    %v188 = vpop.f32.mrb[0].mxu0
    %189 = vmatprep.mubr.bf16.mxu0 0
    %190 = vmatmul.mubr.bf16.gmra.mrb[0].mxu0 %v94
    %v191 = vpop.f32.mrb[0].mxu0
    %v192 = vadd.f32 %v75, %v191
    %v193 = vpop.f32.mrb[0].mxu0
    %v194 = vpop.f32.mrb[0].mxu0
    %v195 = vadd.f32 %v75, %v194
    %v196 = vpop.f32.mrb[0].mxu0
    %197 = vmatprep.mubr.bf16.mxu0 0
    %198 = vmatmul.mubr.bf16.gmra.mrb[0].mxu0 %v95
    %v199 = vpop.f32.mrb[0].mxu0
    %v200 = vadd.f32 %v75, %v199
    %v201 = vpop.f32.mrb[0].mxu0
    %v202 = vpop.f32.mrb[0].mxu0
    %v203 = vadd.f32 %v75, %v202
    %v204 = vpop.f32.mrb[0].mxu0
    %205 = vmatprep.mubr.bf16.mxu0 0
    %206 = vmatmul.mubr.bf16.gmra.mrb[0].mxu0 %v96
    %v207 = vpop.f32.mrb[0].mxu0
    %v208 = vadd.f32 %v75, %v207
    %v209 = vpop.f32.mrb[0].mxu0
    %v210 = vpop.f32.mrb[0].mxu0
    %v211 = vadd.f32 %v75, %v210
    %v212 = vpop.f32.mrb[0].mxu0
    %213 = vdwg.mxu0
    %v214 = vld [vmem:[%s1] sm:$0xf]
    %v215 = vld [vmem:[%s1 + $0x4] sm:$0xf]
    %v216 = vld [vmem:[%s1 + $0x8] sm:$0xf]
    %v217 = vld [vmem:[%s1 + $0xc] sm:$0xf]
    %v218 = vld [vmem:[%s1 + $0x10] sm:$0xf]
    %v219 = vld [vmem:[%s1 + $0x14] sm:$0xf]
    %v220 = vld [vmem:[%s1 + $0x18] sm:$0xf]
    %v221 = vld [vmem:[%s1 + $0x1c] sm:$0xf]
    %v222 = vunpack.c.l.bf16 %v214
    %v223 = vunpack.c.l.bf16 %v215
    %v224 = vunpack.c.l.bf16 %v216
    %v225 = vunpack.c.l.bf16 %v217
    %v226 = vunpack.c.l.bf16 %v218
    %v227 = vunpack.c.l.bf16 %v219
    %v228 = vunpack.c.l.bf16 %v220
    %v229 = vunpack.c.l.bf16 %v221
    %v230 = vadd.f32 %v184, %v222
    %v231 = vadd.f32 %v187, %v223
    %v232 = vadd.f32 %v192, %v224
    %v233 = vadd.f32 %v195, %v225
    %v234 = vadd.f32 %v200, %v226
    %v235 = vadd.f32 %v203, %v227
    %v236 = vadd.f32 %v208, %v228
    %v237 = vadd.f32 %v211, %v229
    %v238 = vld [vmem:[%s4] sm:$0x1]
    %v239 = vld [vmem:[%s5] sm:$0x1]
    %240 = vadd.xlane.f32.xlu0 %v230
    %v241 = vpop.xlane.xlu0 %240
    %242 = vadd.xlane.f32.xlu0 %v231
    %v243 = vpop.xlane.xlu0 %242
    %244 = vadd.xlane.f32.xlu0 %v232
    %v245 = vpop.xlane.xlu0 %244
    %246 = vadd.xlane.f32.xlu0 %v233
    %v247 = vpop.xlane.xlu0 %246
    %248 = vadd.xlane.f32.xlu0 %v234
    %v249 = vpop.xlane.xlu0 %248
    %250 = vadd.xlane.f32.xlu0 %v235
    %v251 = vpop.xlane.xlu0 %250
    %252 = vadd.xlane.f32.xlu0 %v236
    %v253 = vpop.xlane.xlu0 %252
    %254 = vadd.xlane.f32.xlu0 %v237
    %v255 = vpop.xlane.xlu0 %254
    %v256 = vrcp.pop 128.0
    %v257 = vmul.f32 %v241, %v256
    %v258 = vmul.f32 %v243, %v256
    %v259 = vmul.f32 %v245, %v256
    %v260 = vmul.f32 %v247, %v256
    %v261 = vmul.f32 %v249, %v256
    %v262 = vmul.f32 %v251, %v256
    %v263 = vmul.f32 %v253, %v256
    %v264 = vmul.f32 %v255, %v256
    %v265 = vsub.f32 %v230, %v257
    %v266 = vsub.f32 %v231, %v258
    %v267 = vsub.f32 %v232, %v259
    %v268 = vsub.f32 %v233, %v260
    %v269 = vsub.f32 %v234, %v261
    %v270 = vsub.f32 %v235, %v262
    %v271 = vsub.f32 %v236, %v263
    %v272 = vsub.f32 %v237, %v264
    %v273 = vmul.f32 %v265, %v265
    %v274 = vmul.f32 %v266, %v266
    %v275 = vmul.f32 %v267, %v267
    %v276 = vmul.f32 %v268, %v268
    %v277 = vmul.f32 %v269, %v269
    %v278 = vmul.f32 %v270, %v270
    %v279 = vmul.f32 %v271, %v271
    %v280 = vmul.f32 %v272, %v272
    %281 = vadd.xlane.f32.xlu0 %v273
    %v282 = vpop.xlane.xlu0 %281
    %283 = vadd.xlane.f32.xlu0 %v274
    %v284 = vpop.xlane.xlu0 %283
    %285 = vadd.xlane.f32.xlu0 %v275
    %v286 = vpop.xlane.xlu0 %285
    %287 = vadd.xlane.f32.xlu0 %v276
    %v288 = vpop.xlane.xlu0 %287
    %289 = vadd.xlane.f32.xlu0 %v277
    %v290 = vpop.xlane.xlu0 %289
    %291 = vadd.xlane.f32.xlu0 %v278
    %v292 = vpop.xlane.xlu0 %291
    %293 = vadd.xlane.f32.xlu0 %v279
    %v294 = vpop.xlane.xlu0 %293
    %295 = vadd.xlane.f32.xlu0 %v280
    %v296 = vpop.xlane.xlu0 %295
    %v297 = vmul.f32 %v282, %v256
    %v298 = vmul.f32 %v284, %v256
    %v299 = vmul.f32 %v286, %v256
    %v300 = vmul.f32 %v288, %v256
    %v301 = vmul.f32 %v290, %v256
    %v302 = vmul.f32 %v292, %v256
    %v303 = vmul.f32 %v294, %v256
    %v304 = vmul.f32 %v296, %v256
    %v305 = vadd.f32 %v297, 1e-12
    %v306 = vadd.f32 %v298, 1e-12
    %v307 = vadd.f32 %v299, 1e-12
    %v308 = vadd.f32 %v300, 1e-12
    %v309 = vadd.f32 %v301, 1e-12
    %v310 = vadd.f32 %v302, 1e-12
    %v311 = vadd.f32 %v303, 1e-12
    %v312 = vadd.f32 %v304, 1e-12
    %v313 = vrsqrt.pop %v305
    %v314 = vrsqrt.pop %v306
    %v315 = vrsqrt.pop %v307
    %v316 = vrsqrt.pop %v308
    %v317 = vrsqrt.pop %v309
    %v318 = vrsqrt.pop %v310
    %v319 = vrsqrt.pop %v311
    %v320 = vrsqrt.pop %v312
    %v321 = vmul.f32 %v265, %v313
    %v322 = vmul.f32 %v266, %v314
    %v323 = vmul.f32 %v267, %v315
    %v324 = vmul.f32 %v268, %v316
    %v325 = vmul.f32 %v269, %v317
    %v326 = vmul.f32 %v270, %v318
    %v327 = vmul.f32 %v271, %v319
    %v328 = vmul.f32 %v272, %v320
    %v330 = vlaneseq
    %v331 = vshrl.u32 %v330, 7
    %v332 = vsub.s32 0, %v331
    %v333 = vrot.slane %v238, %v332
    %v335 = vmul.f32 %v321, %v333
    %v336 = vmul.f32 %v322, %v333
    %v337 = vmul.f32 %v323, %v333
    %v338 = vmul.f32 %v324, %v333
    %v339 = vmul.f32 %v325, %v333
    %v340 = vmul.f32 %v326, %v333
    %v341 = vmul.f32 %v327, %v333
    %v342 = vmul.f32 %v328, %v333
    %v344 = vlaneseq
    %v345 = vshrl.u32 %v344, 7
    %v346 = vsub.s32 0, %v345
    %v347 = vrot.slane %v239, %v346
    %v349 = vadd.f32 %v335, %v347
    %v350 = vadd.f32 %v336, %v347
    %v351 = vadd.f32 %v337, %v347
    %v352 = vadd.f32 %v338, %v347
    %v353 = vadd.f32 %v339, %v347
    %v354 = vadd.f32 %v340, %v347
    %v355 = vadd.f32 %v341, %v347
    %v356 = vadd.f32 %v342, %v347
    %357 = vst [vmem:[#allocation2] sm:$0xff] %v349
    %358 = vst [vmem:[#allocation2 + $0x8] sm:$0xff] %v350
    %359 = vst [vmem:[#allocation2 + $0x10] sm:$0xff] %v351
    %360 = vst [vmem:[#allocation2 + $0x18] sm:$0xff] %v352
    %361 = vst [vmem:[#allocation2 + $0x20] sm:$0xff] %v353
    %362 = vst [vmem:[#allocation2 + $0x28] sm:$0xff] %v354
    %363 = vst [vmem:[#allocation2 + $0x30] sm:$0xff] %v355
    %364 = vst [vmem:[#allocation2 + $0x38] sm:$0xff] %v356
    %365 = vst [vmem:[#allocation3] sm:$0xff] 0.0
    %366 = vst [vmem:[#allocation3 + $0x8] sm:$0xff] 0.0
    %367 = vst [vmem:[#allocation3 + $0x10] sm:$0xff] 0.0
    %368 = vst [vmem:[#allocation3 + $0x18] sm:$0xff] 0.0
    %369 = vst [vmem:[#allocation3 + $0x20] sm:$0xff] 0.0
    %370 = vst [vmem:[#allocation3 + $0x28] sm:$0xff] 0.0
    %371 = vst [vmem:[#allocation3 + $0x30] sm:$0xff] 0.0
    %372 = vst [vmem:[#allocation3 + $0x38] sm:$0xff] 0.0
  $region53: #{_lambda_.10} parent=0 // pred_fallthru
    _
  %v373 = vld [vmem:[#allocation2] sm:$0xff]
  %v374 = vld [vmem:[#allocation2 + $0x8] sm:$0xff]
  %v375 = vld [vmem:[#allocation2 + $0x10] sm:$0xff]
  %v376 = vld [vmem:[#allocation2 + $0x18] sm:$0xff]
  %v377 = vld [vmem:[#allocation2 + $0x20] sm:$0xff]
  %v378 = vld [vmem:[#allocation2 + $0x28] sm:$0xff]
  %v379 = vld [vmem:[#allocation2 + $0x30] sm:$0xff]
  %v380 = vld [vmem:[#allocation2 + $0x38] sm:$0xff]
  %v381 = vpack.c.bf16 %v374, %v373
  %v382 = vpack.c.bf16 %v376, %v375
  %v383 = vpack.c.bf16 %v378, %v377
  %v384 = vpack.c.bf16 %v380, %v379
  %v385 = vld [vmem:[%s6] sm:$0xff]
  %v386 = vld [vmem:[%s6 + $0x8] sm:$0xff]
  %v387 = vld [vmem:[%s6 + $0x10] sm:$0xff]
  %v388 = vld [vmem:[%s6 + $0x18] sm:$0xff]
  %v389 = vld [vmem:[%s6 + $0x20] sm:$0xff]
  %v390 = vld [vmem:[%s6 + $0x28] sm:$0xff]
  %v391 = vld [vmem:[%s6 + $0x30] sm:$0xff]
  %v392 = vld [vmem:[%s6 + $0x38] sm:$0xff]
  %v393 = vld [vmem:[%s6 + $0x40] sm:$0xff]
  %v394 = vld [vmem:[%s6 + $0x48] sm:$0xff]
  %v395 = vld [vmem:[%s6 + $0x50] sm:$0xff]
  %v396 = vld [vmem:[%s6 + $0x58] sm:$0xff]
  %v397 = vld [vmem:[%s6 + $0x60] sm:$0xff]
  %v398 = vld [vmem:[%s6 + $0x68] sm:$0xff]
  %v399 = vld [vmem:[%s6 + $0x70] sm:$0xff]
  %v400 = vld [vmem:[%s6 + $0x78] sm:$0xff]
  %v401 = vld [vmem:[%s6 + $0x80] sm:$0xff]
  %v402 = vld [vmem:[%s6 + $0x88] sm:$0xff]
  %v403 = vld [vmem:[%s6 + $0x90] sm:$0xff]
  %v404 = vld [vmem:[%s6 + $0x98] sm:$0xff]
  %v405 = vld [vmem:[%s6 + $0xa0] sm:$0xff]
  %v406 = vld [vmem:[%s6 + $0xa8] sm:$0xff]
  %v407 = vld [vmem:[%s6 + $0xb0] sm:$0xff]
  %v408 = vld [vmem:[%s6 + $0xb8] sm:$0xff]
  %v409 = vld [vmem:[%s6 + $0xc0] sm:$0xff]
  %v410 = vld [vmem:[%s6 + $0xc8] sm:$0xff]
  %v411 = vld [vmem:[%s6 + $0xd0] sm:$0xff]
  %v412 = vld [vmem:[%s6 + $0xd8] sm:$0xff]
  %v413 = vld [vmem:[%s6 + $0xe0] sm:$0xff]
  %v414 = vld [vmem:[%s6 + $0xe8] sm:$0xff]
  %v415 = vld [vmem:[%s6 + $0xf0] sm:$0xff]
  %v416 = vld [vmem:[%s6 + $0xf8] sm:$0xff]
  %v417 = vld [vmem:[%s7] sm:$0xf]
  %v419 = vlaneseq
  %v420 = vshrl.u32 %v419, 7
  %v421 = vsub.s32 0, %v420
  %v422 = vrot.slane %v417, %v421
  %v423 = vlaneseq
  %v424 = vshrl.u32 %v423, 7
  %v425 = vsub.s32 1, %v424
  %v426 = vrot.slane %v417, %v425
  %v427 = vlaneseq
  %v428 = vshrl.u32 %v427, 7
  %v429 = vsub.s32 2, %v428
  %v430 = vrot.slane %v417, %v429
  %v431 = vlaneseq
  %v432 = vshrl.u32 %v431, 7
  %v433 = vsub.s32 3, %v432
  %v434 = vrot.slane %v417, %v433
  %v471 = vunpack.c.l.b16 %v385
  %v472 = vunpack.c.h.b16 %v385
  %v473 = vunpack.c.l.b16 %v386
  %v474 = vunpack.c.h.b16 %v386
  %v475 = vunpack.c.l.b16 %v387
  %v476 = vunpack.c.h.b16 %v387
  %v477 = vunpack.c.l.b16 %v388
  %v478 = vunpack.c.h.b16 %v388
  %v479 = vunpack.c.l.b16 %v389
  %v480 = vunpack.c.h.b16 %v389
  %v481 = vunpack.c.l.b16 %v390
  %v482 = vunpack.c.h.b16 %v390
  %v483 = vunpack.c.l.b16 %v391
  %v484 = vunpack.c.h.b16 %v391
  %v485 = vunpack.c.l.b16 %v392
  %v486 = vunpack.c.h.b16 %v392
  %v487 = vunpack.c.l.b16 %v393
  %v488 = vunpack.c.h.b16 %v393
  %v489 = vunpack.c.l.b16 %v394
  %v490 = vunpack.c.h.b16 %v394
  %v491 = vunpack.c.l.b16 %v395
  %v492 = vunpack.c.h.b16 %v395
  %v493 = vunpack.c.l.b16 %v396
  %v494 = vunpack.c.h.b16 %v396
  %v495 = vunpack.c.l.b16 %v397
  %v496 = vunpack.c.h.b16 %v397
  %v497 = vunpack.c.l.b16 %v398
  %v498 = vunpack.c.h.b16 %v398
  %v499 = vunpack.c.l.b16 %v399
  %v500 = vunpack.c.h.b16 %v399
  %v501 = vunpack.c.l.b16 %v400
  %v502 = vunpack.c.h.b16 %v400
  %v503 = vunpack.c.l.b16 %v401
  %v504 = vunpack.c.h.b16 %v401
  %v505 = vunpack.c.l.b16 %v402
  %v506 = vunpack.c.h.b16 %v402
  %v507 = vunpack.c.l.b16 %v403
  %v508 = vunpack.c.h.b16 %v403
  %v509 = vunpack.c.l.b16 %v404
  %v510 = vunpack.c.h.b16 %v404
  %v511 = vunpack.c.l.b16 %v405
  %v512 = vunpack.c.h.b16 %v405
  %v513 = vunpack.c.l.b16 %v406
  %v514 = vunpack.c.h.b16 %v406
  %v515 = vunpack.c.l.b16 %v407
  %v516 = vunpack.c.h.b16 %v407
  %v517 = vunpack.c.l.b16 %v408
  %v518 = vunpack.c.h.b16 %v408
  %v519 = vunpack.c.l.b16 %v409
  %v520 = vunpack.c.h.b16 %v409
  %v521 = vunpack.c.l.b16 %v410
  %v522 = vunpack.c.h.b16 %v410
  %v523 = vunpack.c.l.b16 %v411
  %v524 = vunpack.c.h.b16 %v411
  %v525 = vunpack.c.l.b16 %v412
  %v526 = vunpack.c.h.b16 %v412
  %v527 = vunpack.c.l.b16 %v413
  %v528 = vunpack.c.h.b16 %v413
  %v529 = vunpack.c.l.b16 %v414
  %v530 = vunpack.c.h.b16 %v414
  %v531 = vunpack.c.l.b16 %v415
  %v532 = vunpack.c.h.b16 %v415
  %v533 = vunpack.c.l.b16 %v416
  %v534 = vunpack.c.h.b16 %v416
  %v535 = vpack.c.b16 %v475, %v471
  %v536 = vpack.c.b16 %v476, %v472
  %v537 = vpack.c.b16 %v477, %v473
  %v538 = vpack.c.b16 %v478, %v474
  %v539 = vpack.c.b16 %v483, %v479
  %v540 = vpack.c.b16 %v484, %v480
  %v541 = vpack.c.b16 %v485, %v481
  %v542 = vpack.c.b16 %v486, %v482
  %v543 = vpack.c.b16 %v491, %v487
  %v544 = vpack.c.b16 %v492, %v488
  %v545 = vpack.c.b16 %v493, %v489
  %v546 = vpack.c.b16 %v494, %v490
  %v547 = vpack.c.b16 %v499, %v495
  %v548 = vpack.c.b16 %v500, %v496
  %v549 = vpack.c.b16 %v501, %v497
  %v550 = vpack.c.b16 %v502, %v498
  %v551 = vpack.c.b16 %v507, %v503
  %v552 = vpack.c.b16 %v508, %v504
  %v553 = vpack.c.b16 %v509, %v505
  %v554 = vpack.c.b16 %v510, %v506
  %v555 = vpack.c.b16 %v515, %v511
  %v556 = vpack.c.b16 %v516, %v512
  %v557 = vpack.c.b16 %v517, %v513
  %v558 = vpack.c.b16 %v518, %v514
  %v559 = vpack.c.b16 %v523, %v519
  %v560 = vpack.c.b16 %v524, %v520
  %v561 = vpack.c.b16 %v525, %v521
  %v562 = vpack.c.b16 %v526, %v522
  %v563 = vpack.c.b16 %v531, %v527
  %v564 = vpack.c.b16 %v532, %v528
  %v565 = vpack.c.b16 %v533, %v529
  %v566 = vpack.c.b16 %v534, %v530
  %599 = vmatprep.subr.bf16.mxu0 %v536
  %600 = vmatpush1.bf16.msra.mxu0 %v535
  %601 = vmatprep.subr.bf16.mxu0 %v540
  %602 = vmatpush1.bf16.msra.mxu0 %v539
  %603 = vmatprep.subr.bf16.mxu0 %v544
  %604 = vmatpush1.bf16.msra.mxu0 %v543
  %605 = vmatprep.subr.bf16.mxu0 %v548
  %606 = vmatpush1.bf16.msra.mxu0 %v547
  %607 = vmatprep.subr.bf16.mxu0 %v552
  %608 = vmatpush1.bf16.msra.mxu0 %v551
  %609 = vmatprep.subr.bf16.mxu0 %v556
  %610 = vmatpush1.bf16.msra.mxu0 %v555
  %611 = vmatprep.subr.bf16.mxu0 %v560
  %612 = vmatpush1.bf16.msra.mxu0 %v559
  %613 = vmatprep.subr.bf16.mxu0 %v564
  %614 = vmatpush1.bf16.msra.mxu0 %v563
  %615 = vmatprep.subr.bf16.mxu0 0
  %616 = vmatpush1.bf16.msra.mxu0 0
  %617 = vmatprep.subr.bf16.mxu0 0
  %618 = vmatpush1.bf16.msra.mxu0 0
  %619 = vmatprep.subr.bf16.mxu0 0
  %620 = vmatpush1.bf16.msra.mxu0 0
  %621 = vmatprep.subr.bf16.mxu0 0
  %622 = vmatpush1.bf16.msra.mxu0 0
  %623 = vmatprep.subr.bf16.mxu0 0
  %624 = vmatpush1.bf16.msra.mxu0 0
  %625 = vmatprep.subr.bf16.mxu0 0
  %626 = vmatpush1.bf16.msra.mxu0 0
  %627 = vmatprep.subr.bf16.mxu0 0
  %628 = vmatpush1.bf16.msra.mxu0 0
  %629 = vmatprep.subr.bf16.mxu0 0
  %630 = vmatpush1.bf16.msra.mxu0 0
  %631 = vmatprep.mubr.bf16.mxu0 0
  %632 = vmatmul.mubr.bf16.gmra.mrb[0].mxu0 %v381
  %v633 = vpop.f32.mrb[0].mxu0
  %v634 = vadd.f32 %v422, %v633
  %v635 = vpop.f32.mrb[0].mxu0
  %v636 = vadd.f32 %v426, %v635
  %v637 = vpop.f32.mrb[0].mxu0
  %v638 = vadd.f32 %v422, %v637
  %v639 = vpop.f32.mrb[0].mxu0
  %v640 = vadd.f32 %v426, %v639
  %641 = vmatprep.mubr.bf16.mxu0 0
  %642 = vmatmul.mubr.bf16.gmra.mrb[0].mxu0 %v382
  %v643 = vpop.f32.mrb[0].mxu0
  %v644 = vadd.f32 %v422, %v643
  %v645 = vpop.f32.mrb[0].mxu0
  %v646 = vadd.f32 %v426, %v645
  %v647 = vpop.f32.mrb[0].mxu0
  %v648 = vadd.f32 %v422, %v647
  %v649 = vpop.f32.mrb[0].mxu0
  %v650 = vadd.f32 %v426, %v649
  %651 = vmatprep.mubr.bf16.mxu0 0
  %652 = vmatmul.mubr.bf16.gmra.mrb[0].mxu0 %v383
  %v653 = vpop.f32.mrb[0].mxu0
  %v654 = vadd.f32 %v422, %v653
  %v655 = vpop.f32.mrb[0].mxu0
  %v656 = vadd.f32 %v426, %v655
  %v657 = vpop.f32.mrb[0].mxu0
  %v658 = vadd.f32 %v422, %v657
  %v659 = vpop.f32.mrb[0].mxu0
  %v660 = vadd.f32 %v426, %v659
  %661 = vmatprep.mubr.bf16.mxu0 0
  %662 = vmatmul.mubr.bf16.gmra.mrb[0].mxu0 %v384
  %v663 = vpop.f32.mrb[0].mxu0
  %v664 = vadd.f32 %v422, %v663
  %v665 = vpop.f32.mrb[0].mxu0
  %v666 = vadd.f32 %v426, %v665
  %v667 = vpop.f32.mrb[0].mxu0
  %v668 = vadd.f32 %v422, %v667
  %v669 = vpop.f32.mrb[0].mxu0
  %v670 = vadd.f32 %v426, %v669
  %671 = vdwg.mxu0
  %672 = vmatprep.subr.bf16.mxu0 %v538
  %673 = vmatpush1.bf16.msra.mxu0 %v537
  %674 = vmatprep.subr.bf16.mxu0 %v542
  %675 = vmatpush1.bf16.msra.mxu0 %v541
  %676 = vmatprep.subr.bf16.mxu0 %v546
  %677 = vmatpush1.bf16.msra.mxu0 %v545
  %678 = vmatprep.subr.bf16.mxu0 %v550
  %679 = vmatpush1.bf16.msra.mxu0 %v549
  %680 = vmatprep.subr.bf16.mxu0 %v554
  %681 = vmatpush1.bf16.msra.mxu0 %v553
  %682 = vmatprep.subr.bf16.mxu0 %v558
  %683 = vmatpush1.bf16.msra.mxu0 %v557
  %684 = vmatprep.subr.bf16.mxu0 %v562
  %685 = vmatpush1.bf16.msra.mxu0 %v561
  %686 = vmatprep.subr.bf16.mxu0 %v566
  %687 = vmatpush1.bf16.msra.mxu0 %v565
  %688 = vmatprep.subr.bf16.mxu0 0
  %689 = vmatpush1.bf16.msra.mxu0 0
  %690 = vmatprep.subr.bf16.mxu0 0
  %691 = vmatpush1.bf16.msra.mxu0 0
  %692 = vmatprep.subr.bf16.mxu0 0
  %693 = vmatpush1.bf16.msra.mxu0 0
  %694 = vmatprep.subr.bf16.mxu0 0
  %695 = vmatpush1.bf16.msra.mxu0 0
  %696 = vmatprep.subr.bf16.mxu0 0
  %697 = vmatpush1.bf16.msra.mxu0 0
  %698 = vmatprep.subr.bf16.mxu0 0
  %699 = vmatpush1.bf16.msra.mxu0 0
  %700 = vmatprep.subr.bf16.mxu0 0
  %701 = vmatpush1.bf16.msra.mxu0 0
  %702 = vmatprep.subr.bf16.mxu0 0
  %703 = vmatpush1.bf16.msra.mxu0 0
  %704 = vmatprep.mubr.bf16.mxu0 0
  %705 = vmatmul.mubr.bf16.gmra.mrb[0].mxu0 %v381
  %v706 = vpop.f32.mrb[0].mxu0
  %v707 = vadd.f32 %v430, %v706
  %v708 = vpop.f32.mrb[0].mxu0
  %v709 = vadd.f32 %v434, %v708
  %v710 = vpop.f32.mrb[0].mxu0
  %v711 = vadd.f32 %v430, %v710
  %v712 = vpop.f32.mrb[0].mxu0
  %v713 = vadd.f32 %v434, %v712
  %714 = vmatprep.mubr.bf16.mxu0 0
  %715 = vmatmul.mubr.bf16.gmra.mrb[0].mxu0 %v382
  %v716 = vpop.f32.mrb[0].mxu0
  %v717 = vadd.f32 %v430, %v716
  %v718 = vpop.f32.mrb[0].mxu0
  %v719 = vadd.f32 %v434, %v718
  %v720 = vpop.f32.mrb[0].mxu0
  %v721 = vadd.f32 %v430, %v720
  %v722 = vpop.f32.mrb[0].mxu0
  %v723 = vadd.f32 %v434, %v722
  %724 = vmatprep.mubr.bf16.mxu0 0
  %725 = vmatmul.mubr.bf16.gmra.mrb[0].mxu0 %v383
  %v726 = vpop.f32.mrb[0].mxu0
  %v727 = vadd.f32 %v430, %v726
  %v728 = vpop.f32.mrb[0].mxu0
  %v729 = vadd.f32 %v434, %v728
  %v730 = vpop.f32.mrb[0].mxu0
  %v731 = vadd.f32 %v430, %v730
  %v732 = vpop.f32.mrb[0].mxu0
  %v733 = vadd.f32 %v434, %v732
  %734 = vmatprep.mubr.bf16.mxu0 0
  %735 = vmatmul.mubr.bf16.gmra.mrb[0].mxu0 %v384
  %v736 = vpop.f32.mrb[0].mxu0
  %v737 = vadd.f32 %v430, %v736
  %v738 = vpop.f32.mrb[0].mxu0
  %v739 = vadd.f32 %v434, %v738
  %v740 = vpop.f32.mrb[0].mxu0
  %v741 = vadd.f32 %v430, %v740
  %v742 = vpop.f32.mrb[0].mxu0
  %v743 = vadd.f32 %v434, %v742
  %744 = vdwg.mxu0
  %v745 = vmul.f32 %v634, 0.5
  %v746 = vmul.f32 %v636, 0.5
  %v747 = vmul.f32 %v707, 0.5
  %v748 = vmul.f32 %v709, 0.5
  %v749 = vmul.f32 %v638, 0.5
  %v750 = vmul.f32 %v640, 0.5
  %v751 = vmul.f32 %v711, 0.5
  %v752 = vmul.f32 %v713, 0.5
  %v753 = vmul.f32 %v644, 0.5
  %v754 = vmul.f32 %v646, 0.5
  %v755 = vmul.f32 %v717, 0.5
  %v756 = vmul.f32 %v719, 0.5
  %v757 = vmul.f32 %v648, 0.5
  %v758 = vmul.f32 %v650, 0.5
  %v759 = vmul.f32 %v721, 0.5
  %v760 = vmul.f32 %v723, 0.5
  %v761 = vmul.f32 %v654, 0.5
  %v762 = vmul.f32 %v656, 0.5
  %v763 = vmul.f32 %v727, 0.5
  %v764 = vmul.f32 %v729, 0.5
  %v765 = vmul.f32 %v658, 0.5
  %v766 = vmul.f32 %v660, 0.5
  %v767 = vmul.f32 %v731, 0.5
  %v768 = vmul.f32 %v733, 0.5
  %v769 = vmul.f32 %v664, 0.5
  %v770 = vmul.f32 %v666, 0.5
  %v771 = vmul.f32 %v737, 0.5
  %v772 = vmul.f32 %v739, 0.5
  %v773 = vmul.f32 %v668, 0.5
  %v774 = vmul.f32 %v670, 0.5
  %v775 = vmul.f32 %v741, 0.5
  %v776 = vmul.f32 %v743, 0.5
  %v777 = vrcp.pop 1.4142135
  %v778 = vmul.f32 %v634, %v777
  %v779 = vmul.f32 %v636, %v777
  %v780 = vmul.f32 %v707, %v777
  %v781 = vmul.f32 %v709, %v777
  %v782 = vmul.f32 %v638, %v777
  %v783 = vmul.f32 %v640, %v777
  %v784 = vmul.f32 %v711, %v777
  %v785 = vmul.f32 %v713, %v777
  %v786 = vmul.f32 %v644, %v777
  %v787 = vmul.f32 %v646, %v777
  %v788 = vmul.f32 %v717, %v777
  %v789 = vmul.f32 %v719, %v777
  %v790 = vmul.f32 %v648, %v777
  %v791 = vmul.f32 %v650, %v777
  %v792 = vmul.f32 %v721, %v777
  %v793 = vmul.f32 %v723, %v777
  %v794 = vmul.f32 %v654, %v777
  %v795 = vmul.f32 %v656, %v777
  %v796 = vmul.f32 %v727, %v777
  %v797 = vmul.f32 %v729, %v777
  %v798 = vmul.f32 %v658, %v777
  %v799 = vmul.f32 %v660, %v777
  %v800 = vmul.f32 %v731, %v777
  %v801 = vmul.f32 %v733, %v777
  %v802 = vmul.f32 %v664, %v777
  %v803 = vmul.f32 %v666, %v777
  %v804 = vmul.f32 %v737, %v777
  %v805 = vmul.f32 %v739, %v777
  %v806 = vmul.f32 %v668, %v777
  %v807 = vmul.f32 %v670, %v777
  %v808 = vmul.f32 %v741, %v777
  %v809 = vmul.f32 %v743, %v777
  %v810 = verf.f32.pop %v778
  %v811 = verf.f32.pop %v779
  %v812 = verf.f32.pop %v780
  %v813 = verf.f32.pop %v781
  %v814 = verf.f32.pop %v782
  %v815 = verf.f32.pop %v783
  %v816 = verf.f32.pop %v784
  %v817 = verf.f32.pop %v785
  %v818 = verf.f32.pop %v786
  %v819 = verf.f32.pop %v787
  %v820 = verf.f32.pop %v788
  %v821 = verf.f32.pop %v789
  %v822 = verf.f32.pop %v790
  %v823 = verf.f32.pop %v791
  %v824 = verf.f32.pop %v792
  %v825 = verf.f32.pop %v793
  %v826 = verf.f32.pop %v794
  %v827 = verf.f32.pop %v795
  %v828 = verf.f32.pop %v796
  %v829 = verf.f32.pop %v797
  %v830 = verf.f32.pop %v798
  %v831 = verf.f32.pop %v799
  %v832 = verf.f32.pop %v800
  %v833 = verf.f32.pop %v801
  %v834 = verf.f32.pop %v802
  %v835 = verf.f32.pop %v803
  %v836 = verf.f32.pop %v804
  %v837 = verf.f32.pop %v805
  %v838 = verf.f32.pop %v806
  %v839 = verf.f32.pop %v807
  %v840 = verf.f32.pop %v808
  %v841 = verf.f32.pop %v809
  %v842 = vadd.f32 %v810, 1.0
  %v843 = vadd.f32 %v811, 1.0
  %v844 = vadd.f32 %v812, 1.0
  %v845 = vadd.f32 %v813, 1.0
  %v846 = vadd.f32 %v814, 1.0
  %v847 = vadd.f32 %v815, 1.0
  %v848 = vadd.f32 %v816, 1.0
  %v849 = vadd.f32 %v817, 1.0
  %v850 = vadd.f32 %v818, 1.0
  %v851 = vadd.f32 %v819, 1.0
  %v852 = vadd.f32 %v820, 1.0
  %v853 = vadd.f32 %v821, 1.0
  %v854 = vadd.f32 %v822, 1.0
  %v855 = vadd.f32 %v823, 1.0
  %v856 = vadd.f32 %v824, 1.0
  %v857 = vadd.f32 %v825, 1.0
  %v858 = vadd.f32 %v826, 1.0
  %v859 = vadd.f32 %v827, 1.0
  %v860 = vadd.f32 %v828, 1.0
  %v861 = vadd.f32 %v829, 1.0
  %v862 = vadd.f32 %v830, 1.0
  %v863 = vadd.f32 %v831, 1.0
  %v864 = vadd.f32 %v832, 1.0
  %v865 = vadd.f32 %v833, 1.0
  %v866 = vadd.f32 %v834, 1.0
  %v867 = vadd.f32 %v835, 1.0
  %v868 = vadd.f32 %v836, 1.0
  %v869 = vadd.f32 %v837, 1.0
  %v870 = vadd.f32 %v838, 1.0
  %v871 = vadd.f32 %v839, 1.0
  %v872 = vadd.f32 %v840, 1.0
  %v873 = vadd.f32 %v841, 1.0
  %v874 = vmul.f32 %v745, %v842
  %v875 = vmul.f32 %v746, %v843
  %v876 = vmul.f32 %v747, %v844
  %v877 = vmul.f32 %v748, %v845
  %v878 = vmul.f32 %v749, %v846
  %v879 = vmul.f32 %v750, %v847
  %v880 = vmul.f32 %v751, %v848
  %v881 = vmul.f32 %v752, %v849
  %v882 = vmul.f32 %v753, %v850
  %v883 = vmul.f32 %v754, %v851
  %v884 = vmul.f32 %v755, %v852
  %v885 = vmul.f32 %v756, %v853
  %v886 = vmul.f32 %v757, %v854
  %v887 = vmul.f32 %v758, %v855
  %v888 = vmul.f32 %v759, %v856
  %v889 = vmul.f32 %v760, %v857
  %v890 = vmul.f32 %v761, %v858
  %v891 = vmul.f32 %v762, %v859
  %v892 = vmul.f32 %v763, %v860
  %v893 = vmul.f32 %v764, %v861
  %v894 = vmul.f32 %v765, %v862
  %v895 = vmul.f32 %v766, %v863
  %v896 = vmul.f32 %v767, %v864
  %v897 = vmul.f32 %v768, %v865
  %v898 = vmul.f32 %v769, %v866
  %v899 = vmul.f32 %v770, %v867
  %v900 = vmul.f32 %v771, %v868
  %v901 = vmul.f32 %v772, %v869
  %v902 = vmul.f32 %v773, %v870
  %v903 = vmul.f32 %v774, %v871
  %v904 = vmul.f32 %v775, %v872
  %v905 = vmul.f32 %v776, %v873
  %v906 = vld [vmem:[#allocation3] sm:$0xff]
  %v907 = vld [vmem:[#allocation3 + $0x8] sm:$0xff]
  %v908 = vld [vmem:[#allocation3 + $0x10] sm:$0xff]
  %v909 = vld [vmem:[#allocation3 + $0x18] sm:$0xff]
  %v910 = vld [vmem:[#allocation3 + $0x20] sm:$0xff]
  %v911 = vld [vmem:[#allocation3 + $0x28] sm:$0xff]
  %v912 = vld [vmem:[#allocation3 + $0x30] sm:$0xff]
  %v913 = vld [vmem:[#allocation3 + $0x38] sm:$0xff]
  %v914 = vpack.c.bf16 %v878, %v874
  %v915 = vpack.c.bf16 %v879, %v875
  %v916 = vpack.c.bf16 %v880, %v876
  %v917 = vpack.c.bf16 %v881, %v877
  %v918 = vpack.c.bf16 %v886, %v882
  %v919 = vpack.c.bf16 %v887, %v883
  %v920 = vpack.c.bf16 %v888, %v884
  %v921 = vpack.c.bf16 %v889, %v885
  %v922 = vpack.c.bf16 %v894, %v890
  %v923 = vpack.c.bf16 %v895, %v891
  %v924 = vpack.c.bf16 %v896, %v892
  %v925 = vpack.c.bf16 %v897, %v893
  %v926 = vpack.c.bf16 %v902, %v898
  %v927 = vpack.c.bf16 %v903, %v899
  %v928 = vpack.c.bf16 %v904, %v900
  %v929 = vpack.c.bf16 %v905, %v901
  %v930 = vld [vmem:[%s8] sm:$0xf]
  %v931 = vld [vmem:[%s8 + $0x4] sm:$0xf]
  %v932 = vld [vmem:[%s8 + $0x8] sm:$0xf]
  %v933 = vld [vmem:[%s8 + $0xc] sm:$0xf]
  %v934 = vld [vmem:[%s8 + $0x10] sm:$0xf]
  %v935 = vld [vmem:[%s8 + $0x14] sm:$0xf]
  %v936 = vld [vmem:[%s8 + $0x18] sm:$0xf]
  %v937 = vld [vmem:[%s8 + $0x1c] sm:$0xf]
  %v938 = vld [vmem:[%s8 + $0x20] sm:$0xf]
  %v939 = vld [vmem:[%s8 + $0x24] sm:$0xf]
  %v940 = vld [vmem:[%s8 + $0x28] sm:$0xf]
  %v941 = vld [vmem:[%s8 + $0x2c] sm:$0xf]
  %v942 = vld [vmem:[%s8 + $0x30] sm:$0xf]
  %v943 = vld [vmem:[%s8 + $0x34] sm:$0xf]
  %v944 = vld [vmem:[%s8 + $0x38] sm:$0xf]
  %v945 = vld [vmem:[%s8 + $0x3c] sm:$0xf]
  %v946 = vld [vmem:[%s8 + $0x40] sm:$0xf]
  %v947 = vld [vmem:[%s8 + $0x44] sm:$0xf]
  %v948 = vld [vmem:[%s8 + $0x48] sm:$0xf]
  %v949 = vld [vmem:[%s8 + $0x4c] sm:$0xf]
  %v950 = vld [vmem:[%s8 + $0x50] sm:$0xf]
  %v951 = vld [vmem:[%s8 + $0x54] sm:$0xf]
  %v952 = vld [vmem:[%s8 + $0x58] sm:$0xf]
  %v953 = vld [vmem:[%s8 + $0x5c] sm:$0xf]
  %v954 = vld [vmem:[%s8 + $0x60] sm:$0xf]
  %v955 = vld [vmem:[%s8 + $0x64] sm:$0xf]
  %v956 = vld [vmem:[%s8 + $0x68] sm:$0xf]
  %v957 = vld [vmem:[%s8 + $0x6c] sm:$0xf]
  %v958 = vld [vmem:[%s8 + $0x70] sm:$0xf]
  %v959 = vld [vmem:[%s8 + $0x74] sm:$0xf]
  %v960 = vld [vmem:[%s8 + $0x78] sm:$0xf]
  %v961 = vld [vmem:[%s8 + $0x7c] sm:$0xf]
  %v962 = vld [vmem:[%s8 + $0x80] sm:$0xf]
  %v963 = vld [vmem:[%s8 + $0x84] sm:$0xf]
  %v964 = vld [vmem:[%s8 + $0x88] sm:$0xf]
  %v965 = vld [vmem:[%s8 + $0x8c] sm:$0xf]
  %v966 = vld [vmem:[%s8 + $0x90] sm:$0xf]
  %v967 = vld [vmem:[%s8 + $0x94] sm:$0xf]
  %v968 = vld [vmem:[%s8 + $0x98] sm:$0xf]
  %v969 = vld [vmem:[%s8 + $0x9c] sm:$0xf]
  %v970 = vld [vmem:[%s8 + $0xa0] sm:$0xf]
  %v971 = vld [vmem:[%s8 + $0xa4] sm:$0xf]
  %v972 = vld [vmem:[%s8 + $0xa8] sm:$0xf]
  %v973 = vld [vmem:[%s8 + $0xac] sm:$0xf]
  %v974 = vld [vmem:[%s8 + $0xb0] sm:$0xf]
  %v975 = vld [vmem:[%s8 + $0xb4] sm:$0xf]
  %v976 = vld [vmem:[%s8 + $0xb8] sm:$0xf]
  %v977 = vld [vmem:[%s8 + $0xbc] sm:$0xf]
  %v978 = vld [vmem:[%s8 + $0xc0] sm:$0xf]
  %v979 = vld [vmem:[%s8 + $0xc4] sm:$0xf]
  %v980 = vld [vmem:[%s8 + $0xc8] sm:$0xf]
  %v981 = vld [vmem:[%s8 + $0xcc] sm:$0xf]
  %v982 = vld [vmem:[%s8 + $0xd0] sm:$0xf]
  %v983 = vld [vmem:[%s8 + $0xd4] sm:$0xf]
  %v984 = vld [vmem:[%s8 + $0xd8] sm:$0xf]
  %v985 = vld [vmem:[%s8 + $0xdc] sm:$0xf]
  %v986 = vld [vmem:[%s8 + $0xe0] sm:$0xf]
  %v987 = vld [vmem:[%s8 + $0xe4] sm:$0xf]
  %v988 = vld [vmem:[%s8 + $0xe8] sm:$0xf]
  %v989 = vld [vmem:[%s8 + $0xec] sm:$0xf]
  %v990 = vld [vmem:[%s8 + $0xf0] sm:$0xf]
  %v991 = vld [vmem:[%s8 + $0xf4] sm:$0xf]
  %v992 = vld [vmem:[%s8 + $0xf8] sm:$0xf]
  %v993 = vld [vmem:[%s8 + $0xfc] sm:$0xf]
  %v1058 = vunpack.c.l.b16 %v930
  %v1059 = vunpack.c.l.b16 %v931
  %v1060 = vunpack.c.l.b16 %v932
  %v1061 = vunpack.c.l.b16 %v933
  %v1062 = vunpack.c.l.b16 %v934
  %v1063 = vunpack.c.l.b16 %v935
  %v1064 = vunpack.c.l.b16 %v936
  %v1065 = vunpack.c.l.b16 %v937
  %v1066 = vunpack.c.l.b16 %v938
  %v1067 = vunpack.c.l.b16 %v939
  %v1068 = vunpack.c.l.b16 %v940
  %v1069 = vunpack.c.l.b16 %v941
  %v1070 = vunpack.c.l.b16 %v942
  %v1071 = vunpack.c.l.b16 %v943
  %v1072 = vunpack.c.l.b16 %v944
  %v1073 = vunpack.c.l.b16 %v945
  %v1074 = vunpack.c.l.b16 %v946
  %v1075 = vunpack.c.l.b16 %v947
  %v1076 = vunpack.c.l.b16 %v948
  %v1077 = vunpack.c.l.b16 %v949
  %v1078 = vunpack.c.l.b16 %v950
  %v1079 = vunpack.c.l.b16 %v951
  %v1080 = vunpack.c.l.b16 %v952
  %v1081 = vunpack.c.l.b16 %v953
  %v1082 = vunpack.c.l.b16 %v954
  %v1083 = vunpack.c.l.b16 %v955
  %v1084 = vunpack.c.l.b16 %v956
  %v1085 = vunpack.c.l.b16 %v957
  %v1086 = vunpack.c.l.b16 %v958
  %v1087 = vunpack.c.l.b16 %v959
  %v1088 = vunpack.c.l.b16 %v960
  %v1089 = vunpack.c.l.b16 %v961
  %v1090 = vunpack.c.l.b16 %v962
  %v1091 = vunpack.c.l.b16 %v963
  %v1092 = vunpack.c.l.b16 %v964
  %v1093 = vunpack.c.l.b16 %v965
  %v1094 = vunpack.c.l.b16 %v966
  %v1095 = vunpack.c.l.b16 %v967
  %v1096 = vunpack.c.l.b16 %v968
  %v1097 = vunpack.c.l.b16 %v969
  %v1098 = vunpack.c.l.b16 %v970
  %v1099 = vunpack.c.l.b16 %v971
  %v1100 = vunpack.c.l.b16 %v972
  %v1101 = vunpack.c.l.b16 %v973
  %v1102 = vunpack.c.l.b16 %v974
  %v1103 = vunpack.c.l.b16 %v975
  %v1104 = vunpack.c.l.b16 %v976
  %v1105 = vunpack.c.l.b16 %v977
  %v1106 = vunpack.c.l.b16 %v978
  %v1107 = vunpack.c.l.b16 %v979
  %v1108 = vunpack.c.l.b16 %v980
  %v1109 = vunpack.c.l.b16 %v981
  %v1110 = vunpack.c.l.b16 %v982
  %v1111 = vunpack.c.l.b16 %v983
  %v1112 = vunpack.c.l.b16 %v984
  %v1113 = vunpack.c.l.b16 %v985
  %v1114 = vunpack.c.l.b16 %v986
  %v1115 = vunpack.c.l.b16 %v987
  %v1116 = vunpack.c.l.b16 %v988
  %v1117 = vunpack.c.l.b16 %v989
  %v1118 = vunpack.c.l.b16 %v990
  %v1119 = vunpack.c.l.b16 %v991
  %v1120 = vunpack.c.l.b16 %v992
  %v1121 = vunpack.c.l.b16 %v993
  %v1122 = vpack.c.b16 %v1059, %v1058
  %v1123 = vpack.c.b16 %v1061, %v1060
  %v1124 = vpack.c.b16 %v1063, %v1062
  %v1125 = vpack.c.b16 %v1065, %v1064
  %v1126 = vpack.c.b16 %v1067, %v1066
  %v1127 = vpack.c.b16 %v1069, %v1068
  %v1128 = vpack.c.b16 %v1071, %v1070
  %v1129 = vpack.c.b16 %v1073, %v1072
  %v1130 = vpack.c.b16 %v1075, %v1074
  %v1131 = vpack.c.b16 %v1077, %v1076
  %v1132 = vpack.c.b16 %v1079, %v1078
  %v1133 = vpack.c.b16 %v1081, %v1080
  %v1134 = vpack.c.b16 %v1083, %v1082
  %v1135 = vpack.c.b16 %v1085, %v1084
  %v1136 = vpack.c.b16 %v1087, %v1086
  %v1137 = vpack.c.b16 %v1089, %v1088
  %v1138 = vpack.c.b16 %v1091, %v1090
  %v1139 = vpack.c.b16 %v1093, %v1092
  %v1140 = vpack.c.b16 %v1095, %v1094
  %v1141 = vpack.c.b16 %v1097, %v1096
  %v1142 = vpack.c.b16 %v1099, %v1098
  %v1143 = vpack.c.b16 %v1101, %v1100
  %v1144 = vpack.c.b16 %v1103, %v1102
  %v1145 = vpack.c.b16 %v1105, %v1104
  %v1146 = vpack.c.b16 %v1107, %v1106
  %v1147 = vpack.c.b16 %v1109, %v1108
  %v1148 = vpack.c.b16 %v1111, %v1110
  %v1149 = vpack.c.b16 %v1113, %v1112
  %v1150 = vpack.c.b16 %v1115, %v1114
  %v1151 = vpack.c.b16 %v1117, %v1116
  %v1152 = vpack.c.b16 %v1119, %v1118
  %v1153 = vpack.c.b16 %v1121, %v1120
  %1186 = vmatprep.subr.bf16.mxu0 0
  %1187 = vmatpush1.bf16.msra.mxu0 %v1122
  %1188 = vmatprep.subr.bf16.mxu0 0
  %1189 = vmatpush1.bf16.msra.mxu0 %v1123
  %1190 = vmatprep.subr.bf16.mxu0 0
  %1191 = vmatpush1.bf16.msra.mxu0 %v1124
  %1192 = vmatprep.subr.bf16.mxu0 0
  %1193 = vmatpush1.bf16.msra.mxu0 %v1125
  %1194 = vmatprep.subr.bf16.mxu0 0
  %1195 = vmatpush1.bf16.msra.mxu0 %v1126
  %1196 = vmatprep.subr.bf16.mxu0 0
  %1197 = vmatpush1.bf16.msra.mxu0 %v1127
  %1198 = vmatprep.subr.bf16.mxu0 0
  %1199 = vmatpush1.bf16.msra.mxu0 %v1128
  %1200 = vmatprep.subr.bf16.mxu0 0
  %1201 = vmatpush1.bf16.msra.mxu0 %v1129
  %1202 = vmatprep.subr.bf16.mxu0 0
  %1203 = vmatpush1.bf16.msra.mxu0 %v1130
  %1204 = vmatprep.subr.bf16.mxu0 0
  %1205 = vmatpush1.bf16.msra.mxu0 %v1131
  %1206 = vmatprep.subr.bf16.mxu0 0
  %1207 = vmatpush1.bf16.msra.mxu0 %v1132
  %1208 = vmatprep.subr.bf16.mxu0 0
  %1209 = vmatpush1.bf16.msra.mxu0 %v1133
  %1210 = vmatprep.subr.bf16.mxu0 0
  %1211 = vmatpush1.bf16.msra.mxu0 %v1134
  %1212 = vmatprep.subr.bf16.mxu0 0
  %1213 = vmatpush1.bf16.msra.mxu0 %v1135
  %1214 = vmatprep.subr.bf16.mxu0 0
  %1215 = vmatpush1.bf16.msra.mxu0 %v1136
  %1216 = vmatprep.subr.bf16.mxu0 0
  %1217 = vmatpush1.bf16.msra.mxu0 %v1137
  %1218 = vmatprep.mubr.bf16.mxu0 %v915
  %1219 = vmatmul.mubr.bf16.gmra.mrb[0].mxu0 %v914
  %v1220 = vpop.f32.mrb[0].mxu0
  %v1221 = vadd.f32 0.0, %v1220
  %v1222 = vpop.f32.mrb[0].mxu0
  %v1223 = vpop.f32.mrb[0].mxu0
  %v1224 = vadd.f32 0.0, %v1223
  %v1225 = vpop.f32.mrb[0].mxu0
  %1226 = vmatprep.mubr.bf16.mxu0 %v919
  %1227 = vmatmul.mubr.bf16.gmra.mrb[0].mxu0 %v918
  %v1228 = vpop.f32.mrb[0].mxu0
  %v1229 = vadd.f32 0.0, %v1228
  %v1230 = vpop.f32.mrb[0].mxu0
  %v1231 = vpop.f32.mrb[0].mxu0
  %v1232 = vadd.f32 0.0, %v1231
  %v1233 = vpop.f32.mrb[0].mxu0
  %1234 = vmatprep.mubr.bf16.mxu0 %v923
  %1235 = vmatmul.mubr.bf16.gmra.mrb[0].mxu0 %v922
  %v1236 = vpop.f32.mrb[0].mxu0
  %v1237 = vadd.f32 0.0, %v1236
  %v1238 = vpop.f32.mrb[0].mxu0
  %v1239 = vpop.f32.mrb[0].mxu0
  %v1240 = vadd.f32 0.0, %v1239
  %v1241 = vpop.f32.mrb[0].mxu0
  %1242 = vmatprep.mubr.bf16.mxu0 %v927
  %1243 = vmatmul.mubr.bf16.gmra.mrb[0].mxu0 %v926
  %v1244 = vpop.f32.mrb[0].mxu0
  %v1245 = vadd.f32 0.0, %v1244
  %v1246 = vpop.f32.mrb[0].mxu0
  %v1247 = vpop.f32.mrb[0].mxu0
  %v1248 = vadd.f32 0.0, %v1247
  %v1249 = vpop.f32.mrb[0].mxu0
  %1250 = vdwg.mxu0
  %1251 = vmatprep.subr.bf16.mxu0 0
  %1252 = vmatpush1.bf16.msra.mxu0 %v1138
  %1253 = vmatprep.subr.bf16.mxu0 0
  %1254 = vmatpush1.bf16.msra.mxu0 %v1139
  %1255 = vmatprep.subr.bf16.mxu0 0
  %1256 = vmatpush1.bf16.msra.mxu0 %v1140
  %1257 = vmatprep.subr.bf16.mxu0 0
  %1258 = vmatpush1.bf16.msra.mxu0 %v1141
  %1259 = vmatprep.subr.bf16.mxu0 0
  %1260 = vmatpush1.bf16.msra.mxu0 %v1142
  %1261 = vmatprep.subr.bf16.mxu0 0
  %1262 = vmatpush1.bf16.msra.mxu0 %v1143
  %1263 = vmatprep.subr.bf16.mxu0 0
  %1264 = vmatpush1.bf16.msra.mxu0 %v1144
  %1265 = vmatprep.subr.bf16.mxu0 0
  %1266 = vmatpush1.bf16.msra.mxu0 %v1145
  %1267 = vmatprep.subr.bf16.mxu0 0
  %1268 = vmatpush1.bf16.msra.mxu0 %v1146
  %1269 = vmatprep.subr.bf16.mxu0 0
  %1270 = vmatpush1.bf16.msra.mxu0 %v1147
  %1271 = vmatprep.subr.bf16.mxu0 0
  %1272 = vmatpush1.bf16.msra.mxu0 %v1148
  %1273 = vmatprep.subr.bf16.mxu0 0
  %1274 = vmatpush1.bf16.msra.mxu0 %v1149
  %1275 = vmatprep.subr.bf16.mxu0 0
  %1276 = vmatpush1.bf16.msra.mxu0 %v1150
  %1277 = vmatprep.subr.bf16.mxu0 0
  %1278 = vmatpush1.bf16.msra.mxu0 %v1151
  %1279 = vmatprep.subr.bf16.mxu0 0
  %1280 = vmatpush1.bf16.msra.mxu0 %v1152
  %1281 = vmatprep.subr.bf16.mxu0 0
  %1282 = vmatpush1.bf16.msra.mxu0 %v1153
  %1283 = vmatprep.mubr.bf16.mxu0 %v917
  %1284 = vmatmul.mubr.bf16.gmra.mrb[0].mxu0 %v916
  %v1285 = vpop.f32.mrb[0].mxu0
  %v1286 = vadd.f32 %v1221, %v1285
  %v1287 = vpop.f32.mrb[0].mxu0
  %v1288 = vpop.f32.mrb[0].mxu0
  %v1289 = vadd.f32 %v1224, %v1288
  %v1290 = vpop.f32.mrb[0].mxu0
  %1291 = vmatprep.mubr.bf16.mxu0 %v921
  %1292 = vmatmul.mubr.bf16.gmra.mrb[0].mxu0 %v920
  %v1293 = vpop.f32.mrb[0].mxu0
  %v1294 = vadd.f32 %v1229, %v1293
  %v1295 = vpop.f32.mrb[0].mxu0
  %v1296 = vpop.f32.mrb[0].mxu0
  %v1297 = vadd.f32 %v1232, %v1296
  %v1298 = vpop.f32.mrb[0].mxu0
  %1299 = vmatprep.mubr.bf16.mxu0 %v925
  %1300 = vmatmul.mubr.bf16.gmra.mrb[0].mxu0 %v924
  %v1301 = vpop.f32.mrb[0].mxu0
  %v1302 = vadd.f32 %v1237, %v1301
  %v1303 = vpop.f32.mrb[0].mxu0
  %v1304 = vpop.f32.mrb[0].mxu0
  %v1305 = vadd.f32 %v1240, %v1304
  %v1306 = vpop.f32.mrb[0].mxu0
  %1307 = vmatprep.mubr.bf16.mxu0 %v929
  %1308 = vmatmul.mubr.bf16.gmra.mrb[0].mxu0 %v928
  %v1309 = vpop.f32.mrb[0].mxu0
  %v1310 = vadd.f32 %v1245, %v1309
  %v1311 = vpop.f32.mrb[0].mxu0
  %v1312 = vpop.f32.mrb[0].mxu0
  %v1313 = vadd.f32 %v1248, %v1312
  %v1314 = vpop.f32.mrb[0].mxu0
  %1315 = vdwg.mxu0
  %v1316 = vadd.f32 %v906, %v1286
  %v1317 = vadd.f32 %v907, %v1289
  %v1318 = vadd.f32 %v908, %v1294
  %v1319 = vadd.f32 %v909, %v1297
  %v1320 = vadd.f32 %v910, %v1302
  %v1321 = vadd.f32 %v911, %v1305
  %v1322 = vadd.f32 %v912, %v1310
  %v1323 = vadd.f32 %v913, %v1313
  %1324 = vst [vmem:[#allocation3] sm:$0xff] %v1316
  %1325 = vst [vmem:[#allocation3 + $0x8] sm:$0xff] %v1317
  %1326 = vst [vmem:[#allocation3 + $0x10] sm:$0xff] %v1318
  %1327 = vst [vmem:[#allocation3 + $0x18] sm:$0xff] %v1319
  %1328 = vst [vmem:[#allocation3 + $0x20] sm:$0xff] %v1320
  %1329 = vst [vmem:[#allocation3 + $0x28] sm:$0xff] %v1321
  %1330 = vst [vmem:[#allocation3 + $0x30] sm:$0xff] %v1322
  %1331 = vst [vmem:[#allocation3 + $0x38] sm:$0xff] %v1323
  // Predicated region
  $region54: #{_lambda_.10} parent=0 // pred_check
    %p1332 = pneg %p42
  $region55: #{_lambda_.10} parent=0 // pred_check_branch
    %1334 = sbr.rel (%p1332) target = $region57
  $region56: #{_lambda_.10} parent=0 // pred_region
    %v1335 = vld [vmem:[#allocation3] sm:$0xff]
    %v1336 = vld [vmem:[#allocation3 + $0x8] sm:$0xff]
    %v1337 = vld [vmem:[#allocation3 + $0x10] sm:$0xff]
    %v1338 = vld [vmem:[#allocation3 + $0x18] sm:$0xff]
    %v1339 = vld [vmem:[#allocation3 + $0x20] sm:$0xff]
    %v1340 = vld [vmem:[#allocation3 + $0x28] sm:$0xff]
    %v1341 = vld [vmem:[#allocation3 + $0x30] sm:$0xff]
    %v1342 = vld [vmem:[#allocation3 + $0x38] sm:$0xff]
    %v1343 = vld [vmem:[%s9] sm:$0x1]
    %v1345 = vlaneseq
    %v1346 = vshrl.u32 %v1345, 7
    %v1347 = vsub.s32 0, %v1346
    %v1348 = vrot.slane %v1343, %v1347
    %v1350 = vadd.f32 %v1335, %v1348
    %v1351 = vadd.f32 %v1336, %v1348
    %v1352 = vadd.f32 %v1337, %v1348
    %v1353 = vadd.f32 %v1338, %v1348
    %v1354 = vadd.f32 %v1339, %v1348
    %v1355 = vadd.f32 %v1340, %v1348
    %v1356 = vadd.f32 %v1341, %v1348
    %v1357 = vadd.f32 %v1342, %v1348
    %v1358 = vld [vmem:[#allocation2] sm:$0xff]
    %v1359 = vld [vmem:[#allocation2 + $0x8] sm:$0xff]
    %v1360 = vld [vmem:[#allocation2 + $0x10] sm:$0xff]
    %v1361 = vld [vmem:[#allocation2 + $0x18] sm:$0xff]
    %v1362 = vld [vmem:[#allocation2 + $0x20] sm:$0xff]
    %v1363 = vld [vmem:[#allocation2 + $0x28] sm:$0xff]
    %v1364 = vld [vmem:[#allocation2 + $0x30] sm:$0xff]
    %v1365 = vld [vmem:[#allocation2 + $0x38] sm:$0xff]
    %v1366 = vadd.f32 %v1350, %v1358
    %v1367 = vadd.f32 %v1351, %v1359
    %v1368 = vadd.f32 %v1352, %v1360
    %v1369 = vadd.f32 %v1353, %v1361
    %v1370 = vadd.f32 %v1354, %v1362
    %v1371 = vadd.f32 %v1355, %v1363
    %v1372 = vadd.f32 %v1356, %v1364
    %v1373 = vadd.f32 %v1357, %v1365
    %v1374 = vld [vmem:[%s10] sm:$0x1]
    %v1375 = vld [vmem:[%s11] sm:$0x1]
    %1376 = vadd.xlane.f32.xlu0 %v1366
    %v1377 = vpop.xlane.xlu0 %1376
    %1378 = vadd.xlane.f32.xlu0 %v1367
    %v1379 = vpop.xlane.xlu0 %1378
    %1380 = vadd.xlane.f32.xlu0 %v1368
    %v1381 = vpop.xlane.xlu0 %1380
    %1382 = vadd.xlane.f32.xlu0 %v1369
    %v1383 = vpop.xlane.xlu0 %1382
    %1384 = vadd.xlane.f32.xlu0 %v1370
    %v1385 = vpop.xlane.xlu0 %1384
    %1386 = vadd.xlane.f32.xlu0 %v1371
    %v1387 = vpop.xlane.xlu0 %1386
    %1388 = vadd.xlane.f32.xlu0 %v1372
    %v1389 = vpop.xlane.xlu0 %1388
    %1390 = vadd.xlane.f32.xlu0 %v1373
    %v1391 = vpop.xlane.xlu0 %1390
    %v1392 = vrcp.pop 128.0
    %v1393 = vmul.f32 %v1377, %v1392
    %v1394 = vmul.f32 %v1379, %v1392
    %v1395 = vmul.f32 %v1381, %v1392
    %v1396 = vmul.f32 %v1383, %v1392
    %v1397 = vmul.f32 %v1385, %v1392
    %v1398 = vmul.f32 %v1387, %v1392
    %v1399 = vmul.f32 %v1389, %v1392
    %v1400 = vmul.f32 %v1391, %v1392
    %v1401 = vsub.f32 %v1366, %v1393
    %v1402 = vsub.f32 %v1367, %v1394
    %v1403 = vsub.f32 %v1368, %v1395
    %v1404 = vsub.f32 %v1369, %v1396
    %v1405 = vsub.f32 %v1370, %v1397
    %v1406 = vsub.f32 %v1371, %v1398
    %v1407 = vsub.f32 %v1372, %v1399
    %v1408 = vsub.f32 %v1373, %v1400
    %v1409 = vmul.f32 %v1401, %v1401
    %v1410 = vmul.f32 %v1402, %v1402
    %v1411 = vmul.f32 %v1403, %v1403
    %v1412 = vmul.f32 %v1404, %v1404
    %v1413 = vmul.f32 %v1405, %v1405
    %v1414 = vmul.f32 %v1406, %v1406
    %v1415 = vmul.f32 %v1407, %v1407
    %v1416 = vmul.f32 %v1408, %v1408
    %1417 = vadd.xlane.f32.xlu0 %v1409
    %v1418 = vpop.xlane.xlu0 %1417
    %1419 = vadd.xlane.f32.xlu0 %v1410
    %v1420 = vpop.xlane.xlu0 %1419
    %1421 = vadd.xlane.f32.xlu0 %v1411
    %v1422 = vpop.xlane.xlu0 %1421
    %1423 = vadd.xlane.f32.xlu0 %v1412
    %v1424 = vpop.xlane.xlu0 %1423
    %1425 = vadd.xlane.f32.xlu0 %v1413
    %v1426 = vpop.xlane.xlu0 %1425
    %1427 = vadd.xlane.f32.xlu0 %v1414
    %v1428 = vpop.xlane.xlu0 %1427
    %1429 = vadd.xlane.f32.xlu0 %v1415
    %v1430 = vpop.xlane.xlu0 %1429
    %1431 = vadd.xlane.f32.xlu0 %v1416
    %v1432 = vpop.xlane.xlu0 %1431
    %v1433 = vmul.f32 %v1418, %v1392
    %v1434 = vmul.f32 %v1420, %v1392
    %v1435 = vmul.f32 %v1422, %v1392
    %v1436 = vmul.f32 %v1424, %v1392
    %v1437 = vmul.f32 %v1426, %v1392
    %v1438 = vmul.f32 %v1428, %v1392
    %v1439 = vmul.f32 %v1430, %v1392
    %v1440 = vmul.f32 %v1432, %v1392
    %v1441 = vadd.f32 %v1433, 1e-12
    %v1442 = vadd.f32 %v1434, 1e-12
    %v1443 = vadd.f32 %v1435, 1e-12
    %v1444 = vadd.f32 %v1436, 1e-12
    %v1445 = vadd.f32 %v1437, 1e-12
    %v1446 = vadd.f32 %v1438, 1e-12
    %v1447 = vadd.f32 %v1439, 1e-12
    %v1448 = vadd.f32 %v1440, 1e-12
    %v1449 = vrsqrt.pop %v1441
    %v1450 = vrsqrt.pop %v1442
    %v1451 = vrsqrt.pop %v1443
    %v1452 = vrsqrt.pop %v1444
    %v1453 = vrsqrt.pop %v1445
    %v1454 = vrsqrt.pop %v1446
    %v1455 = vrsqrt.pop %v1447
    %v1456 = vrsqrt.pop %v1448
    %v1457 = vmul.f32 %v1401, %v1449
    %v1458 = vmul.f32 %v1402, %v1450
    %v1459 = vmul.f32 %v1403, %v1451
    %v1460 = vmul.f32 %v1404, %v1452
    %v1461 = vmul.f32 %v1405, %v1453
    %v1462 = vmul.f32 %v1406, %v1454
    %v1463 = vmul.f32 %v1407, %v1455
    %v1464 = vmul.f32 %v1408, %v1456
    %v1466 = vlaneseq
    %v1467 = vshrl.u32 %v1466, 7
    %v1468 = vsub.s32 0, %v1467
    %v1469 = vrot.slane %v1374, %v1468
    %v1471 = vmul.f32 %v1457, %v1469
    %v1472 = vmul.f32 %v1458, %v1469
    %v1473 = vmul.f32 %v1459, %v1469
    %v1474 = vmul.f32 %v1460, %v1469
    %v1475 = vmul.f32 %v1461, %v1469
    %v1476 = vmul.f32 %v1462, %v1469
    %v1477 = vmul.f32 %v1463, %v1469
    %v1478 = vmul.f32 %v1464, %v1469
    %v1480 = vlaneseq
    %v1481 = vshrl.u32 %v1480, 7
    %v1482 = vsub.s32 0, %v1481
    %v1483 = vrot.slane %v1375, %v1482
    %v1485 = vadd.f32 %v1471, %v1483
    %v1486 = vadd.f32 %v1472, %v1483
    %v1487 = vadd.f32 %v1473, %v1483
    %v1488 = vadd.f32 %v1474, %v1483
    %v1489 = vadd.f32 %v1475, %v1483
    %v1490 = vadd.f32 %v1476, %v1483
    %v1491 = vadd.f32 %v1477, %v1483
    %v1492 = vadd.f32 %v1478, %v1483
    %v1493 = vpack.c.bf16 %v1486, %v1485
    %v1494 = vpack.c.bf16 %v1488, %v1487
    %v1495 = vpack.c.bf16 %v1490, %v1489
    %v1496 = vpack.c.bf16 %v1492, %v1491
    %v1501 = vunpack.c.l.b16 %v1493
    %v1502 = vunpack.c.h.b16 %v1493
    %v1503 = vunpack.c.l.b16 %v1494
    %v1504 = vunpack.c.h.b16 %v1494
    %v1505 = vunpack.c.l.b16 %v1495
    %v1506 = vunpack.c.h.b16 %v1495
    %v1507 = vunpack.c.l.b16 %v1496
    %v1508 = vunpack.c.h.b16 %v1496
    %v1509 = vpack.c.b16 %v1501, %v1501
    %v1510 = vpack.c.b16 %v1502, %v1502
    %v1511 = vpack.c.b16 %v1503, %v1503
    %v1512 = vpack.c.b16 %v1504, %v1504
    %v1513 = vpack.c.b16 %v1505, %v1505
    %v1514 = vpack.c.b16 %v1506, %v1506
    %v1515 = vpack.c.b16 %v1507, %v1507
    %v1516 = vpack.c.b16 %v1508, %v1508
    %1525 = vst [vmem:[%s12] sm:$0xf] %v1509
    %1526 = vst [vmem:[%s12 + $0x4] sm:$0xf] %v1510
    %1527 = vst [vmem:[%s12 + $0x8] sm:$0xf] %v1511
    %1528 = vst [vmem:[%s12 + $0xc] sm:$0xf] %v1512
    %1529 = vst [vmem:[%s12 + $0x10] sm:$0xf] %v1513
    %1530 = vst [vmem:[%s12 + $0x14] sm:$0xf] %v1514
    %1531 = vst [vmem:[%s12 + $0x18] sm:$0xf] %v1515
    %1532 = vst [vmem:[%s12 + $0x1c] sm:$0xf] %v1516
  $region57: #{_lambda_.10} parent=0 // pred_fallthru
    _
  // Predicated region
  $region58: #{_lambda_.10} parent=0 // pred_check
    _
  $region59: #{_lambda_.10} parent=0 // pred_check_branch
    %1534 = sbr.rel (0) target = $region61
  $region60: #{_lambda_.10} parent=0 // pred_region
    _
  $region61: #{_lambda_.10} parent=0 // pred_fallthru
    _
  // Predicated region
  $region62: #{_lambda_.10} parent=0 // pred_check
    _
  $region63: #{_lambda_.10} parent=0 // pred_check_branch
    %1536 = sbr.rel (0) target = $region65
  $region64: #{_lambda_.10} parent=0 // pred_region
    _
  $region65: #{_lambda_.10} parent=0 // pred_fallthru
    _

</llo_original>
